<compile_context>
chip_gen: v7x
topology: tpu7x:2x2x1
jax: 0.10.0
libtpu: 0.0.40
codegen_flags: <defaults>
</compile_context>

<pallas_src>
import math
import functools

import jax
import jax.numpy as jnp
from jax import lax
from jax.experimental import pallas as pl
from jax.experimental.pallas import tpu as pltpu


# ----------------------------------------------------------------------------
# Fused FFT-block kernel (bt batch elements, i.e. bt*S rows, per grid step)
# ----------------------------------------------------------------------------
def _fft_block_kernel(x_ref, kmask_ref, npad_ref,
                      wqkv_ref, bqkv_ref, wo_ref, bo_ref,
                      w1s_ref, b1_ref, w2s_ref, b2_ref,
                      gamma_ref, beta_ref,
                      o_ref, *, n_head, bt, seq, k1, p1, k2, p2):
    R, D = x_ref.shape                      # R = bt * seq rows
    S = seq
    dh = D // n_head

    # ---------------- multi-head self-attention ----------------
    # Fused QKV projection: one (R,D)@(D,3D) bf16 MXU matmul, f32 accumulation.
    # (query scale is already folded into the Q columns of wqkv/bqkv at init.)
    xb = x_ref[...].astype(jnp.bfloat16)
    qkv = jnp.dot(xb, wqkv_ref[...],
                  preferred_element_type=jnp.float32) + bqkv_ref[...]   # (R,3D) f32
    qkvb = qkv.astype(jnp.bfloat16)         # single bf16 cast of the whole slab

    ctx_parts = []
    for b in range(bt):                     # static unroll over batch tile
        r0 = b * S
        km = kmask_ref[b]                   # (1, S) f32 key keep-mask (1=keep)
        head_parts = []
        for h in range(n_head):             # static unroll (small n_head)
            lo = h * dh
            q = qkvb[r0:r0 + S, lo:lo + dh]
            k = qkvb[r0:r0 + S, D + lo:D + lo + dh]
            v = qkvb[r0:r0 + S, 2 * D + lo:2 * D + lo + dh]

            # scores: contract last dims of q and k (no explicit transpose).
            s = lax.dot_general(q, k, (((1,), (1,)), ((), ())),
                                preferred_element_type=jnp.float32)     # (S, S)
            s = s - jnp.max(s, axis=-1, keepdims=True)
            e = jnp.exp(s) * km             # multiplicative 0/1 key-pad mask
            p = e * pl.reciprocal(jnp.sum(e, axis=-1, keepdims=True) + 1e-30,
                                  approx=True)
            # TODO(synk): attention dropout is identity (inference semantics)
            head_parts.append(jnp.dot(p.astype(jnp.bfloat16), v,
                                      preferred_element_type=jnp.float32))
        ctx_parts.append(jnp.concatenate(head_parts, axis=-1)
                         if n_head > 1 else head_parts[0])              # (S, D)
    ctx = jnp.concatenate(ctx_parts, axis=0) if bt > 1 else ctx_parts[0]  # (R, D)

    # Single full-depth output projection.
    attn = jnp.dot(ctx.astype(jnp.bfloat16), wo_ref[...],
                   preferred_element_type=jnp.float32) + bo_ref[...]
    npad = npad_ref[...]                    # (R, 1) non-pad (query-row) mask
    attn = attn * npad                      # enc_output *= non_pad_mask

    # ---------------- position-wise conv FFN + residual + LayerNorm ----------
    residual = attn
    rows = lax.broadcasted_iota(jnp.int32, (R, 1), 0)
    rmod = rows % S                         # position within each batch element

    def conv_stack(v_f32, kk, pad):
        """Stack kk shifted copies along lanes -> one deep matmul per conv."""
        taps = []
        for j in range(kk):
            shift = pad - j                 # output[t] uses input[t - shift]
            if shift == 0:
                vs = v_f32
            else:
                vs = pltpu.roll(v_f32, shift % R, axis=0)   # XLU sublane rotate
                if shift > 0:               # rows whose source crosses a batch /
                    vs = jnp.where(rmod >= shift, vs, 0.0)  # sequence boundary -> 0
                else:
                    vs = jnp.where(rmod < S + shift, vs, 0.0)
            taps.append(vs)
        stacked = jnp.concatenate(taps, axis=-1) if kk > 1 else taps[0]
        return stacked.astype(jnp.bfloat16)                 # one bf16 cast

    h1 = jnp.maximum(jnp.dot(conv_stack(attn, k1, p1), w1s_ref[...],
                             preferred_element_type=jnp.float32) + b1_ref[...],
                     0.0)                                   # (R, Dh)
    y = jnp.dot(conv_stack(h1, k2, p2), w2s_ref[...],
                preferred_element_type=jnp.float32) + b2_ref[...]        # (R, D)

    # TODO(synk): FFN dropout is identity (inference semantics)
    z = y + residual
    mean = jnp.mean(z, axis=-1, keepdims=True)
    var = jnp.mean(jnp.square(z - mean), axis=-1, keepdims=True)
    zn = (z - mean) * lax.rsqrt(var + 1e-5)
    out = (zn * gamma_ref[...] + beta_ref[...]) * npad
    o_ref[...] = out.astype(o_ref.dtype)


# ----------------------------------------------------------------------------
# Wrapper (single pallas_call per FFT block; grid over batch tiles)
# ----------------------------------------------------------------------------
def _full_spec(shape):
    n = len(shape)
    return pl.BlockSpec(shape, lambda b, _n=n: (0,) * _n)


def fft_block(x_flat, kmask, npad_flat, p, *, n_head, conv_k, conv_p,
              batch_tile=None):
    B, _, S = kmask.shape
    R, D = x_flat.shape
    assert R == B * S
    k1, k2 = conv_k
    p1, p2 = conv_p
    assert 2 * p1 == k1 - 1 and 2 * p2 == k2 - 1, "need length-preserving convs"
    Dh = p["w1s"].shape[1]

    if batch_tile is None:
        batch_tile = min(B, max(1, 256 // S))   # densify tiny (S,D) problems
    while B % batch_tile:
        batch_tile -= 1
    bt = batch_tile

    return pl.pallas_call(
        functools.partial(_fft_block_kernel, n_head=n_head, bt=bt, seq=S,
                          k1=k1, p1=p1, k2=k2, p2=p2),
        out_shape=jax.ShapeDtypeStruct((R, D), x_flat.dtype),
        grid=(B // bt,),
        in_specs=[
            pl.BlockSpec((bt * S, D), lambda b: (b, 0)),       # x rows
            pl.BlockSpec((bt, 1, S), lambda b: (b, 0, 0)),     # key keep-mask
            pl.BlockSpec((bt * S, 1), lambda b: (b, 0)),       # non-pad row mask
            _full_spec((D, 3 * D)), _full_spec((1, 3 * D)),    # fused QKV proj
            _full_spec((D, D)), _full_spec((1, D)),            # output proj
            _full_spec((k1 * D, Dh)), _full_spec((1, Dh)),     # conv1 (taps flat)
            _full_spec((k2 * Dh, D)), _full_spec((1, D)),      # conv2 (taps flat)
            _full_spec((1, D)), _full_spec((1, D)),            # LayerNorm g/b
        ],
        out_specs=pl.BlockSpec((bt * S, D), lambda b: (b, 0)),
        compiler_params=pltpu.CompilerParams(
            dimension_semantics=("parallel",),
            vmem_limit_bytes=32 * 1024 * 1024,
        ),
    )(x_flat, kmask, npad_flat,
      p["wqkv_t"], p["bqkv"], p["wo_t"], p["bo"],
      p["w1s"], p["b1"], p["w2s"], p["b2"], p["gamma"], p["beta"])


# ----------------------------------------------------------------------------
# Decoder: parameter init + forward
# ----------------------------------------------------------------------------
def init_decoder_params(key, n_layers, d_model, d_inner, n_position, PAD,
                        conv_k, n_head):
    keys = jax.random.split(key, 1 + n_layers)
    scale = 0.02
    dh = d_model // n_head
    qscale = 1.0 / math.sqrt(dh)
    pos_emb = scale * jax.random.normal(keys[0], (n_position, d_model), jnp.float32)
    pos_emb = pos_emb.at[PAD].set(0.0)               # padding_idx row is zero
    layers = []
    for li in range(n_layers):
        ks = jax.random.split(keys[1 + li], 8)
        in_w = scale * jax.random.normal(ks[0], (3 * d_model, d_model), jnp.float32)
        in_b = scale * jax.random.normal(ks[1], (3 * d_model,), jnp.float32)
        out_w = scale * jax.random.normal(ks[2], (d_model, d_model), jnp.float32)
        out_b = scale * jax.random.normal(ks[3], (d_model,), jnp.float32)
        w1 = scale * jax.random.normal(ks[4], (d_inner, d_model, conv_k[0]), jnp.float32)
        b1 = scale * jax.random.normal(ks[5], (d_inner,), jnp.float32)
        w2 = scale * jax.random.normal(ks[6], (d_model, d_inner, conv_k[1]), jnp.float32)
        b2 = scale * jax.random.normal(ks[7], (d_model,), jnp.float32)

        # Fold the 1/sqrt(d_head) query scale into the Q part of the fused QKV.
        wqkv_t = in_w.T                                         # (D, 3D)
        wqkv_t = wqkv_t.at[:, :d_model].multiply(qscale)
        bqkv = in_b.at[:d_model].multiply(qscale)

        layers.append(dict(
            wqkv_t=wqkv_t.astype(jnp.bfloat16),                 # (D, 3D) bf16
            bqkv=bqkv[None, :],                                 # (1, 3D) f32
            wo_t=out_w.T.astype(jnp.bfloat16),                  # (D, D)
            bo=out_b[None, :],
            # conv weights pre-flattened as (k*Din, Dout) for the fused-tap matmul
            w1s=jnp.transpose(w1, (2, 1, 0)).reshape(conv_k[0] * d_model, d_inner)
                .astype(jnp.bfloat16),
            b1=b1[None, :],
            w2s=jnp.transpose(w2, (2, 1, 0)).reshape(conv_k[1] * d_inner, d_model)
                .astype(jnp.bfloat16),
            b2=b2[None, :],
            gamma=jnp.ones((1, d_model), jnp.float32),
            beta=jnp.zeros((1, d_model), jnp.float32),
        ))
    return dict(pos_emb=pos_emb, layers=layers)


def decoder_forward(enc_seq, enc_pos, params, *, PAD, n_head, conv_k, conv_p):
    B, S, D = enc_seq.shape
    keep = (enc_pos != PAD).astype(jnp.float32)          # (B, S)
    kmask = keep[:, None, :]                             # (B, 1, S) key keep-mask
    npad_flat = keep.reshape(B * S, 1)                   # (B*S, 1) row mask
    # Positional embedding lookup (glue).
    x = enc_seq + jnp.take(params["pos_emb"], enc_pos, axis=0)
    x = x.reshape(B * S, D)
    for lp in params["layers"]:
        x = fft_block(x, kmask, npad_flat, lp,
                      n_head=n_head, conv_k=conv_k, conv_p=conv_p)
    return x.reshape(B, S, D)


# ----------------------------------------------------------------------------
# Pure-JAX reference (f32 math on the same bf16-stored weights)
# ----------------------------------------------------------------------------
def _decoder_ref(enc_seq, enc_pos, params, *, PAD, n_head, conv_k, conv_p):
    B, S, D = enc_seq.shape
    dh = D // n_head
    kpad = (enc_pos == PAD)
    npad = (enc_pos != PAD).astype(jnp.float32)[:, :, None]
    k1, k2 = conv_k
    p1, p2 = conv_p
    x = enc_seq + jnp.take(params["pos_emb"], enc_pos, axis=0)
    for lp in params["layers"]:
        qkv = x @ lp["wqkv_t"].astype(jnp.float32) + lp["bqkv"]
        q, k, v = qkv[..., :D], qkv[..., D:2 * D], qkv[..., 2 * D:]
        # NOTE: query scale already folded into wqkv_t/bqkv.
        qh = q.reshape(B, S, n_head, dh).transpose(0, 2, 1, 3)
        kh = k.reshape(B, S, n_head, dh).transpose(0, 2, 1, 3)
        vh = v.reshape(B, S, n_head, dh).transpose(0, 2, 1, 3)
        s = jnp.einsum("bhqd,bhkd->bhqk", qh, kh)
        s = jnp.where(kpad[:, None, None, :], -1e30, s)
        a = jax.nn.softmax(s, axis=-1)
        ctx = jnp.einsum("bhqk,bhkd->bhqd", a, vh).transpose(0, 2, 1, 3).reshape(B, S, D)
        attn = (ctx @ lp["wo_t"].astype(jnp.float32) + lp["bo"]) * npad
        w1 = lp["w1s"].astype(jnp.float32).reshape(k1, D, -1)
        Dh = w1.shape[-1]
        w2 = lp["w2s"].astype(jnp.float32).reshape(k2, Dh, D)
        xz = jnp.pad(attn, ((0, 0), (p1, p1), (0, 0)))
        h = sum(xz[:, j:j + S, :] @ w1[j] for j in range(k1)) + lp["b1"]
        h = jnp.maximum(h, 0.0)
        hz = jnp.pad(h, ((0, 0), (p2, p2), (0, 0)))
        y = sum(hz[:, j:j + S, :] @ w2[j] for j in range(k2)) + lp["b2"]
        z = y + attn
        mean = z.mean(-1, keepdims=True)
        var = ((z - mean) ** 2).mean(-1, keepdims=True)
        x = ((z - mean) * lax.rsqrt(var + 1e-5) * lp["gamma"] + lp["beta"]) * npad
    return x


# ----------------------------------------------------------------------------
if __name__ == "__main__":
    B, S, D = 2, 8, 32          # batch, seq, encoder_dim
    d_inner = 64                # encoder_conv1d_filter_size
    n_head = 2                  # encoder_head
    max_seq_len = 16
    PAD = 0
    n_layers = 2                # decoder_n_layer
    conv_k = (3, 3)             # fft_conv1d_kernel
    conv_p = (1, 1)             # fft_conv1d_padding

    params = init_decoder_params(jax.random.PRNGKey(0), n_layers, D, d_inner,
                                 max_seq_len + 1, PAD, conv_k, n_head)

    kx, _ = jax.random.split(jax.random.PRNGKey(0))
    enc_seq = jax.random.normal(kx, (B, S, D), jnp.float32)
    enc_pos = jnp.array([[1, 2, 3, 4, 5, 6, 7, 8],
                         [1, 2, 3, 4, 5, 6, 0, 0]], dtype=jnp.int32)  # 0 == PAD

    fwd = jax.jit(functools.partial(decoder_forward, PAD=PAD, n_head=n_head,
                                    conv_k=conv_k, conv_p=conv_p))
    out = jax.block_until_ready(fwd(enc_seq, enc_pos, params))
    assert out.shape == (B, S, D)
    assert bool(jnp.all(jnp.isfinite(out)))

    # Correctness check vs. the pure-JAX f32 reference on the same bf16-stored
    # weights.  The tolerance is dominated by bf16 MXU activation rounding
    # amplified by the LayerNorm (small residual variance), not by indexing.
    ref = _decoder_ref(enc_seq, enc_pos, params, PAD=PAD, n_head=n_head,
                       conv_k=conv_k, conv_p=conv_p)
    max_err = float(jnp.max(jnp.abs(out - ref)))
    assert max_err < 0.15, f"mismatch vs reference: max_err={max_err}"
    print("KERNEL_OK")
</pallas_src>

<mosaic_0001>
module attributes {stable_mosaic.version = 11 : i64} {
  func.func @_fft_block_kernel(%arg0: i32, %arg1: memref<16x32xf32, #tpu.memory_space<vmem>>, %arg2: memref<2x1x8xf32, #tpu.memory_space<vmem>>, %arg3: memref<16x1xf32, #tpu.memory_space<vmem>>, %arg4: memref<32x96xbf16, #tpu.memory_space<vmem>>, %arg5: memref<1x96xf32, #tpu.memory_space<vmem>>, %arg6: memref<32x32xbf16, #tpu.memory_space<vmem>>, %arg7: memref<1x32xf32, #tpu.memory_space<vmem>>, %arg8: memref<96x64xbf16, #tpu.memory_space<vmem>>, %arg9: memref<1x64xf32, #tpu.memory_space<vmem>>, %arg10: memref<192x32xbf16, #tpu.memory_space<vmem>>, %arg11: memref<1x32xf32, #tpu.memory_space<vmem>>, %arg12: memref<1x32xf32, #tpu.memory_space<vmem>>, %arg13: memref<1x32xf32, #tpu.memory_space<vmem>>, %arg14: memref<16x32xf32, #tpu.memory_space<vmem>>) attributes {dimension_semantics = [#tpu.dimension_semantics<parallel>], iteration_bounds = array<i64: 1>, scalar_prefetch = 0 : i64, scratch_operands = 0 : i64, tpu.core_type = #tpu.core_type<tc>, window_params = [{transform_indices = @transform_0, window_bounds = array<i64: 16, 32>}, {transform_indices = @transform_1, window_bounds = array<i64: 2, 1, 8>}, {transform_indices = @transform_2, window_bounds = array<i64: 16, 1>}, {pipeline_mode = #tpu.pipeline_mode<synchronous>, transform_indices = @transform_3, window_bounds = array<i64: 32, 96>}, {pipeline_mode = #tpu.pipeline_mode<synchronous>, transform_indices = @transform_4, window_bounds = array<i64: 1, 96>}, {pipeline_mode = #tpu.pipeline_mode<synchronous>, transform_indices = @transform_5, window_bounds = array<i64: 32, 32>}, {pipeline_mode = #tpu.pipeline_mode<synchronous>, transform_indices = @transform_6, window_bounds = array<i64: 1, 32>}, {pipeline_mode = #tpu.pipeline_mode<synchronous>, transform_indices = @transform_7, window_bounds = array<i64: 96, 64>}, {pipeline_mode = #tpu.pipeline_mode<synchronous>, transform_indices = @transform_8, window_bounds = array<i64: 1, 64>}, {pipeline_mode = #tpu.pipeline_mode<synchronous>, transform_indices = @transform_9, window_bounds = array<i64: 192, 32>}, {pipeline_mode = #tpu.pipeline_mode<synchronous>, transform_indices = @transform_10, window_bounds = array<i64: 1, 32>}, {pipeline_mode = #tpu.pipeline_mode<synchronous>, transform_indices = @transform_11, window_bounds = array<i64: 1, 32>}, {pipeline_mode = #tpu.pipeline_mode<synchronous>, transform_indices = @transform_12, window_bounds = array<i64: 1, 32>}, {transform_indices = @transform_13, window_bounds = array<i64: 16, 32>}]} {
    %c0 = arith.constant 0 : index
    %c0_0 = arith.constant 0 : index
    %0 = vector.load %arg1[%c0, %c0_0] : memref<16x32xf32, #tpu.memory_space<vmem>>, vector<16x32xf32>
    %1 = arith.truncf %0 : vector<16x32xf32> to vector<16x32xbf16>
    %c0_1 = arith.constant 0 : index
    %c0_2 = arith.constant 0 : index
    %2 = vector.load %arg4[%c0_1, %c0_2] : memref<32x96xbf16, #tpu.memory_space<vmem>>, vector<32x96xbf16>
    %cst = arith.constant dense<0.000000e+00> : vector<16x96xf32>
    %3 = tpu.matmul %1, %2, %cst {dimension_numbers = #tpu.dot_dimension_numbers<[1], [0], [0], [1], [0, 0, 1, 1], [], []>} : vector<16x32xbf16>, vector<32x96xbf16>, vector<16x96xf32> -> vector<16x96xf32>
    %c0_3 = arith.constant 0 : index
    %c0_4 = arith.constant 0 : index
    %4 = vector.load %arg5[%c0_3, %c0_4] : memref<1x96xf32, #tpu.memory_space<vmem>>, vector<1x96xf32>
    %5 = vector.broadcast %4 : vector<1x96xf32> to vector<16x96xf32>
    %6 = arith.addf %3, %5 : vector<16x96xf32>
    %7 = arith.truncf %6 : vector<16x96xf32> to vector<16x96xbf16>
    %c0_5 = arith.constant 0 : index
    %c0_6 = arith.constant 0 : index
    %c0_7 = arith.constant 0 : index
    %8 = vector.load %arg2[%c0_5, %c0_6, %c0_7] : memref<2x1x8xf32, #tpu.memory_space<vmem>>, vector<1x1x8xf32>
    %9 = vector.shape_cast %8 : vector<1x1x8xf32> to vector<1x8xf32>
    %10 = vector.extract_strided_slice %7 {offsets = [0, 0], sizes = [8, 16], strides = [1, 1]} : vector<16x96xbf16> to vector<8x16xbf16>
    %11 = vector.extract_strided_slice %7 {offsets = [0, 32], sizes = [8, 16], strides = [1, 1]} : vector<16x96xbf16> to vector<8x16xbf16>
    %12 = vector.extract_strided_slice %7 {offsets = [0, 64], sizes = [8, 16], strides = [1, 1]} : vector<16x96xbf16> to vector<8x16xbf16>
    %cst_8 = arith.constant dense<0.000000e+00> : vector<8x8xf32>
    %13 = tpu.matmul %10, %11, %cst_8 {dimension_numbers = #tpu.dot_dimension_numbers<[1], [1], [0], [0], [0, 0, 1, 0], [], []>} : vector<8x16xbf16>, vector<8x16xbf16>, vector<8x8xf32> -> vector<8x8xf32>
    %cst_9 = arith.constant dense<0xFF800000> : vector<8xf32>
    %14 = vector.multi_reduction <maximumf>, %13, %cst_9 [1] : vector<8x8xf32> to vector<8xf32>
    %15 = vector.shape_cast %14 : vector<8xf32> to vector<8x1xf32>
    %16 = vector.broadcast %15 : vector<8x1xf32> to vector<8x8xf32>
    %17 = arith.subf %13, %16 : vector<8x8xf32>
    %18 = math.exp %17 : vector<8x8xf32>
    %19 = vector.broadcast %9 : vector<1x8xf32> to vector<8x8xf32>
    %20 = arith.mulf %18, %19 : vector<8x8xf32>
    %cst_10 = arith.constant dense<0.000000e+00> : vector<8xf32>
    %21 = vector.multi_reduction <add>, %20, %cst_10 [1] : vector<8x8xf32> to vector<8xf32>
    %22 = vector.shape_cast %21 : vector<8xf32> to vector<8x1xf32>
    %cst_11 = arith.constant 1.000000e-30 : f32
    %23 = vector.broadcast %cst_11 : f32 to vector<8x1xf32>
    %24 = arith.addf %22, %23 : vector<8x1xf32>
    %25 = tpu.reciprocal %24 {approx = true} : vector<8x1xf32> -> vector<8x1xf32>
    %26 = vector.broadcast %25 : vector<8x1xf32> to vector<8x8xf32>
    %27 = arith.mulf %20, %26 : vector<8x8xf32>
    %28 = arith.truncf %27 : vector<8x8xf32> to vector<8x8xbf16>
    %cst_12 = arith.constant dense<0.000000e+00> : vector<8x16xf32>
    %29 = tpu.matmul %28, %12, %cst_12 {dimension_numbers = #tpu.dot_dimension_numbers<[1], [0], [0], [1], [0, 0, 1, 1], [], []>} : vector<8x8xbf16>, vector<8x16xbf16>, vector<8x16xf32> -> vector<8x16xf32>
    %30 = vector.extract_strided_slice %7 {offsets = [0, 16], sizes = [8, 16], strides = [1, 1]} : vector<16x96xbf16> to vector<8x16xbf16>
    %31 = vector.extract_strided_slice %7 {offsets = [0, 48], sizes = [8, 16], strides = [1, 1]} : vector<16x96xbf16> to vector<8x16xbf16>
    %32 = vector.extract_strided_slice %7 {offsets = [0, 80], sizes = [8, 16], strides = [1, 1]} : vector<16x96xbf16> to vector<8x16xbf16>
    %cst_13 = arith.constant dense<0.000000e+00> : vector<8x8xf32>
    %33 = tpu.matmul %30, %31, %cst_13 {dimension_numbers = #tpu.dot_dimension_numbers<[1], [1], [0], [0], [0, 0, 1, 0], [], []>} : vector<8x16xbf16>, vector<8x16xbf16>, vector<8x8xf32> -> vector<8x8xf32>
    %cst_14 = arith.constant dense<0xFF800000> : vector<8xf32>
    %34 = vector.multi_reduction <maximumf>, %33, %cst_14 [1] : vector<8x8xf32> to vector<8xf32>
    %35 = vector.shape_cast %34 : vector<8xf32> to vector<8x1xf32>
    %36 = vector.broadcast %35 : vector<8x1xf32> to vector<8x8xf32>
    %37 = arith.subf %33, %36 : vector<8x8xf32>
    %38 = math.exp %37 : vector<8x8xf32>
    %39 = vector.broadcast %9 : vector<1x8xf32> to vector<8x8xf32>
    %40 = arith.mulf %38, %39 : vector<8x8xf32>
    %cst_15 = arith.constant dense<0.000000e+00> : vector<8xf32>
    %41 = vector.multi_reduction <add>, %40, %cst_15 [1] : vector<8x8xf32> to vector<8xf32>
    %42 = vector.shape_cast %41 : vector<8xf32> to vector<8x1xf32>
    %cst_16 = arith.constant 1.000000e-30 : f32
    %43 = vector.broadcast %cst_16 : f32 to vector<8x1xf32>
    %44 = arith.addf %42, %43 : vector<8x1xf32>
    %45 = tpu.reciprocal %44 {approx = true} : vector<8x1xf32> -> vector<8x1xf32>
    %46 = vector.broadcast %45 : vector<8x1xf32> to vector<8x8xf32>
    %47 = arith.mulf %40, %46 : vector<8x8xf32>
    %48 = arith.truncf %47 : vector<8x8xf32> to vector<8x8xbf16>
    %cst_17 = arith.constant dense<0.000000e+00> : vector<8x16xf32>
    %49 = tpu.matmul %48, %32, %cst_17 {dimension_numbers = #tpu.dot_dimension_numbers<[1], [0], [0], [1], [0, 0, 1, 1], [], []>} : vector<8x8xbf16>, vector<8x16xbf16>, vector<8x16xf32> -> vector<8x16xf32>
    %50 = tpu.concatenate %29, %49 in 1 : vector<8x16xf32>, vector<8x16xf32> -> vector<8x32xf32>
    %c1 = arith.constant 1 : index
    %c0_18 = arith.constant 0 : index
    %c0_19 = arith.constant 0 : index
    %51 = vector.load %arg2[%c1, %c0_18, %c0_19] : memref<2x1x8xf32, #tpu.memory_space<vmem>>, vector<1x1x8xf32>
    %52 = vector.shape_cast %51 : vector<1x1x8xf32> to vector<1x8xf32>
    %53 = vector.extract_strided_slice %7 {offsets = [8, 0], sizes = [8, 16], strides = [1, 1]} : vector<16x96xbf16> to vector<8x16xbf16>
    %54 = vector.extract_strided_slice %7 {offsets = [8, 32], sizes = [8, 16], strides = [1, 1]} : vector<16x96xbf16> to vector<8x16xbf16>
    %55 = vector.extract_strided_slice %7 {offsets = [8, 64], sizes = [8, 16], strides = [1, 1]} : vector<16x96xbf16> to vector<8x16xbf16>
    %cst_20 = arith.constant dense<0.000000e+00> : vector<8x8xf32>
    %56 = tpu.matmul %53, %54, %cst_20 {dimension_numbers = #tpu.dot_dimension_numbers<[1], [1], [0], [0], [0, 0, 1, 0], [], []>} : vector<8x16xbf16>, vector<8x16xbf16>, vector<8x8xf32> -> vector<8x8xf32>
    %cst_21 = arith.constant dense<0xFF800000> : vector<8xf32>
    %57 = vector.multi_reduction <maximumf>, %56, %cst_21 [1] : vector<8x8xf32> to vector<8xf32>
    %58 = vector.shape_cast %57 : vector<8xf32> to vector<8x1xf32>
    %59 = vector.broadcast %58 : vector<8x1xf32> to vector<8x8xf32>
    %60 = arith.subf %56, %59 : vector<8x8xf32>
    %61 = math.exp %60 : vector<8x8xf32>
    %62 = vector.broadcast %52 : vector<1x8xf32> to vector<8x8xf32>
    %63 = arith.mulf %61, %62 : vector<8x8xf32>
    %cst_22 = arith.constant dense<0.000000e+00> : vector<8xf32>
    %64 = vector.multi_reduction <add>, %63, %cst_22 [1] : vector<8x8xf32> to vector<8xf32>
    %65 = vector.shape_cast %64 : vector<8xf32> to vector<8x1xf32>
    %cst_23 = arith.constant 1.000000e-30 : f32
    %66 = vector.broadcast %cst_23 : f32 to vector<8x1xf32>
    %67 = arith.addf %65, %66 : vector<8x1xf32>
    %68 = tpu.reciprocal %67 {approx = true} : vector<8x1xf32> -> vector<8x1xf32>
    %69 = vector.broadcast %68 : vector<8x1xf32> to vector<8x8xf32>
    %70 = arith.mulf %63, %69 : vector<8x8xf32>
    %71 = arith.truncf %70 : vector<8x8xf32> to vector<8x8xbf16>
    %cst_24 = arith.constant dense<0.000000e+00> : vector<8x16xf32>
    %72 = tpu.matmul %71, %55, %cst_24 {dimension_numbers = #tpu.dot_dimension_numbers<[1], [0], [0], [1], [0, 0, 1, 1], [], []>} : vector<8x8xbf16>, vector<8x16xbf16>, vector<8x16xf32> -> vector<8x16xf32>
    %73 = vector.extract_strided_slice %7 {offsets = [8, 16], sizes = [8, 16], strides = [1, 1]} : vector<16x96xbf16> to vector<8x16xbf16>
    %74 = vector.extract_strided_slice %7 {offsets = [8, 48], sizes = [8, 16], strides = [1, 1]} : vector<16x96xbf16> to vector<8x16xbf16>
    %75 = vector.extract_strided_slice %7 {offsets = [8, 80], sizes = [8, 16], strides = [1, 1]} : vector<16x96xbf16> to vector<8x16xbf16>
    %cst_25 = arith.constant dense<0.000000e+00> : vector<8x8xf32>
    %76 = tpu.matmul %73, %74, %cst_25 {dimension_numbers = #tpu.dot_dimension_numbers<[1], [1], [0], [0], [0, 0, 1, 0], [], []>} : vector<8x16xbf16>, vector<8x16xbf16>, vector<8x8xf32> -> vector<8x8xf32>
    %cst_26 = arith.constant dense<0xFF800000> : vector<8xf32>
    %77 = vector.multi_reduction <maximumf>, %76, %cst_26 [1] : vector<8x8xf32> to vector<8xf32>
    %78 = vector.shape_cast %77 : vector<8xf32> to vector<8x1xf32>
    %79 = vector.broadcast %78 : vector<8x1xf32> to vector<8x8xf32>
    %80 = arith.subf %76, %79 : vector<8x8xf32>
    %81 = math.exp %80 : vector<8x8xf32>
    %82 = vector.broadcast %52 : vector<1x8xf32> to vector<8x8xf32>
    %83 = arith.mulf %81, %82 : vector<8x8xf32>
    %cst_27 = arith.constant dense<0.000000e+00> : vector<8xf32>
    %84 = vector.multi_reduction <add>, %83, %cst_27 [1] : vector<8x8xf32> to vector<8xf32>
    %85 = vector.shape_cast %84 : vector<8xf32> to vector<8x1xf32>
    %cst_28 = arith.constant 1.000000e-30 : f32
    %86 = vector.broadcast %cst_28 : f32 to vector<8x1xf32>
    %87 = arith.addf %85, %86 : vector<8x1xf32>
    %88 = tpu.reciprocal %87 {approx = true} : vector<8x1xf32> -> vector<8x1xf32>
    %89 = vector.broadcast %88 : vector<8x1xf32> to vector<8x8xf32>
    %90 = arith.mulf %83, %89 : vector<8x8xf32>
    %91 = arith.truncf %90 : vector<8x8xf32> to vector<8x8xbf16>
    %cst_29 = arith.constant dense<0.000000e+00> : vector<8x16xf32>
    %92 = tpu.matmul %91, %75, %cst_29 {dimension_numbers = #tpu.dot_dimension_numbers<[1], [0], [0], [1], [0, 0, 1, 1], [], []>} : vector<8x8xbf16>, vector<8x16xbf16>, vector<8x16xf32> -> vector<8x16xf32>
    %93 = tpu.concatenate %72, %92 in 1 : vector<8x16xf32>, vector<8x16xf32> -> vector<8x32xf32>
    %94 = tpu.concatenate %50, %93 in 0 : vector<8x32xf32>, vector<8x32xf32> -> vector<16x32xf32>
    %95 = arith.truncf %94 : vector<16x32xf32> to vector<16x32xbf16>
    %c0_30 = arith.constant 0 : index
    %c0_31 = arith.constant 0 : index
    %96 = vector.load %arg6[%c0_30, %c0_31] : memref<32x32xbf16, #tpu.memory_space<vmem>>, vector<32x32xbf16>
    %cst_32 = arith.constant dense<0.000000e+00> : vector<16x32xf32>
    %97 = tpu.matmul %95, %96, %cst_32 {dimension_numbers = #tpu.dot_dimension_numbers<[1], [0], [0], [1], [0, 0, 1, 1], [], []>} : vector<16x32xbf16>, vector<32x32xbf16>, vector<16x32xf32> -> vector<16x32xf32>
    %c0_33 = arith.constant 0 : index
    %c0_34 = arith.constant 0 : index
    %98 = vector.load %arg7[%c0_33, %c0_34] : memref<1x32xf32, #tpu.memory_space<vmem>>, vector<1x32xf32>
    %99 = vector.broadcast %98 : vector<1x32xf32> to vector<16x32xf32>
    %100 = arith.addf %97, %99 : vector<16x32xf32>
    %c0_35 = arith.constant 0 : index
    %c0_36 = arith.constant 0 : index
    %101 = vector.load %arg3[%c0_35, %c0_36] : memref<16x1xf32, #tpu.memory_space<vmem>>, vector<16x1xf32>
    %102 = vector.broadcast %101 : vector<16x1xf32> to vector<16x32xf32>
    %103 = arith.mulf %100, %102 : vector<16x32xf32>
    %104 = tpu.iota {dimensions = array<i32: 0>} : vector<16x1xi32>
    %c8_i32 = arith.constant 8 : i32
    %c0_i32 = arith.constant 0 : i32
    %105 = arith.cmpi eq, %c8_i32, %c0_i32 : i32
    %c1_i32 = arith.constant 1 : i32
    %106 = arith.select %105, %c1_i32, %c8_i32 : i32
    %107 = vector.broadcast %106 : i32 to vector<16x1xi32>
    %108 = arith.remsi %104, %107 : vector<16x1xi32>
    %c0_i32_37 = arith.constant 0 : i32
    %109 = vector.broadcast %c0_i32_37 : i32 to vector<16x1xi32>
    %110 = arith.cmpi ne, %108, %109 : vector<16x1xi32>
    %c0_i32_38 = arith.constant 0 : i32
    %111 = vector.broadcast %c0_i32_38 : i32 to vector<16x1xi32>
    %112 = arith.cmpi slt, %108, %111 : vector<16x1xi32>
    %c0_i32_39 = arith.constant 0 : i32
    %113 = arith.cmpi slt, %106, %c0_i32_39 : i32
    %114 = vector.broadcast %113 : i1 to vector<16x1xi1>
    %115 = vector.broadcast %114 : vector<16x1xi1> to vector<16x1xi1>
    %116 = arith.xori %112, %115 : vector<16x1xi1>
    %117 = arith.andi %116, %110 : vector<16x1xi1>
    %118 = vector.broadcast %106 : i32 to vector<16x1xi32>
    %119 = arith.addi %108, %118 : vector<16x1xi32>
    %120 = arith.select %117, %119, %108 : vector<16x1xi1>, vector<16x1xi32>
    %c1_i32_40 = arith.constant 1 : i32
    %121 = tpu.dynamic_rotate %103 by %c1_i32_40 dim 0 : vector<16x32xf32>, i32 -> vector<16x32xf32>
    %c1_i32_41 = arith.constant 1 : i32
    %122 = vector.broadcast %c1_i32_41 : i32 to vector<16x1xi32>
    %123 = arith.cmpi sge, %120, %122 : vector<16x1xi32>
    %cst_42 = arith.constant 0.000000e+00 : f32
    %124 = vector.shape_cast %123 : vector<16x1xi1> to vector<16x1xi1>
    %125 = vector.broadcast %124 : vector<16x1xi1> to vector<16x32xi1>
    %126 = vector.broadcast %cst_42 : f32 to vector<16x32xf32>
    %127 = arith.select %125, %121, %126 : vector<16x32xi1>, vector<16x32xf32>
    %c15_i32 = arith.constant 15 : i32
    %128 = tpu.dynamic_rotate %103 by %c15_i32 dim 0 : vector<16x32xf32>, i32 -> vector<16x32xf32>
    %c7_i32 = arith.constant 7 : i32
    %129 = vector.broadcast %c7_i32 : i32 to vector<16x1xi32>
    %130 = arith.cmpi slt, %120, %129 : vector<16x1xi32>
    %cst_43 = arith.constant 0.000000e+00 : f32
    %131 = vector.shape_cast %130 : vector<16x1xi1> to vector<16x1xi1>
    %132 = vector.broadcast %131 : vector<16x1xi1> to vector<16x32xi1>
    %133 = vector.broadcast %cst_43 : f32 to vector<16x32xf32>
    %134 = arith.select %132, %128, %133 : vector<16x32xi1>, vector<16x32xf32>
    %135 = tpu.concatenate %127, %103, %134 in 1 : vector<16x32xf32>, vector<16x32xf32>, vector<16x32xf32> -> vector<16x96xf32>
    %136 = arith.truncf %135 : vector<16x96xf32> to vector<16x96xbf16>
    %c0_44 = arith.constant 0 : index
    %c0_45 = arith.constant 0 : index
    %137 = vector.load %arg8[%c0_44, %c0_45] : memref<96x64xbf16, #tpu.memory_space<vmem>>, vector<96x64xbf16>
    %cst_46 = arith.constant dense<0.000000e+00> : vector<16x64xf32>
    %138 = tpu.matmul %136, %137, %cst_46 {dimension_numbers = #tpu.dot_dimension_numbers<[1], [0], [0], [1], [0, 0, 1, 1], [], []>} : vector<16x96xbf16>, vector<96x64xbf16>, vector<16x64xf32> -> vector<16x64xf32>
    %c0_47 = arith.constant 0 : index
    %c0_48 = arith.constant 0 : index
    %139 = vector.load %arg9[%c0_47, %c0_48] : memref<1x64xf32, #tpu.memory_space<vmem>>, vector<1x64xf32>
    %140 = vector.broadcast %139 : vector<1x64xf32> to vector<16x64xf32>
    %141 = arith.addf %138, %140 : vector<16x64xf32>
    %cst_49 = arith.constant 0.000000e+00 : f32
    %142 = vector.broadcast %cst_49 : f32 to vector<16x64xf32>
    %143 = arith.maximumf %141, %142 : vector<16x64xf32>
    %c1_i32_50 = arith.constant 1 : i32
    %144 = tpu.dynamic_rotate %143 by %c1_i32_50 dim 0 : vector<16x64xf32>, i32 -> vector<16x64xf32>
    %c1_i32_51 = arith.constant 1 : i32
    %145 = vector.broadcast %c1_i32_51 : i32 to vector<16x1xi32>
    %146 = arith.cmpi sge, %120, %145 : vector<16x1xi32>
    %cst_52 = arith.constant 0.000000e+00 : f32
    %147 = vector.shape_cast %146 : vector<16x1xi1> to vector<16x1xi1>
    %148 = vector.broadcast %147 : vector<16x1xi1> to vector<16x64xi1>
    %149 = vector.broadcast %cst_52 : f32 to vector<16x64xf32>
    %150 = arith.select %148, %144, %149 : vector<16x64xi1>, vector<16x64xf32>
    %c15_i32_53 = arith.constant 15 : i32
    %151 = tpu.dynamic_rotate %143 by %c15_i32_53 dim 0 : vector<16x64xf32>, i32 -> vector<16x64xf32>
    %c7_i32_54 = arith.constant 7 : i32
    %152 = vector.broadcast %c7_i32_54 : i32 to vector<16x1xi32>
    %153 = arith.cmpi slt, %120, %152 : vector<16x1xi32>
    %cst_55 = arith.constant 0.000000e+00 : f32
    %154 = vector.shape_cast %153 : vector<16x1xi1> to vector<16x1xi1>
    %155 = vector.broadcast %154 : vector<16x1xi1> to vector<16x64xi1>
    %156 = vector.broadcast %cst_55 : f32 to vector<16x64xf32>
    %157 = arith.select %155, %151, %156 : vector<16x64xi1>, vector<16x64xf32>
    %158 = tpu.concatenate %150, %143, %157 in 1 : vector<16x64xf32>, vector<16x64xf32>, vector<16x64xf32> -> vector<16x192xf32>
    %159 = arith.truncf %158 : vector<16x192xf32> to vector<16x192xbf16>
    %c0_56 = arith.constant 0 : index
    %c0_57 = arith.constant 0 : index
    %160 = vector.load %arg10[%c0_56, %c0_57] : memref<192x32xbf16, #tpu.memory_space<vmem>>, vector<192x32xbf16>
    %cst_58 = arith.constant dense<0.000000e+00> : vector<16x32xf32>
    %161 = tpu.matmul %159, %160, %cst_58 {dimension_numbers = #tpu.dot_dimension_numbers<[1], [0], [0], [1], [0, 0, 1, 1], [], []>} : vector<16x192xbf16>, vector<192x32xbf16>, vector<16x32xf32> -> vector<16x32xf32>
    %c0_59 = arith.constant 0 : index
    %c0_60 = arith.constant 0 : index
    %162 = vector.load %arg11[%c0_59, %c0_60] : memref<1x32xf32, #tpu.memory_space<vmem>>, vector<1x32xf32>
    %163 = vector.broadcast %162 : vector<1x32xf32> to vector<16x32xf32>
    %164 = arith.addf %161, %163 : vector<16x32xf32>
    %165 = arith.addf %164, %103 : vector<16x32xf32>
    %cst_61 = arith.constant dense<0.000000e+00> : vector<16xf32>
    %166 = vector.multi_reduction <add>, %165, %cst_61 [1] : vector<16x32xf32> to vector<16xf32>
    %167 = vector.shape_cast %166 : vector<16xf32> to vector<16x1xf32>
    %cst_62 = arith.constant 3.200000e+01 : f32
    %168 = vector.broadcast %cst_62 : f32 to vector<16x1xf32>
    %169 = arith.divf %167, %168 : vector<16x1xf32>
    %170 = vector.broadcast %169 : vector<16x1xf32> to vector<16x32xf32>
    %171 = arith.subf %165, %170 : vector<16x32xf32>
    %172 = arith.mulf %171, %171 : vector<16x32xf32>
    %cst_63 = arith.constant dense<0.000000e+00> : vector<16xf32>
    %173 = vector.multi_reduction <add>, %172, %cst_63 [1] : vector<16x32xf32> to vector<16xf32>
    %174 = vector.shape_cast %173 : vector<16xf32> to vector<16x1xf32>
    %cst_64 = arith.constant 3.200000e+01 : f32
    %175 = vector.broadcast %cst_64 : f32 to vector<16x1xf32>
    %176 = arith.divf %174, %175 : vector<16x1xf32>
    %177 = vector.broadcast %169 : vector<16x1xf32> to vector<16x32xf32>
    %178 = arith.subf %165, %177 : vector<16x32xf32>
    %cst_65 = arith.constant 9.99999974E-6 : f32
    %179 = vector.broadcast %cst_65 : f32 to vector<16x1xf32>
    %180 = arith.addf %176, %179 : vector<16x1xf32>
    %181 = math.rsqrt %180 : vector<16x1xf32>
    %182 = vector.broadcast %181 : vector<16x1xf32> to vector<16x32xf32>
    %183 = arith.mulf %178, %182 : vector<16x32xf32>
    %c0_66 = arith.constant 0 : index
    %c0_67 = arith.constant 0 : index
    %184 = vector.load %arg12[%c0_66, %c0_67] : memref<1x32xf32, #tpu.memory_space<vmem>>, vector<1x32xf32>
    %185 = vector.broadcast %184 : vector<1x32xf32> to vector<16x32xf32>
    %186 = arith.mulf %183, %185 : vector<16x32xf32>
    %c0_68 = arith.constant 0 : index
    %c0_69 = arith.constant 0 : index
    %187 = vector.load %arg13[%c0_68, %c0_69] : memref<1x32xf32, #tpu.memory_space<vmem>>, vector<1x32xf32>
    %188 = vector.broadcast %187 : vector<1x32xf32> to vector<16x32xf32>
    %189 = arith.addf %186, %188 : vector<16x32xf32>
    %190 = vector.broadcast %101 : vector<16x1xf32> to vector<16x32xf32>
    %191 = arith.mulf %189, %190 : vector<16x32xf32>
    %c0_70 = arith.constant 0 : index
    %c0_71 = arith.constant 0 : index
    %192 = vector.load %arg14[%c0_70, %c0_71] : memref<16x32xf32, #tpu.memory_space<vmem>>, vector<16x32xf32>
    tpu.vector_store %arg14[%c0_70, %c0_71], %191 {strides = array<i32>} : memref<16x32xf32, #tpu.memory_space<vmem>>, vector<16x32xf32>,
    return
  }
  func.func @transform_0(%arg0: i32) -> (i32, i32) {
    %c0_i32 = arith.constant 0 : i32
    %c0_i32_0 = arith.constant 0 : i32
    return %arg0, %c0_i32 : i32, i32
  }
  func.func @transform_1(%arg0: i32) -> (i32, i32, i32) {
    %c0_i32 = arith.constant 0 : i32
    %c0_i32_0 = arith.constant 0 : i32
    %c0_i32_1 = arith.constant 0 : i32
    return %arg0, %c0_i32, %c0_i32_0 : i32, i32, i32
  }
  func.func @transform_2(%arg0: i32) -> (i32, i32) {
    %c0_i32 = arith.constant 0 : i32
    %c0_i32_0 = arith.constant 0 : i32
    return %arg0, %c0_i32 : i32, i32
  }
  func.func @transform_3(%arg0: i32) -> (i32, i32) {
    %c0_i32 = arith.constant 0 : i32
    %c0_i32_0 = arith.constant 0 : i32
    %c0_i32_1 = arith.constant 0 : i32
    return %c0_i32, %c0_i32_0 : i32, i32
  }
  func.func @transform_4(%arg0: i32) -> (i32, i32) {
    %c0_i32 = arith.constant 0 : i32
    %c0_i32_0 = arith.constant 0 : i32
    %c0_i32_1 = arith.constant 0 : i32
    return %c0_i32, %c0_i32_0 : i32, i32
  }
  func.func @transform_5(%arg0: i32) -> (i32, i32) {
    %c0_i32 = arith.constant 0 : i32
    %c0_i32_0 = arith.constant 0 : i32
    %c0_i32_1 = arith.constant 0 : i32
    return %c0_i32, %c0_i32_0 : i32, i32
  }
  func.func @transform_6(%arg0: i32) -> (i32, i32) {
    %c0_i32 = arith.constant 0 : i32
    %c0_i32_0 = arith.constant 0 : i32
    %c0_i32_1 = arith.constant 0 : i32
    return %c0_i32, %c0_i32_0 : i32, i32
  }
  func.func @transform_7(%arg0: i32) -> (i32, i32) {
    %c0_i32 = arith.constant 0 : i32
    %c0_i32_0 = arith.constant 0 : i32
    %c0_i32_1 = arith.constant 0 : i32
    return %c0_i32, %c0_i32_0 : i32, i32
  }
  func.func @transform_8(%arg0: i32) -> (i32, i32) {
    %c0_i32 = arith.constant 0 : i32
    %c0_i32_0 = arith.constant 0 : i32
    %c0_i32_1 = arith.constant 0 : i32
    return %c0_i32, %c0_i32_0 : i32, i32
  }
  func.func @transform_9(%arg0: i32) -> (i32, i32) {
    %c0_i32 = arith.constant 0 : i32
    %c0_i32_0 = arith.constant 0 : i32
    %c0_i32_1 = arith.constant 0 : i32
    return %c0_i32, %c0_i32_0 : i32, i32
  }
  func.func @transform_10(%arg0: i32) -> (i32, i32) {
    %c0_i32 = arith.constant 0 : i32
    %c0_i32_0 = arith.constant 0 : i32
    %c0_i32_1 = arith.constant 0 : i32
    return %c0_i32, %c0_i32_0 : i32, i32
  }
  func.func @transform_11(%arg0: i32) -> (i32, i32) {
    %c0_i32 = arith.constant 0 : i32
    %c0_i32_0 = arith.constant 0 : i32
    %c0_i32_1 = arith.constant 0 : i32
    return %c0_i32, %c0_i32_0 : i32, i32
  }
  func.func @transform_12(%arg0: i32) -> (i32, i32) {
    %c0_i32 = arith.constant 0 : i32
    %c0_i32_0 = arith.constant 0 : i32
    %c0_i32_1 = arith.constant 0 : i32
    return %c0_i32, %c0_i32_0 : i32, i32
  }
  func.func @transform_13(%arg0: i32) -> (i32, i32) {
    %c0_i32 = arith.constant 0 : i32
    %c0_i32_0 = arith.constant 0 : i32
    return %arg0, %c0_i32 : i32, i32
  }
}

module attributes {stable_mosaic.version = 11 : i64} {
  func.func @_fft_block_kernel(%arg0: i32, %arg1: memref<16x32xf32, #tpu.memory_space<vmem>>, %arg2: memref<2x1x8xf32, #tpu.memory_space<vmem>>, %arg3: memref<16x1xf32, #tpu.memory_space<vmem>>, %arg4: memref<32x96xbf16, #tpu.memory_space<vmem>>, %arg5: memref<1x96xf32, #tpu.memory_space<vmem>>, %arg6: memref<32x32xbf16, #tpu.memory_space<vmem>>, %arg7: memref<1x32xf32, #tpu.memory_space<vmem>>, %arg8: memref<96x64xbf16, #tpu.memory_space<vmem>>, %arg9: memref<1x64xf32, #tpu.memory_space<vmem>>, %arg10: memref<192x32xbf16, #tpu.memory_space<vmem>>, %arg11: memref<1x32xf32, #tpu.memory_space<vmem>>, %arg12: memref<1x32xf32, #tpu.memory_space<vmem>>, %arg13: memref<1x32xf32, #tpu.memory_space<vmem>>, %arg14: memref<16x32xf32, #tpu.memory_space<vmem>>) attributes {dimension_semantics = [#tpu.dimension_semantics<parallel>], iteration_bounds = array<i64: 1>, scalar_prefetch = 0 : i64, scratch_operands = 0 : i64, tpu.core_type = #tpu.core_type<tc>, window_params = [{transform_indices = @transform_0, window_bounds = array<i64: 16, 32>}, {transform_indices = @transform_1, window_bounds = array<i64: 2, 1, 8>}, {transform_indices = @transform_2, window_bounds = array<i64: 16, 1>}, {pipeline_mode = #tpu.pipeline_mode<synchronous>, transform_indices = @transform_3, window_bounds = array<i64: 32, 96>}, {pipeline_mode = #tpu.pipeline_mode<synchronous>, transform_indices = @transform_4, window_bounds = array<i64: 1, 96>}, {pipeline_mode = #tpu.pipeline_mode<synchronous>, transform_indices = @transform_5, window_bounds = array<i64: 32, 32>}, {pipeline_mode = #tpu.pipeline_mode<synchronous>, transform_indices = @transform_6, window_bounds = array<i64: 1, 32>}, {pipeline_mode = #tpu.pipeline_mode<synchronous>, transform_indices = @transform_7, window_bounds = array<i64: 96, 64>}, {pipeline_mode = #tpu.pipeline_mode<synchronous>, transform_indices = @transform_8, window_bounds = array<i64: 1, 64>}, {pipeline_mode = #tpu.pipeline_mode<synchronous>, transform_indices = @transform_9, window_bounds = array<i64: 192, 32>}, {pipeline_mode = #tpu.pipeline_mode<synchronous>, transform_indices = @transform_10, window_bounds = array<i64: 1, 32>}, {pipeline_mode = #tpu.pipeline_mode<synchronous>, transform_indices = @transform_11, window_bounds = array<i64: 1, 32>}, {pipeline_mode = #tpu.pipeline_mode<synchronous>, transform_indices = @transform_12, window_bounds = array<i64: 1, 32>}, {transform_indices = @transform_13, window_bounds = array<i64: 16, 32>}]} {
    %c0 = arith.constant 0 : index
    %c0_0 = arith.constant 0 : index
    %0 = vector.load %arg1[%c0, %c0_0] : memref<16x32xf32, #tpu.memory_space<vmem>>, vector<16x32xf32>
    %1 = arith.truncf %0 : vector<16x32xf32> to vector<16x32xbf16>
    %c0_1 = arith.constant 0 : index
    %c0_2 = arith.constant 0 : index
    %2 = vector.load %arg4[%c0_1, %c0_2] : memref<32x96xbf16, #tpu.memory_space<vmem>>, vector<32x96xbf16>
    %cst = arith.constant dense<0.000000e+00> : vector<16x96xf32>
    %3 = tpu.matmul %1, %2, %cst {dimension_numbers = #tpu.dot_dimension_numbers<[1], [0], [0], [1], [0, 0, 1, 1], [], []>} : vector<16x32xbf16>, vector<32x96xbf16>, vector<16x96xf32> -> vector<16x96xf32>
    %c0_3 = arith.constant 0 : index
    %c0_4 = arith.constant 0 : index
    %4 = vector.load %arg5[%c0_3, %c0_4] : memref<1x96xf32, #tpu.memory_space<vmem>>, vector<1x96xf32>
    %5 = vector.broadcast %4 : vector<1x96xf32> to vector<16x96xf32>
    %6 = arith.addf %3, %5 : vector<16x96xf32>
    %7 = arith.truncf %6 : vector<16x96xf32> to vector<16x96xbf16>
    %c0_5 = arith.constant 0 : index
    %c0_6 = arith.constant 0 : index
    %c0_7 = arith.constant 0 : index
    %8 = vector.load %arg2[%c0_5, %c0_6, %c0_7] : memref<2x1x8xf32, #tpu.memory_space<vmem>>, vector<1x1x8xf32>
    %9 = vector.shape_cast %8 : vector<1x1x8xf32> to vector<1x8xf32>
    %10 = vector.extract_strided_slice %7 {offsets = [0, 0], sizes = [8, 16], strides = [1, 1]} : vector<16x96xbf16> to vector<8x16xbf16>
    %11 = vector.extract_strided_slice %7 {offsets = [0, 32], sizes = [8, 16], strides = [1, 1]} : vector<16x96xbf16> to vector<8x16xbf16>
    %12 = vector.extract_strided_slice %7 {offsets = [0, 64], sizes = [8, 16], strides = [1, 1]} : vector<16x96xbf16> to vector<8x16xbf16>
    %cst_8 = arith.constant dense<0.000000e+00> : vector<8x8xf32>
    %13 = tpu.matmul %10, %11, %cst_8 {dimension_numbers = #tpu.dot_dimension_numbers<[1], [1], [0], [0], [0, 0, 1, 0], [], []>} : vector<8x16xbf16>, vector<8x16xbf16>, vector<8x8xf32> -> vector<8x8xf32>
    %cst_9 = arith.constant dense<0xFF800000> : vector<8xf32>
    %14 = vector.multi_reduction <maximumf>, %13, %cst_9 [1] : vector<8x8xf32> to vector<8xf32>
    %15 = vector.shape_cast %14 : vector<8xf32> to vector<8x1xf32>
    %16 = vector.broadcast %15 : vector<8x1xf32> to vector<8x8xf32>
    %17 = arith.subf %13, %16 : vector<8x8xf32>
    %18 = math.exp %17 : vector<8x8xf32>
    %19 = vector.broadcast %9 : vector<1x8xf32> to vector<8x8xf32>
    %20 = arith.mulf %18, %19 : vector<8x8xf32>
    %cst_10 = arith.constant dense<0.000000e+00> : vector<8xf32>
    %21 = vector.multi_reduction <add>, %20, %cst_10 [1] : vector<8x8xf32> to vector<8xf32>
    %22 = vector.shape_cast %21 : vector<8xf32> to vector<8x1xf32>
    %cst_11 = arith.constant 1.000000e-30 : f32
    %23 = vector.broadcast %cst_11 : f32 to vector<8x1xf32>
    %24 = arith.addf %22, %23 : vector<8x1xf32>
    %25 = tpu.reciprocal %24 {approx = true} : vector<8x1xf32> -> vector<8x1xf32>
    %26 = vector.broadcast %25 : vector<8x1xf32> to vector<8x8xf32>
    %27 = arith.mulf %20, %26 : vector<8x8xf32>
    %28 = arith.truncf %27 : vector<8x8xf32> to vector<8x8xbf16>
    %cst_12 = arith.constant dense<0.000000e+00> : vector<8x16xf32>
    %29 = tpu.matmul %28, %12, %cst_12 {dimension_numbers = #tpu.dot_dimension_numbers<[1], [0], [0], [1], [0, 0, 1, 1], [], []>} : vector<8x8xbf16>, vector<8x16xbf16>, vector<8x16xf32> -> vector<8x16xf32>
    %30 = vector.extract_strided_slice %7 {offsets = [0, 16], sizes = [8, 16], strides = [1, 1]} : vector<16x96xbf16> to vector<8x16xbf16>
    %31 = vector.extract_strided_slice %7 {offsets = [0, 48], sizes = [8, 16], strides = [1, 1]} : vector<16x96xbf16> to vector<8x16xbf16>
    %32 = vector.extract_strided_slice %7 {offsets = [0, 80], sizes = [8, 16], strides = [1, 1]} : vector<16x96xbf16> to vector<8x16xbf16>
    %cst_13 = arith.constant dense<0.000000e+00> : vector<8x8xf32>
    %33 = tpu.matmul %30, %31, %cst_13 {dimension_numbers = #tpu.dot_dimension_numbers<[1], [1], [0], [0], [0, 0, 1, 0], [], []>} : vector<8x16xbf16>, vector<8x16xbf16>, vector<8x8xf32> -> vector<8x8xf32>
    %cst_14 = arith.constant dense<0xFF800000> : vector<8xf32>
    %34 = vector.multi_reduction <maximumf>, %33, %cst_14 [1] : vector<8x8xf32> to vector<8xf32>
    %35 = vector.shape_cast %34 : vector<8xf32> to vector<8x1xf32>
    %36 = vector.broadcast %35 : vector<8x1xf32> to vector<8x8xf32>
    %37 = arith.subf %33, %36 : vector<8x8xf32>
    %38 = math.exp %37 : vector<8x8xf32>
    %39 = vector.broadcast %9 : vector<1x8xf32> to vector<8x8xf32>
    %40 = arith.mulf %38, %39 : vector<8x8xf32>
    %cst_15 = arith.constant dense<0.000000e+00> : vector<8xf32>
    %41 = vector.multi_reduction <add>, %40, %cst_15 [1] : vector<8x8xf32> to vector<8xf32>
    %42 = vector.shape_cast %41 : vector<8xf32> to vector<8x1xf32>
    %cst_16 = arith.constant 1.000000e-30 : f32
    %43 = vector.broadcast %cst_16 : f32 to vector<8x1xf32>
    %44 = arith.addf %42, %43 : vector<8x1xf32>
    %45 = tpu.reciprocal %44 {approx = true} : vector<8x1xf32> -> vector<8x1xf32>
    %46 = vector.broadcast %45 : vector<8x1xf32> to vector<8x8xf32>
    %47 = arith.mulf %40, %46 : vector<8x8xf32>
    %48 = arith.truncf %47 : vector<8x8xf32> to vector<8x8xbf16>
    %cst_17 = arith.constant dense<0.000000e+00> : vector<8x16xf32>
    %49 = tpu.matmul %48, %32, %cst_17 {dimension_numbers = #tpu.dot_dimension_numbers<[1], [0], [0], [1], [0, 0, 1, 1], [], []>} : vector<8x8xbf16>, vector<8x16xbf16>, vector<8x16xf32> -> vector<8x16xf32>
    %50 = tpu.concatenate %29, %49 in 1 : vector<8x16xf32>, vector<8x16xf32> -> vector<8x32xf32>
    %c1 = arith.constant 1 : index
    %c0_18 = arith.constant 0 : index
    %c0_19 = arith.constant 0 : index
    %51 = vector.load %arg2[%c1, %c0_18, %c0_19] : memref<2x1x8xf32, #tpu.memory_space<vmem>>, vector<1x1x8xf32>
    %52 = vector.shape_cast %51 : vector<1x1x8xf32> to vector<1x8xf32>
    %53 = vector.extract_strided_slice %7 {offsets = [8, 0], sizes = [8, 16], strides = [1, 1]} : vector<16x96xbf16> to vector<8x16xbf16>
    %54 = vector.extract_strided_slice %7 {offsets = [8, 32], sizes = [8, 16], strides = [1, 1]} : vector<16x96xbf16> to vector<8x16xbf16>
    %55 = vector.extract_strided_slice %7 {offsets = [8, 64], sizes = [8, 16], strides = [1, 1]} : vector<16x96xbf16> to vector<8x16xbf16>
    %cst_20 = arith.constant dense<0.000000e+00> : vector<8x8xf32>
    %56 = tpu.matmul %53, %54, %cst_20 {dimension_numbers = #tpu.dot_dimension_numbers<[1], [1], [0], [0], [0, 0, 1, 0], [], []>} : vector<8x16xbf16>, vector<8x16xbf16>, vector<8x8xf32> -> vector<8x8xf32>
    %cst_21 = arith.constant dense<0xFF800000> : vector<8xf32>
    %57 = vector.multi_reduction <maximumf>, %56, %cst_21 [1] : vector<8x8xf32> to vector<8xf32>
    %58 = vector.shape_cast %57 : vector<8xf32> to vector<8x1xf32>
    %59 = vector.broadcast %58 : vector<8x1xf32> to vector<8x8xf32>
    %60 = arith.subf %56, %59 : vector<8x8xf32>
    %61 = math.exp %60 : vector<8x8xf32>
    %62 = vector.broadcast %52 : vector<1x8xf32> to vector<8x8xf32>
    %63 = arith.mulf %61, %62 : vector<8x8xf32>
    %cst_22 = arith.constant dense<0.000000e+00> : vector<8xf32>
    %64 = vector.multi_reduction <add>, %63, %cst_22 [1] : vector<8x8xf32> to vector<8xf32>
    %65 = vector.shape_cast %64 : vector<8xf32> to vector<8x1xf32>
    %cst_23 = arith.constant 1.000000e-30 : f32
    %66 = vector.broadcast %cst_23 : f32 to vector<8x1xf32>
    %67 = arith.addf %65, %66 : vector<8x1xf32>
    %68 = tpu.reciprocal %67 {approx = true} : vector<8x1xf32> -> vector<8x1xf32>
    %69 = vector.broadcast %68 : vector<8x1xf32> to vector<8x8xf32>
    %70 = arith.mulf %63, %69 : vector<8x8xf32>
    %71 = arith.truncf %70 : vector<8x8xf32> to vector<8x8xbf16>
    %cst_24 = arith.constant dense<0.000000e+00> : vector<8x16xf32>
    %72 = tpu.matmul %71, %55, %cst_24 {dimension_numbers = #tpu.dot_dimension_numbers<[1], [0], [0], [1], [0, 0, 1, 1], [], []>} : vector<8x8xbf16>, vector<8x16xbf16>, vector<8x16xf32> -> vector<8x16xf32>
    %73 = vector.extract_strided_slice %7 {offsets = [8, 16], sizes = [8, 16], strides = [1, 1]} : vector<16x96xbf16> to vector<8x16xbf16>
    %74 = vector.extract_strided_slice %7 {offsets = [8, 48], sizes = [8, 16], strides = [1, 1]} : vector<16x96xbf16> to vector<8x16xbf16>
    %75 = vector.extract_strided_slice %7 {offsets = [8, 80], sizes = [8, 16], strides = [1, 1]} : vector<16x96xbf16> to vector<8x16xbf16>
    %cst_25 = arith.constant dense<0.000000e+00> : vector<8x8xf32>
    %76 = tpu.matmul %73, %74, %cst_25 {dimension_numbers = #tpu.dot_dimension_numbers<[1], [1], [0], [0], [0, 0, 1, 0], [], []>} : vector<8x16xbf16>, vector<8x16xbf16>, vector<8x8xf32> -> vector<8x8xf32>
    %cst_26 = arith.constant dense<0xFF800000> : vector<8xf32>
    %77 = vector.multi_reduction <maximumf>, %76, %cst_26 [1] : vector<8x8xf32> to vector<8xf32>
    %78 = vector.shape_cast %77 : vector<8xf32> to vector<8x1xf32>
    %79 = vector.broadcast %78 : vector<8x1xf32> to vector<8x8xf32>
    %80 = arith.subf %76, %79 : vector<8x8xf32>
    %81 = math.exp %80 : vector<8x8xf32>
    %82 = vector.broadcast %52 : vector<1x8xf32> to vector<8x8xf32>
    %83 = arith.mulf %81, %82 : vector<8x8xf32>
    %cst_27 = arith.constant dense<0.000000e+00> : vector<8xf32>
    %84 = vector.multi_reduction <add>, %83, %cst_27 [1] : vector<8x8xf32> to vector<8xf32>
    %85 = vector.shape_cast %84 : vector<8xf32> to vector<8x1xf32>
    %cst_28 = arith.constant 1.000000e-30 : f32
    %86 = vector.broadcast %cst_28 : f32 to vector<8x1xf32>
    %87 = arith.addf %85, %86 : vector<8x1xf32>
    %88 = tpu.reciprocal %87 {approx = true} : vector<8x1xf32> -> vector<8x1xf32>
    %89 = vector.broadcast %88 : vector<8x1xf32> to vector<8x8xf32>
    %90 = arith.mulf %83, %89 : vector<8x8xf32>
    %91 = arith.truncf %90 : vector<8x8xf32> to vector<8x8xbf16>
    %cst_29 = arith.constant dense<0.000000e+00> : vector<8x16xf32>
    %92 = tpu.matmul %91, %75, %cst_29 {dimension_numbers = #tpu.dot_dimension_numbers<[1], [0], [0], [1], [0, 0, 1, 1], [], []>} : vector<8x8xbf16>, vector<8x16xbf16>, vector<8x16xf32> -> vector<8x16xf32>
    %93 = tpu.concatenate %72, %92 in 1 : vector<8x16xf32>, vector<8x16xf32> -> vector<8x32xf32>
    %94 = tpu.concatenate %50, %93 in 0 : vector<8x32xf32>, vector<8x32xf32> -> vector<16x32xf32>
    %95 = arith.truncf %94 : vector<16x32xf32> to vector<16x32xbf16>
    %c0_30 = arith.constant 0 : index
    %c0_31 = arith.constant 0 : index
    %96 = vector.load %arg6[%c0_30, %c0_31] : memref<32x32xbf16, #tpu.memory_space<vmem>>, vector<32x32xbf16>
    %cst_32 = arith.constant dense<0.000000e+00> : vector<16x32xf32>
    %97 = tpu.matmul %95, %96, %cst_32 {dimension_numbers = #tpu.dot_dimension_numbers<[1], [0], [0], [1], [0, 0, 1, 1], [], []>} : vector<16x32xbf16>, vector<32x32xbf16>, vector<16x32xf32> -> vector<16x32xf32>
    %c0_33 = arith.constant 0 : index
    %c0_34 = arith.constant 0 : index
    %98 = vector.load %arg7[%c0_33, %c0_34] : memref<1x32xf32, #tpu.memory_space<vmem>>, vector<1x32xf32>
    %99 = vector.broadcast %98 : vector<1x32xf32> to vector<16x32xf32>
    %100 = arith.addf %97, %99 : vector<16x32xf32>
    %c0_35 = arith.constant 0 : index
    %c0_36 = arith.constant 0 : index
    %101 = vector.load %arg3[%c0_35, %c0_36] : memref<16x1xf32, #tpu.memory_space<vmem>>, vector<16x1xf32>
    %102 = vector.broadcast %101 : vector<16x1xf32> to vector<16x32xf32>
    %103 = arith.mulf %100, %102 : vector<16x32xf32>
    %104 = tpu.iota {dimensions = array<i32: 0>} : vector<16x1xi32>
    %c8_i32 = arith.constant 8 : i32
    %c0_i32 = arith.constant 0 : i32
    %105 = arith.cmpi eq, %c8_i32, %c0_i32 : i32
    %c1_i32 = arith.constant 1 : i32
    %106 = arith.select %105, %c1_i32, %c8_i32 : i32
    %107 = vector.broadcast %106 : i32 to vector<16x1xi32>
    %108 = arith.remsi %104, %107 : vector<16x1xi32>
    %c0_i32_37 = arith.constant 0 : i32
    %109 = vector.broadcast %c0_i32_37 : i32 to vector<16x1xi32>
    %110 = arith.cmpi ne, %108, %109 : vector<16x1xi32>
    %c0_i32_38 = arith.constant 0 : i32
    %111 = vector.broadcast %c0_i32_38 : i32 to vector<16x1xi32>
    %112 = arith.cmpi slt, %108, %111 : vector<16x1xi32>
    %c0_i32_39 = arith.constant 0 : i32
    %113 = arith.cmpi slt, %106, %c0_i32_39 : i32
    %114 = vector.broadcast %113 : i1 to vector<16x1xi1>
    %115 = vector.broadcast %114 : vector<16x1xi1> to vector<16x1xi1>
    %116 = arith.xori %112, %115 : vector<16x1xi1>
    %117 = arith.andi %116, %110 : vector<16x1xi1>
    %118 = vector.broadcast %106 : i32 to vector<16x1xi32>
    %119 = arith.addi %108, %118 : vector<16x1xi32>
    %120 = arith.select %117, %119, %108 : vector<16x1xi1>, vector<16x1xi32>
    %c1_i32_40 = arith.constant 1 : i32
    %121 = tpu.dynamic_rotate %103 by %c1_i32_40 dim 0 : vector<16x32xf32>, i32 -> vector<16x32xf32>
    %c1_i32_41 = arith.constant 1 : i32
    %122 = vector.broadcast %c1_i32_41 : i32 to vector<16x1xi32>
    %123 = arith.cmpi sge, %120, %122 : vector<16x1xi32>
    %cst_42 = arith.constant 0.000000e+00 : f32
    %124 = vector.shape_cast %123 : vector<16x1xi1> to vector<16x1xi1>
    %125 = vector.broadcast %124 : vector<16x1xi1> to vector<16x32xi1>
    %126 = vector.broadcast %cst_42 : f32 to vector<16x32xf32>
    %127 = arith.select %125, %121, %126 : vector<16x32xi1>, vector<16x32xf32>
    %c15_i32 = arith.constant 15 : i32
    %128 = tpu.dynamic_rotate %103 by %c15_i32 dim 0 : vector<16x32xf32>, i32 -> vector<16x32xf32>
    %c7_i32 = arith.constant 7 : i32
    %129 = vector.broadcast %c7_i32 : i32 to vector<16x1xi32>
    %130 = arith.cmpi slt, %120, %129 : vector<16x1xi32>
    %cst_43 = arith.constant 0.000000e+00 : f32
    %131 = vector.shape_cast %130 : vector<16x1xi1> to vector<16x1xi1>
    %132 = vector.broadcast %131 : vector<16x1xi1> to vector<16x32xi1>
    %133 = vector.broadcast %cst_43 : f32 to vector<16x32xf32>
    %134 = arith.select %132, %128, %133 : vector<16x32xi1>, vector<16x32xf32>
    %135 = tpu.concatenate %127, %103, %134 in 1 : vector<16x32xf32>, vector<16x32xf32>, vector<16x32xf32> -> vector<16x96xf32>
    %136 = arith.truncf %135 : vector<16x96xf32> to vector<16x96xbf16>
    %c0_44 = arith.constant 0 : index
    %c0_45 = arith.constant 0 : index
    %137 = vector.load %arg8[%c0_44, %c0_45] : memref<96x64xbf16, #tpu.memory_space<vmem>>, vector<96x64xbf16>
    %cst_46 = arith.constant dense<0.000000e+00> : vector<16x64xf32>
    %138 = tpu.matmul %136, %137, %cst_46 {dimension_numbers = #tpu.dot_dimension_numbers<[1], [0], [0], [1], [0, 0, 1, 1], [], []>} : vector<16x96xbf16>, vector<96x64xbf16>, vector<16x64xf32> -> vector<16x64xf32>
    %c0_47 = arith.constant 0 : index
    %c0_48 = arith.constant 0 : index
    %139 = vector.load %arg9[%c0_47, %c0_48] : memref<1x64xf32, #tpu.memory_space<vmem>>, vector<1x64xf32>
    %140 = vector.broadcast %139 : vector<1x64xf32> to vector<16x64xf32>
    %141 = arith.addf %138, %140 : vector<16x64xf32>
    %cst_49 = arith.constant 0.000000e+00 : f32
    %142 = vector.broadcast %cst_49 : f32 to vector<16x64xf32>
    %143 = arith.maximumf %141, %142 : vector<16x64xf32>
    %c1_i32_50 = arith.constant 1 : i32
    %144 = tpu.dynamic_rotate %143 by %c1_i32_50 dim 0 : vector<16x64xf32>, i32 -> vector<16x64xf32>
    %c1_i32_51 = arith.constant 1 : i32
    %145 = vector.broadcast %c1_i32_51 : i32 to vector<16x1xi32>
    %146 = arith.cmpi sge, %120, %145 : vector<16x1xi32>
    %cst_52 = arith.constant 0.000000e+00 : f32
    %147 = vector.shape_cast %146 : vector<16x1xi1> to vector<16x1xi1>
    %148 = vector.broadcast %147 : vector<16x1xi1> to vector<16x64xi1>
    %149 = vector.broadcast %cst_52 : f32 to vector<16x64xf32>
    %150 = arith.select %148, %144, %149 : vector<16x64xi1>, vector<16x64xf32>
    %c15_i32_53 = arith.constant 15 : i32
    %151 = tpu.dynamic_rotate %143 by %c15_i32_53 dim 0 : vector<16x64xf32>, i32 -> vector<16x64xf32>
    %c7_i32_54 = arith.constant 7 : i32
    %152 = vector.broadcast %c7_i32_54 : i32 to vector<16x1xi32>
    %153 = arith.cmpi slt, %120, %152 : vector<16x1xi32>
    %cst_55 = arith.constant 0.000000e+00 : f32
    %154 = vector.shape_cast %153 : vector<16x1xi1> to vector<16x1xi1>
    %155 = vector.broadcast %154 : vector<16x1xi1> to vector<16x64xi1>
    %156 = vector.broadcast %cst_55 : f32 to vector<16x64xf32>
    %157 = arith.select %155, %151, %156 : vector<16x64xi1>, vector<16x64xf32>
    %158 = tpu.concatenate %150, %143, %157 in 1 : vector<16x64xf32>, vector<16x64xf32>, vector<16x64xf32> -> vector<16x192xf32>
    %159 = arith.truncf %158 : vector<16x192xf32> to vector<16x192xbf16>
    %c0_56 = arith.constant 0 : index
    %c0_57 = arith.constant 0 : index
    %160 = vector.load %arg10[%c0_56, %c0_57] : memref<192x32xbf16, #tpu.memory_space<vmem>>, vector<192x32xbf16>
    %cst_58 = arith.constant dense<0.000000e+00> : vector<16x32xf32>
    %161 = tpu.matmul %159, %160, %cst_58 {dimension_numbers = #tpu.dot_dimension_numbers<[1], [0], [0], [1], [0, 0, 1, 1], [], []>} : vector<16x192xbf16>, vector<192x32xbf16>, vector<16x32xf32> -> vector<16x32xf32>
    %c0_59 = arith.constant 0 : index
    %c0_60 = arith.constant 0 : index
    %162 = vector.load %arg11[%c0_59, %c0_60] : memref<1x32xf32, #tpu.memory_space<vmem>>, vector<1x32xf32>
    %163 = vector.broadcast %162 : vector<1x32xf32> to vector<16x32xf32>
    %164 = arith.addf %161, %163 : vector<16x32xf32>
    %165 = arith.addf %164, %103 : vector<16x32xf32>
    %cst_61 = arith.constant dense<0.000000e+00> : vector<16xf32>
    %166 = vector.multi_reduction <add>, %165, %cst_61 [1] : vector<16x32xf32> to vector<16xf32>
    %167 = vector.shape_cast %166 : vector<16xf32> to vector<16x1xf32>
    %cst_62 = arith.constant 3.200000e+01 : f32
    %168 = vector.broadcast %cst_62 : f32 to vector<16x1xf32>
    %169 = arith.divf %167, %168 : vector<16x1xf32>
    %170 = vector.broadcast %169 : vector<16x1xf32> to vector<16x32xf32>
    %171 = arith.subf %165, %170 : vector<16x32xf32>
    %172 = arith.mulf %171, %171 : vector<16x32xf32>
    %cst_63 = arith.constant dense<0.000000e+00> : vector<16xf32>
    %173 = vector.multi_reduction <add>, %172, %cst_63 [1] : vector<16x32xf32> to vector<16xf32>
    %174 = vector.shape_cast %173 : vector<16xf32> to vector<16x1xf32>
    %cst_64 = arith.constant 3.200000e+01 : f32
    %175 = vector.broadcast %cst_64 : f32 to vector<16x1xf32>
    %176 = arith.divf %174, %175 : vector<16x1xf32>
    %177 = vector.broadcast %169 : vector<16x1xf32> to vector<16x32xf32>
    %178 = arith.subf %165, %177 : vector<16x32xf32>
    %cst_65 = arith.constant 9.99999974E-6 : f32
    %179 = vector.broadcast %cst_65 : f32 to vector<16x1xf32>
    %180 = arith.addf %176, %179 : vector<16x1xf32>
    %181 = math.rsqrt %180 : vector<16x1xf32>
    %182 = vector.broadcast %181 : vector<16x1xf32> to vector<16x32xf32>
    %183 = arith.mulf %178, %182 : vector<16x32xf32>
    %c0_66 = arith.constant 0 : index
    %c0_67 = arith.constant 0 : index
    %184 = vector.load %arg12[%c0_66, %c0_67] : memref<1x32xf32, #tpu.memory_space<vmem>>, vector<1x32xf32>
    %185 = vector.broadcast %184 : vector<1x32xf32> to vector<16x32xf32>
    %186 = arith.mulf %183, %185 : vector<16x32xf32>
    %c0_68 = arith.constant 0 : index
    %c0_69 = arith.constant 0 : index
    %187 = vector.load %arg13[%c0_68, %c0_69] : memref<1x32xf32, #tpu.memory_space<vmem>>, vector<1x32xf32>
    %188 = vector.broadcast %187 : vector<1x32xf32> to vector<16x32xf32>
    %189 = arith.addf %186, %188 : vector<16x32xf32>
    %190 = vector.broadcast %101 : vector<16x1xf32> to vector<16x32xf32>
    %191 = arith.mulf %189, %190 : vector<16x32xf32>
    %c0_70 = arith.constant 0 : index
    %c0_71 = arith.constant 0 : index
    %192 = vector.load %arg14[%c0_70, %c0_71] : memref<16x32xf32, #tpu.memory_space<vmem>>, vector<16x32xf32>
    tpu.vector_store %arg14[%c0_70, %c0_71], %191 {strides = array<i32>} : memref<16x32xf32, #tpu.memory_space<vmem>>, vector<16x32xf32>,
    return
  }
  func.func @transform_0(%arg0: i32) -> (i32, i32) {
    %c0_i32 = arith.constant 0 : i32
    %c0_i32_0 = arith.constant 0 : i32
    return %arg0, %c0_i32 : i32, i32
  }
  func.func @transform_1(%arg0: i32) -> (i32, i32, i32) {
    %c0_i32 = arith.constant 0 : i32
    %c0_i32_0 = arith.constant 0 : i32
    %c0_i32_1 = arith.constant 0 : i32
    return %arg0, %c0_i32, %c0_i32_0 : i32, i32, i32
  }
  func.func @transform_2(%arg0: i32) -> (i32, i32) {
    %c0_i32 = arith.constant 0 : i32
    %c0_i32_0 = arith.constant 0 : i32
    return %arg0, %c0_i32 : i32, i32
  }
  func.func @transform_3(%arg0: i32) -> (i32, i32) {
    %c0_i32 = arith.constant 0 : i32
    %c0_i32_0 = arith.constant 0 : i32
    %c0_i32_1 = arith.constant 0 : i32
    return %c0_i32, %c0_i32_0 : i32, i32
  }
  func.func @transform_4(%arg0: i32) -> (i32, i32) {
    %c0_i32 = arith.constant 0 : i32
    %c0_i32_0 = arith.constant 0 : i32
    %c0_i32_1 = arith.constant 0 : i32
    return %c0_i32, %c0_i32_0 : i32, i32
  }
  func.func @transform_5(%arg0: i32) -> (i32, i32) {
    %c0_i32 = arith.constant 0 : i32
    %c0_i32_0 = arith.constant 0 : i32
    %c0_i32_1 = arith.constant 0 : i32
    return %c0_i32, %c0_i32_0 : i32, i32
  }
  func.func @transform_6(%arg0: i32) -> (i32, i32) {
    %c0_i32 = arith.constant 0 : i32
    %c0_i32_0 = arith.constant 0 : i32
    %c0_i32_1 = arith.constant 0 : i32
    return %c0_i32, %c0_i32_0 : i32, i32
  }
  func.func @transform_7(%arg0: i32) -> (i32, i32) {
    %c0_i32 = arith.constant 0 : i32
    %c0_i32_0 = arith.constant 0 : i32
    %c0_i32_1 = arith.constant 0 : i32
    return %c0_i32, %c0_i32_0 : i32, i32
  }
  func.func @transform_8(%arg0: i32) -> (i32, i32) {
    %c0_i32 = arith.constant 0 : i32
    %c0_i32_0 = arith.constant 0 : i32
    %c0_i32_1 = arith.constant 0 : i32
    return %c0_i32, %c0_i32_0 : i32, i32
  }
  func.func @transform_9(%arg0: i32) -> (i32, i32) {
    %c0_i32 = arith.constant 0 : i32
    %c0_i32_0 = arith.constant 0 : i32
    %c0_i32_1 = arith.constant 0 : i32
    return %c0_i32, %c0_i32_0 : i32, i32
  }
  func.func @transform_10(%arg0: i32) -> (i32, i32) {
    %c0_i32 = arith.constant 0 : i32
    %c0_i32_0 = arith.constant 0 : i32
    %c0_i32_1 = arith.constant 0 : i32
    return %c0_i32, %c0_i32_0 : i32, i32
  }
  func.func @transform_11(%arg0: i32) -> (i32, i32) {
    %c0_i32 = arith.constant 0 : i32
    %c0_i32_0 = arith.constant 0 : i32
    %c0_i32_1 = arith.constant 0 : i32
    return %c0_i32, %c0_i32_0 : i32, i32
  }
  func.func @transform_12(%arg0: i32) -> (i32, i32) {
    %c0_i32 = arith.constant 0 : i32
    %c0_i32_0 = arith.constant 0 : i32
    %c0_i32_1 = arith.constant 0 : i32
    return %c0_i32, %c0_i32_0 : i32, i32
  }
  func.func @transform_13(%arg0: i32) -> (i32, i32) {
    %c0_i32 = arith.constant 0 : i32
    %c0_i32_0 = arith.constant 0 : i32
    return %arg0, %c0_i32 : i32, i32
  }
}

</mosaic_0001>

<llo_original>
// kernel: decoder_forward.2
$region0: #{decoder_forward.2}
  #allocation0 [shape = 'u32[]', space=smem, size = 0x4, offset = 0x4, fixed_abs, tag = 'smem constant byte address 0x4 - core index']
  #allocation1 [shape = 'u32[144,128]{1,0:T(1,128)}', space=vmem, size = 0x12000, scoped, tag = 'internal scratch']
  %s0 = inlined_call_operand.vmem [shape: f32[16,32], index: 0, kind: input, shape index: {}]
  %s1 = inlined_call_operand.vmem [shape: f32[2,1,8], index: 1, kind: input, shape index: {}]
  %s2 = inlined_call_operand.vmem [shape: f32[16,1], index: 2, kind: input, shape index: {}]
  %s3 = inlined_call_operand.vmem [shape: bf16[32,96], index: 3, kind: input, shape index: {}]
  %s4 = inlined_call_operand.vmem [shape: f32[1,96], index: 4, kind: input, shape index: {}]
  %s5 = inlined_call_operand.vmem [shape: bf16[32,32], index: 5, kind: input, shape index: {}]
  %s6 = inlined_call_operand.vmem [shape: f32[1,32], index: 6, kind: input, shape index: {}]
  %s7 = inlined_call_operand.vmem [shape: bf16[96,64], index: 7, kind: input, shape index: {}]
  %s8 = inlined_call_operand.vmem [shape: f32[1,64], index: 8, kind: input, shape index: {}]
  %s9 = inlined_call_operand.vmem [shape: bf16[192,32], index: 9, kind: input, shape index: {}]
  %s10 = inlined_call_operand.vmem [shape: f32[1,32], index: 10, kind: input, shape index: {}]
  %s11 = inlined_call_operand.vmem [shape: f32[1,32], index: 11, kind: input, shape index: {}]
  %s12 = inlined_call_operand.vmem [shape: f32[1,32], index: 12, kind: input, shape index: {}]
  %s13 = inlined_call_operand.vmem [shape: f32[16,32], index: 13, kind: output, shape index: {}]
  %s14 = sld [smem:[#allocation0]]
  $region62: #{decoder_forward.2} parent=0
    _
  %s16 = ssub.s32 1, %s14
  %s17 = scalar_select 0, %s16, %s14
  // Predicated region
  $region2: #{decoder_forward.2} parent=0 // pred_check
    _
  $region3: #{decoder_forward.2} parent=0 // pred_check_branch
    %19 = sbr.rel (0) target = $region5
  $region4: #{decoder_forward.2} parent=0 // pred_region
    _
  $region5: #{decoder_forward.2} parent=0 // pred_fallthru
    _
  // Predicated region
  $region6: #{decoder_forward.2} parent=0 // pred_check
    _
  $region7: #{decoder_forward.2} parent=0 // pred_check_branch
    %21 = sbr.rel (0) target = $region9
  $region8: #{decoder_forward.2} parent=0 // pred_region
    _
  $region9: #{decoder_forward.2} parent=0 // pred_fallthru
    _
  // Predicated region
  $region10: #{decoder_forward.2} parent=0 // pred_check
    _
  $region11: #{decoder_forward.2} parent=0 // pred_check_branch
    %23 = sbr.rel (0) target = $region13
  $region12: #{decoder_forward.2} parent=0 // pred_region
    _
  $region13: #{decoder_forward.2} parent=0 // pred_fallthru
    _
  // Predicated region
  $region14: #{decoder_forward.2} parent=0 // pred_check
    _
  $region15: #{decoder_forward.2} parent=0 // pred_check_branch
    %25 = sbr.rel (0) target = $region17
  $region16: #{decoder_forward.2} parent=0 // pred_region
    _
  $region17: #{decoder_forward.2} parent=0 // pred_fallthru
    _
  // Predicated region
  $region18: #{decoder_forward.2} parent=0 // pred_check
    _
  $region19: #{decoder_forward.2} parent=0 // pred_check_branch
    %27 = sbr.rel (0) target = $region21
  $region20: #{decoder_forward.2} parent=0 // pred_region
    _
  $region21: #{decoder_forward.2} parent=0 // pred_fallthru
    _
  // Predicated region
  $region22: #{decoder_forward.2} parent=0 // pred_check
    _
  $region23: #{decoder_forward.2} parent=0 // pred_check_branch
    %29 = sbr.rel (0) target = $region25
  $region24: #{decoder_forward.2} parent=0 // pred_region
    _
  $region25: #{decoder_forward.2} parent=0 // pred_fallthru
    _
  // Predicated region
  $region26: #{decoder_forward.2} parent=0 // pred_check
    _
  $region27: #{decoder_forward.2} parent=0 // pred_check_branch
    %31 = sbr.rel (0) target = $region29
  $region28: #{decoder_forward.2} parent=0 // pred_region
    _
  $region29: #{decoder_forward.2} parent=0 // pred_fallthru
    _
  // Predicated region
  $region30: #{decoder_forward.2} parent=0 // pred_check
    _
  $region31: #{decoder_forward.2} parent=0 // pred_check_branch
    %33 = sbr.rel (0) target = $region33
  $region32: #{decoder_forward.2} parent=0 // pred_region
    _
  $region33: #{decoder_forward.2} parent=0 // pred_fallthru
    _
  // Predicated region
  $region34: #{decoder_forward.2} parent=0 // pred_check
    _
  $region35: #{decoder_forward.2} parent=0 // pred_check_branch
    %35 = sbr.rel (0) target = $region37
  $region36: #{decoder_forward.2} parent=0 // pred_region
    _
  $region37: #{decoder_forward.2} parent=0 // pred_fallthru
    _
  // Predicated region
  $region38: #{decoder_forward.2} parent=0 // pred_check
    _
  $region39: #{decoder_forward.2} parent=0 // pred_check_branch
    %37 = sbr.rel (0) target = $region41
  $region40: #{decoder_forward.2} parent=0 // pred_region
    _
  $region41: #{decoder_forward.2} parent=0 // pred_fallthru
    _
  // Predicated region
  $region42: #{decoder_forward.2} parent=0 // pred_check
    _
  $region43: #{decoder_forward.2} parent=0 // pred_check_branch
    %39 = sbr.rel (0) target = $region45
  $region44: #{decoder_forward.2} parent=0 // pred_region
    _
  $region45: #{decoder_forward.2} parent=0 // pred_fallthru
    _
  // Predicated region
  $region46: #{decoder_forward.2} parent=0 // pred_check
    _
  $region47: #{decoder_forward.2} parent=0 // pred_check_branch
    %41 = sbr.rel (0) target = $region49
  $region48: #{decoder_forward.2} parent=0 // pred_region
    _
  $region49: #{decoder_forward.2} parent=0 // pred_fallthru
    _
  // Predicated region
  $region50: #{decoder_forward.2} parent=0 // pred_check
    _
  $region51: #{decoder_forward.2} parent=0 // pred_check_branch
    %43 = sbr.rel (0) target = $region53
  $region52: #{decoder_forward.2} parent=0 // pred_region
    _
  $region53: #{decoder_forward.2} parent=0 // pred_fallthru
    _
  %v45 = vld [vmem:[%s0] sm:$0xff]
  %v46 = vld [vmem:[%s0 + $0x8] sm:$0xff]
  %v47 = vpack.c.bf16 %v46, %v45
  %v48 = vld [vmem:[%s3] sm:$0xf]
  %v49 = vld [vmem:[%s3 + $0x4] sm:$0xf]
  %v50 = vld [vmem:[%s3 + $0x8] sm:$0xf]
  %v51 = vld [vmem:[%s3 + $0xc] sm:$0xf]
  %v52 = vld [vmem:[%s4] sm:$0x1]
  %v54 = vlaneseq
  %v55 = vshrl.u32 %v54, 7
  %v56 = vsub.s32 0, %v55
  %v57 = vrot.slane %v52, %v56
  %v63 = vunpack.c.l.b16 %v48
  %v64 = vunpack.c.l.b16 %v49
  %v65 = vunpack.c.l.b16 %v50
  %v66 = vunpack.c.l.b16 %v51
  %v67 = vpack.c.b16 %v64, %v63
  %v68 = vpack.c.b16 %v66, %v65
  %vm71 = vcmask 261120
  %v73 = vsel %vm71, %v47, 0
  %75 = vmatprep.subr.bf16.mxu0 0
  %76 = vmatpush1.bf16.msra.mxu0 %v67
  %77 = vmatprep.subr.bf16.mxu0 0
  %78 = vmatpush1.bf16.msra.mxu0 %v68
  %79 = vmatprep.subr.bf16.mxu0 0
  %80 = vmatpush1.bf16.msra.mxu0 0
  %81 = vmatprep.subr.bf16.mxu0 0
  %82 = vmatpush1.bf16.msra.mxu0 0
  %83 = vmatprep.subr.bf16.mxu0 0
  %84 = vmatpush1.bf16.msra.mxu0 0
  %85 = vmatprep.subr.bf16.mxu0 0
  %86 = vmatpush1.bf16.msra.mxu0 0
  %87 = vmatprep.subr.bf16.mxu0 0
  %88 = vmatpush1.bf16.msra.mxu0 0
  %89 = vmatprep.subr.bf16.mxu0 0
  %90 = vmatpush1.bf16.msra.mxu0 0
  %91 = vmatprep.subr.bf16.mxu0 0
  %92 = vmatpush1.bf16.msra.mxu0 0
  %93 = vmatprep.subr.bf16.mxu0 0
  %94 = vmatpush1.bf16.msra.mxu0 0
  %95 = vmatprep.subr.bf16.mxu0 0
  %96 = vmatpush1.bf16.msra.mxu0 0
  %97 = vmatprep.subr.bf16.mxu0 0
  %98 = vmatpush1.bf16.msra.mxu0 0
  %99 = vmatprep.subr.bf16.mxu0 0
  %100 = vmatpush1.bf16.msra.mxu0 0
  %101 = vmatprep.subr.bf16.mxu0 0
  %102 = vmatpush1.bf16.msra.mxu0 0
  %103 = vmatprep.subr.bf16.mxu0 0
  %104 = vmatpush1.bf16.msra.mxu0 0
  %105 = vmatprep.subr.bf16.mxu0 0
  %106 = vmatpush1.bf16.msra.mxu0 0
  %107 = vmatprep.mubr.bf16.mxu0 0
  %108 = vmatmul.mubr.bf16.gmra.mrb[0].mxu0 %v73
  %v109 = vpop.f32.mrb[0].mxu0
  %v110 = vadd.f32 %v57, %v109
  %v111 = vpop.f32.mrb[0].mxu0
  %v112 = vpop.f32.mrb[0].mxu0
  %v113 = vadd.f32 %v57, %v112
  %v114 = vpop.f32.mrb[0].mxu0
  %115 = vdwg.mxu0
  %v116 = vpack.c.bf16 %v113, %v110
  %v117 = vld [vmem:[%s1] sm:$0x1]
  %119 = vrot.lane.b32.xlu0 %v116, 96
  %v120 = vpop.permute.xlu0 %119
  %vm121 = vcmask 130048
  %v123 = vsel %vm121, %v116, 0
  %v126 = vsel %vm121, %v120, 0
  %128 = vmatprep.subr.bf16.mxu0 0
  %129 = vmatpush1.bf16.xpose.msra.mxu0 %v126
  %130 = vmatprep.subr.bf16.mxu0 0
  %131 = vmatpush1.bf16.xpose.msra.mxu0 0
  %132 = vmatprep.subr.bf16.mxu0 0
  %133 = vmatpush1.bf16.xpose.msra.mxu0 0
  %134 = vmatprep.subr.bf16.mxu0 0
  %135 = vmatpush1.bf16.xpose.msra.mxu0 0
  %136 = vmatprep.subr.bf16.mxu0 0
  %137 = vmatpush1.bf16.xpose.msra.mxu0 0
  %138 = vmatprep.subr.bf16.mxu0 0
  %139 = vmatpush1.bf16.xpose.msra.mxu0 0
  %140 = vmatprep.subr.bf16.mxu0 0
  %141 = vmatpush1.bf16.xpose.msra.mxu0 0
  %142 = vmatprep.subr.bf16.mxu0 0
  %143 = vmatpush1.bf16.xpose.msra.mxu0 0
  %144 = vmatprep.subr.bf16.mxu0 0
  %145 = vmatpush1.bf16.xpose.msra.mxu0 0
  %146 = vmatprep.subr.bf16.mxu0 0
  %147 = vmatpush1.bf16.xpose.msra.mxu0 0
  %148 = vmatprep.subr.bf16.mxu0 0
  %149 = vmatpush1.bf16.xpose.msra.mxu0 0
  %150 = vmatprep.subr.bf16.mxu0 0
  %151 = vmatpush1.bf16.xpose.msra.mxu0 0
  %152 = vmatprep.subr.bf16.mxu0 0
  %153 = vmatpush1.bf16.xpose.msra.mxu0 0
  %154 = vmatprep.subr.bf16.mxu0 0
  %155 = vmatpush1.bf16.xpose.msra.mxu0 0
  %156 = vmatprep.subr.bf16.mxu0 0
  %157 = vmatpush1.bf16.xpose.msra.mxu0 0
  %158 = vmatprep.subr.bf16.mxu0 0
  %159 = vmatpush1.bf16.xpose.msra.mxu0 0
  %160 = vmatprep.mubr.bf16.mxu0 0
  %161 = vmatmul.mubr.bf16.gmra.mrb[0].mxu0 %v123
  %v162 = vpop.f32.mrb[0].mxu0
  %v163 = vadd.f32 0.0, %v162
  %v164 = vpop.f32.mrb[0].mxu0
  %v165 = vpop.f32.mrb[0].mxu0
  %v166 = vpop.f32.mrb[0].mxu0
  %167 = vdwg.mxu0
  %vm168 = vcmask 64512
  %v169 = vsel %vm168, %v163, -inf
  %170 = vmax.xlane.f32.xlu0 %v169
  %v171 = vpop.xlane.xlu0 %170
  %v172 = vsub.f32 %v163, %v171
  %v173 = vmul.f32 %v172, 1.442695
  %v174 = vpow.pop %v173
  %v176 = vlaneseq
  %v177 = vshrl.u32 %v176, 7
  %v178 = vsub.s32 0, %v177
  %v179 = vrot.slane %v117, %v178
  %v181 = vmul.f32 %v174, %v179
  %v182 = vsel %vm168, %v181, 0.0
  %183 = vadd.xlane.f32.xlu0 %v182
  %v184 = vpop.xlane.xlu0 %183
  %v185 = vadd.f32 %v184, 1e-30
  %v186 = vrcp.pop %v185
  %v187 = vmul.f32 %v181, %v186
  %v188 = vpack.c.bf16 %v187, %v187
  %189 = vrot.lane.b32.xlu0 %v116, 64
  %v190 = vpop.permute.xlu0 %189
  %v192 = vsel %vm168, %v188, 0
  %vm194 = vcmask 1043456
  %v196 = vsel %vm194, %v190, 0
  %198 = vmatprep.subr.bf16.mxu0 0
  %199 = vmatpush1.bf16.msra.mxu0 %v196
  %200 = vmatprep.subr.bf16.mxu0 0
  %201 = vmatpush1.bf16.msra.mxu0 0
  %202 = vmatprep.subr.bf16.mxu0 0
  %203 = vmatpush1.bf16.msra.mxu0 0
  %204 = vmatprep.subr.bf16.mxu0 0
  %205 = vmatpush1.bf16.msra.mxu0 0
  %206 = vmatprep.subr.bf16.mxu0 0
  %207 = vmatpush1.bf16.msra.mxu0 0
  %208 = vmatprep.subr.bf16.mxu0 0
  %209 = vmatpush1.bf16.msra.mxu0 0
  %210 = vmatprep.subr.bf16.mxu0 0
  %211 = vmatpush1.bf16.msra.mxu0 0
  %212 = vmatprep.subr.bf16.mxu0 0
  %213 = vmatpush1.bf16.msra.mxu0 0
  %214 = vmatprep.subr.bf16.mxu0 0
  %215 = vmatpush1.bf16.msra.mxu0 0
  %216 = vmatprep.subr.bf16.mxu0 0
  %217 = vmatpush1.bf16.msra.mxu0 0
  %218 = vmatprep.subr.bf16.mxu0 0
  %219 = vmatpush1.bf16.msra.mxu0 0
  %220 = vmatprep.subr.bf16.mxu0 0
  %221 = vmatpush1.bf16.msra.mxu0 0
  %222 = vmatprep.subr.bf16.mxu0 0
  %223 = vmatpush1.bf16.msra.mxu0 0
  %224 = vmatprep.subr.bf16.mxu0 0
  %225 = vmatpush1.bf16.msra.mxu0 0
  %226 = vmatprep.subr.bf16.mxu0 0
  %227 = vmatpush1.bf16.msra.mxu0 0
  %228 = vmatprep.subr.bf16.mxu0 0
  %229 = vmatpush1.bf16.msra.mxu0 0
  %230 = vmatprep.mubr.bf16.mxu0 0
  %231 = vmatmul.mubr.bf16.gmra.mrb[0].mxu0 %v192
  %v232 = vpop.f32.mrb[0].mxu0
  %v233 = vadd.f32 0.0, %v232
  %v234 = vpop.f32.mrb[0].mxu0
  %v235 = vpop.f32.mrb[0].mxu0
  %v236 = vpop.f32.mrb[0].mxu0
  %237 = vdwg.mxu0
  %238 = vrot.lane.b32.xlu0 %v116, 112
  %v239 = vpop.permute.xlu0 %238
  %240 = vrot.lane.b32.xlu0 %v116, 80
  %v241 = vpop.permute.xlu0 %240
  %v243 = vsel %vm121, %v239, 0
  %v246 = vsel %vm121, %v241, 0
  %248 = vmatprep.subr.bf16.mxu0 0
  %249 = vmatpush1.bf16.xpose.msra.mxu0 %v246
  %250 = vmatprep.subr.bf16.mxu0 0
  %251 = vmatpush1.bf16.xpose.msra.mxu0 0
  %252 = vmatprep.subr.bf16.mxu0 0
  %253 = vmatpush1.bf16.xpose.msra.mxu0 0
  %254 = vmatprep.subr.bf16.mxu0 0
  %255 = vmatpush1.bf16.xpose.msra.mxu0 0
  %256 = vmatprep.subr.bf16.mxu0 0
  %257 = vmatpush1.bf16.xpose.msra.mxu0 0
  %258 = vmatprep.subr.bf16.mxu0 0
  %259 = vmatpush1.bf16.xpose.msra.mxu0 0
  %260 = vmatprep.subr.bf16.mxu0 0
  %261 = vmatpush1.bf16.xpose.msra.mxu0 0
  %262 = vmatprep.subr.bf16.mxu0 0
  %263 = vmatpush1.bf16.xpose.msra.mxu0 0
  %264 = vmatprep.subr.bf16.mxu0 0
  %265 = vmatpush1.bf16.xpose.msra.mxu0 0
  %266 = vmatprep.subr.bf16.mxu0 0
  %267 = vmatpush1.bf16.xpose.msra.mxu0 0
  %268 = vmatprep.subr.bf16.mxu0 0
  %269 = vmatpush1.bf16.xpose.msra.mxu0 0
  %270 = vmatprep.subr.bf16.mxu0 0
  %271 = vmatpush1.bf16.xpose.msra.mxu0 0
  %272 = vmatprep.subr.bf16.mxu0 0
  %273 = vmatpush1.bf16.xpose.msra.mxu0 0
  %274 = vmatprep.subr.bf16.mxu0 0
  %275 = vmatpush1.bf16.xpose.msra.mxu0 0
  %276 = vmatprep.subr.bf16.mxu0 0
  %277 = vmatpush1.bf16.xpose.msra.mxu0 0
  %278 = vmatprep.subr.bf16.mxu0 0
  %279 = vmatpush1.bf16.xpose.msra.mxu0 0
  %280 = vmatprep.mubr.bf16.mxu0 0
  %281 = vmatmul.mubr.bf16.gmra.mrb[0].mxu0 %v243
  %v282 = vpop.f32.mrb[0].mxu0
  %v283 = vadd.f32 0.0, %v282
  %v284 = vpop.f32.mrb[0].mxu0
  %v285 = vpop.f32.mrb[0].mxu0
  %v286 = vpop.f32.mrb[0].mxu0
  %287 = vdwg.mxu0
  %v288 = vsel %vm168, %v283, -inf
  %289 = vmax.xlane.f32.xlu0 %v288
  %v290 = vpop.xlane.xlu0 %289
  %v291 = vsub.f32 %v283, %v290
  %v292 = vmul.f32 %v291, 1.442695
  %v293 = vpow.pop %v292
  %v294 = vmul.f32 %v293, %v179
  %v295 = vsel %vm168, %v294, 0.0
  %296 = vadd.xlane.f32.xlu0 %v295
  %v297 = vpop.xlane.xlu0 %296
  %v298 = vadd.f32 %v297, 1e-30
  %v299 = vrcp.pop %v298
  %v300 = vmul.f32 %v294, %v299
  %v301 = vpack.c.bf16 %v300, %v300
  %302 = vrot.lane.b32.xlu0 %v116, 48
  %v303 = vpop.permute.xlu0 %302
  %v305 = vsel %vm168, %v301, 0
  %v308 = vsel %vm194, %v303, 0
  %310 = vmatprep.subr.bf16.mxu0 0
  %311 = vmatpush1.bf16.msra.mxu0 %v308
  %312 = vmatprep.subr.bf16.mxu0 0
  %313 = vmatpush1.bf16.msra.mxu0 0
  %314 = vmatprep.subr.bf16.mxu0 0
  %315 = vmatpush1.bf16.msra.mxu0 0
  %316 = vmatprep.subr.bf16.mxu0 0
  %317 = vmatpush1.bf16.msra.mxu0 0
  %318 = vmatprep.subr.bf16.mxu0 0
  %319 = vmatpush1.bf16.msra.mxu0 0
  %320 = vmatprep.subr.bf16.mxu0 0
  %321 = vmatpush1.bf16.msra.mxu0 0
  %322 = vmatprep.subr.bf16.mxu0 0
  %323 = vmatpush1.bf16.msra.mxu0 0
  %324 = vmatprep.subr.bf16.mxu0 0
  %325 = vmatpush1.bf16.msra.mxu0 0
  %326 = vmatprep.subr.bf16.mxu0 0
  %327 = vmatpush1.bf16.msra.mxu0 0
  %328 = vmatprep.subr.bf16.mxu0 0
  %329 = vmatpush1.bf16.msra.mxu0 0
  %330 = vmatprep.subr.bf16.mxu0 0
  %331 = vmatpush1.bf16.msra.mxu0 0
  %332 = vmatprep.subr.bf16.mxu0 0
  %333 = vmatpush1.bf16.msra.mxu0 0
  %334 = vmatprep.subr.bf16.mxu0 0
  %335 = vmatpush1.bf16.msra.mxu0 0
  %336 = vmatprep.subr.bf16.mxu0 0
  %337 = vmatpush1.bf16.msra.mxu0 0
  %338 = vmatprep.subr.bf16.mxu0 0
  %339 = vmatpush1.bf16.msra.mxu0 0
  %340 = vmatprep.subr.bf16.mxu0 0
  %341 = vmatpush1.bf16.msra.mxu0 0
  %342 = vmatprep.mubr.bf16.mxu0 0
  %343 = vmatmul.mubr.bf16.gmra.mrb[0].mxu0 %v305
  %v344 = vpop.f32.mrb[0].mxu0
  %v345 = vadd.f32 0.0, %v344
  %v346 = vpop.f32.mrb[0].mxu0
  %v347 = vpop.f32.mrb[0].mxu0
  %v348 = vpop.f32.mrb[0].mxu0
  %349 = vdwg.mxu0
  %351 = vrot.lane.b32.xlu0 %v345, 16
  %v352 = vpop.permute.xlu0 %351
  %v354 = vsel %vm121, %v233, %v352
  %s355 = scalar_lea.vmem %s1, 1
  %v356 = vld [vmem:[%s355] sm:$0x1]
  %v357 = vrot.slane %v116, 4
  %358 = vrot.lane.b32.xlu0 %v357, 96
  %v359 = vpop.permute.xlu0 %358
  %v361 = vsel %vm121, %v357, 0
  %v364 = vsel %vm121, %v359, 0
  %366 = vmatprep.subr.bf16.mxu0 0
  %367 = vmatpush1.bf16.xpose.msra.mxu0 %v364
  %368 = vmatprep.subr.bf16.mxu0 0
  %369 = vmatpush1.bf16.xpose.msra.mxu0 0
  %370 = vmatprep.subr.bf16.mxu0 0
  %371 = vmatpush1.bf16.xpose.msra.mxu0 0
  %372 = vmatprep.subr.bf16.mxu0 0
  %373 = vmatpush1.bf16.xpose.msra.mxu0 0
  %374 = vmatprep.subr.bf16.mxu0 0
  %375 = vmatpush1.bf16.xpose.msra.mxu0 0
  %376 = vmatprep.subr.bf16.mxu0 0
  %377 = vmatpush1.bf16.xpose.msra.mxu0 0
  %378 = vmatprep.subr.bf16.mxu0 0
  %379 = vmatpush1.bf16.xpose.msra.mxu0 0
  %380 = vmatprep.subr.bf16.mxu0 0
  %381 = vmatpush1.bf16.xpose.msra.mxu0 0
  %382 = vmatprep.subr.bf16.mxu0 0
  %383 = vmatpush1.bf16.xpose.msra.mxu0 0
  %384 = vmatprep.subr.bf16.mxu0 0
  %385 = vmatpush1.bf16.xpose.msra.mxu0 0
  %386 = vmatprep.subr.bf16.mxu0 0
  %387 = vmatpush1.bf16.xpose.msra.mxu0 0
  %388 = vmatprep.subr.bf16.mxu0 0
  %389 = vmatpush1.bf16.xpose.msra.mxu0 0
  %390 = vmatprep.subr.bf16.mxu0 0
  %391 = vmatpush1.bf16.xpose.msra.mxu0 0
  %392 = vmatprep.subr.bf16.mxu0 0
  %393 = vmatpush1.bf16.xpose.msra.mxu0 0
  %394 = vmatprep.subr.bf16.mxu0 0
  %395 = vmatpush1.bf16.xpose.msra.mxu0 0
  %396 = vmatprep.subr.bf16.mxu0 0
  %397 = vmatpush1.bf16.xpose.msra.mxu0 0
  %398 = vmatprep.mubr.bf16.mxu0 0
  %399 = vmatmul.mubr.bf16.gmra.mrb[0].mxu0 %v361
  %v400 = vpop.f32.mrb[0].mxu0
  %v401 = vadd.f32 0.0, %v400
  %v402 = vpop.f32.mrb[0].mxu0
  %v403 = vpop.f32.mrb[0].mxu0
  %v404 = vpop.f32.mrb[0].mxu0
  %405 = vdwg.mxu0
  %v406 = vsel %vm168, %v401, -inf
  %407 = vmax.xlane.f32.xlu0 %v406
  %v408 = vpop.xlane.xlu0 %407
  %v409 = vsub.f32 %v401, %v408
  %v410 = vmul.f32 %v409, 1.442695
  %v411 = vpow.pop %v410
  %v413 = vlaneseq
  %v414 = vshrl.u32 %v413, 7
  %v415 = vsub.s32 0, %v414
  %v416 = vrot.slane %v356, %v415
  %v418 = vmul.f32 %v411, %v416
  %v419 = vsel %vm168, %v418, 0.0
  %420 = vadd.xlane.f32.xlu0 %v419
  %v421 = vpop.xlane.xlu0 %420
  %v422 = vadd.f32 %v421, 1e-30
  %v423 = vrcp.pop %v422
  %v424 = vmul.f32 %v418, %v423
  %v425 = vpack.c.bf16 %v424, %v424
  %426 = vrot.lane.b32.xlu0 %v357, 64
  %v427 = vpop.permute.xlu0 %426
  %v429 = vsel %vm168, %v425, 0
  %v432 = vsel %vm194, %v427, 0
  %434 = vmatprep.subr.bf16.mxu0 0
  %435 = vmatpush1.bf16.msra.mxu0 %v432
  %436 = vmatprep.subr.bf16.mxu0 0
  %437 = vmatpush1.bf16.msra.mxu0 0
  %438 = vmatprep.subr.bf16.mxu0 0
  %439 = vmatpush1.bf16.msra.mxu0 0
  %440 = vmatprep.subr.bf16.mxu0 0
  %441 = vmatpush1.bf16.msra.mxu0 0
  %442 = vmatprep.subr.bf16.mxu0 0
  %443 = vmatpush1.bf16.msra.mxu0 0
  %444 = vmatprep.subr.bf16.mxu0 0
  %445 = vmatpush1.bf16.msra.mxu0 0
  %446 = vmatprep.subr.bf16.mxu0 0
  %447 = vmatpush1.bf16.msra.mxu0 0
  %448 = vmatprep.subr.bf16.mxu0 0
  %449 = vmatpush1.bf16.msra.mxu0 0
  %450 = vmatprep.subr.bf16.mxu0 0
  %451 = vmatpush1.bf16.msra.mxu0 0
  %452 = vmatprep.subr.bf16.mxu0 0
  %453 = vmatpush1.bf16.msra.mxu0 0
  %454 = vmatprep.subr.bf16.mxu0 0
  %455 = vmatpush1.bf16.msra.mxu0 0
  %456 = vmatprep.subr.bf16.mxu0 0
  %457 = vmatpush1.bf16.msra.mxu0 0
  %458 = vmatprep.subr.bf16.mxu0 0
  %459 = vmatpush1.bf16.msra.mxu0 0
  %460 = vmatprep.subr.bf16.mxu0 0
  %461 = vmatpush1.bf16.msra.mxu0 0
  %462 = vmatprep.subr.bf16.mxu0 0
  %463 = vmatpush1.bf16.msra.mxu0 0
  %464 = vmatprep.subr.bf16.mxu0 0
  %465 = vmatpush1.bf16.msra.mxu0 0
  %466 = vmatprep.mubr.bf16.mxu0 0
  %467 = vmatmul.mubr.bf16.gmra.mrb[0].mxu0 %v429
  %v468 = vpop.f32.mrb[0].mxu0
  %v469 = vadd.f32 0.0, %v468
  %v470 = vpop.f32.mrb[0].mxu0
  %v471 = vpop.f32.mrb[0].mxu0
  %v472 = vpop.f32.mrb[0].mxu0
  %473 = vdwg.mxu0
  %474 = vrot.lane.b32.xlu0 %v357, 112
  %v475 = vpop.permute.xlu0 %474
  %476 = vrot.lane.b32.xlu0 %v357, 80
  %v477 = vpop.permute.xlu0 %476
  %v479 = vsel %vm121, %v475, 0
  %v482 = vsel %vm121, %v477, 0
  %484 = vmatprep.subr.bf16.mxu0 0
  %485 = vmatpush1.bf16.xpose.msra.mxu0 %v482
  %486 = vmatprep.subr.bf16.mxu0 0
  %487 = vmatpush1.bf16.xpose.msra.mxu0 0
  %488 = vmatprep.subr.bf16.mxu0 0
  %489 = vmatpush1.bf16.xpose.msra.mxu0 0
  %490 = vmatprep.subr.bf16.mxu0 0
  %491 = vmatpush1.bf16.xpose.msra.mxu0 0
  %492 = vmatprep.subr.bf16.mxu0 0
  %493 = vmatpush1.bf16.xpose.msra.mxu0 0
  %494 = vmatprep.subr.bf16.mxu0 0
  %495 = vmatpush1.bf16.xpose.msra.mxu0 0
  %496 = vmatprep.subr.bf16.mxu0 0
  %497 = vmatpush1.bf16.xpose.msra.mxu0 0
  %498 = vmatprep.subr.bf16.mxu0 0
  %499 = vmatpush1.bf16.xpose.msra.mxu0 0
  %500 = vmatprep.subr.bf16.mxu0 0
  %501 = vmatpush1.bf16.xpose.msra.mxu0 0
  %502 = vmatprep.subr.bf16.mxu0 0
  %503 = vmatpush1.bf16.xpose.msra.mxu0 0
  %504 = vmatprep.subr.bf16.mxu0 0
  %505 = vmatpush1.bf16.xpose.msra.mxu0 0
  %506 = vmatprep.subr.bf16.mxu0 0
  %507 = vmatpush1.bf16.xpose.msra.mxu0 0
  %508 = vmatprep.subr.bf16.mxu0 0
  %509 = vmatpush1.bf16.xpose.msra.mxu0 0
  %510 = vmatprep.subr.bf16.mxu0 0
  %511 = vmatpush1.bf16.xpose.msra.mxu0 0
  %512 = vmatprep.subr.bf16.mxu0 0
  %513 = vmatpush1.bf16.xpose.msra.mxu0 0
  %514 = vmatprep.subr.bf16.mxu0 0
  %515 = vmatpush1.bf16.xpose.msra.mxu0 0
  %516 = vmatprep.mubr.bf16.mxu0 0
  %517 = vmatmul.mubr.bf16.gmra.mrb[0].mxu0 %v479
  %v518 = vpop.f32.mrb[0].mxu0
  %v519 = vadd.f32 0.0, %v518
  %v520 = vpop.f32.mrb[0].mxu0
  %v521 = vpop.f32.mrb[0].mxu0
  %v522 = vpop.f32.mrb[0].mxu0
  %523 = vdwg.mxu0
  %v524 = vsel %vm168, %v519, -inf
  %525 = vmax.xlane.f32.xlu0 %v524
  %v526 = vpop.xlane.xlu0 %525
  %v527 = vsub.f32 %v519, %v526
  %v528 = vmul.f32 %v527, 1.442695
  %v529 = vpow.pop %v528
  %v530 = vmul.f32 %v529, %v416
  %v531 = vsel %vm168, %v530, 0.0
  %532 = vadd.xlane.f32.xlu0 %v531
  %v533 = vpop.xlane.xlu0 %532
  %v534 = vadd.f32 %v533, 1e-30
  %v535 = vrcp.pop %v534
  %v536 = vmul.f32 %v530, %v535
  %v537 = vpack.c.bf16 %v536, %v536
  %538 = vrot.lane.b32.xlu0 %v357, 48
  %v539 = vpop.permute.xlu0 %538
  %v541 = vsel %vm168, %v537, 0
  %v544 = vsel %vm194, %v539, 0
  %546 = vmatprep.subr.bf16.mxu0 0
  %547 = vmatpush1.bf16.msra.mxu0 %v544
  %548 = vmatprep.subr.bf16.mxu0 0
  %549 = vmatpush1.bf16.msra.mxu0 0
  %550 = vmatprep.subr.bf16.mxu0 0
  %551 = vmatpush1.bf16.msra.mxu0 0
  %552 = vmatprep.subr.bf16.mxu0 0
  %553 = vmatpush1.bf16.msra.mxu0 0
  %554 = vmatprep.subr.bf16.mxu0 0
  %555 = vmatpush1.bf16.msra.mxu0 0
  %556 = vmatprep.subr.bf16.mxu0 0
  %557 = vmatpush1.bf16.msra.mxu0 0
  %558 = vmatprep.subr.bf16.mxu0 0
  %559 = vmatpush1.bf16.msra.mxu0 0
  %560 = vmatprep.subr.bf16.mxu0 0
  %561 = vmatpush1.bf16.msra.mxu0 0
  %562 = vmatprep.subr.bf16.mxu0 0
  %563 = vmatpush1.bf16.msra.mxu0 0
  %564 = vmatprep.subr.bf16.mxu0 0
  %565 = vmatpush1.bf16.msra.mxu0 0
  %566 = vmatprep.subr.bf16.mxu0 0
  %567 = vmatpush1.bf16.msra.mxu0 0
  %568 = vmatprep.subr.bf16.mxu0 0
  %569 = vmatpush1.bf16.msra.mxu0 0
  %570 = vmatprep.subr.bf16.mxu0 0
  %571 = vmatpush1.bf16.msra.mxu0 0
  %572 = vmatprep.subr.bf16.mxu0 0
  %573 = vmatpush1.bf16.msra.mxu0 0
  %574 = vmatprep.subr.bf16.mxu0 0
  %575 = vmatpush1.bf16.msra.mxu0 0
  %576 = vmatprep.subr.bf16.mxu0 0
  %577 = vmatpush1.bf16.msra.mxu0 0
  %578 = vmatprep.mubr.bf16.mxu0 0
  %579 = vmatmul.mubr.bf16.gmra.mrb[0].mxu0 %v541
  %v580 = vpop.f32.mrb[0].mxu0
  %v581 = vadd.f32 0.0, %v580
  %v582 = vpop.f32.mrb[0].mxu0
  %v583 = vpop.f32.mrb[0].mxu0
  %v584 = vpop.f32.mrb[0].mxu0
  %585 = vdwg.mxu0
  %587 = vrot.lane.b32.xlu0 %v581, 16
  %v588 = vpop.permute.xlu0 %587
  %v590 = vsel %vm121, %v469, %v588
  %v591 = vpack.c.bf16 %v590, %v354
  %v592 = vld [vmem:[%s5] sm:$0xf]
  %v593 = vld [vmem:[%s5 + $0x4] sm:$0xf]
  %v594 = vld [vmem:[%s5 + $0x8] sm:$0xf]
  %v595 = vld [vmem:[%s5 + $0xc] sm:$0xf]
  %v596 = vld [vmem:[%s6] sm:$0x1]
  %v598 = vlaneseq
  %v599 = vshrl.u32 %v598, 7
  %v600 = vsub.s32 0, %v599
  %v601 = vrot.slane %v596, %v600
  %v607 = vunpack.c.l.b16 %v592
  %v608 = vunpack.c.l.b16 %v593
  %v609 = vunpack.c.l.b16 %v594
  %v610 = vunpack.c.l.b16 %v595
  %v611 = vpack.c.b16 %v608, %v607
  %v612 = vpack.c.b16 %v610, %v609
  %v616 = vsel %vm71, %v591, 0
  %618 = vmatprep.subr.bf16.mxu0 0
  %619 = vmatpush1.bf16.msra.mxu0 %v611
  %620 = vmatprep.subr.bf16.mxu0 0
  %621 = vmatpush1.bf16.msra.mxu0 %v612
  %622 = vmatprep.subr.bf16.mxu0 0
  %623 = vmatpush1.bf16.msra.mxu0 0
  %624 = vmatprep.subr.bf16.mxu0 0
  %625 = vmatpush1.bf16.msra.mxu0 0
  %626 = vmatprep.subr.bf16.mxu0 0
  %627 = vmatpush1.bf16.msra.mxu0 0
  %628 = vmatprep.subr.bf16.mxu0 0
  %629 = vmatpush1.bf16.msra.mxu0 0
  %630 = vmatprep.subr.bf16.mxu0 0
  %631 = vmatpush1.bf16.msra.mxu0 0
  %632 = vmatprep.subr.bf16.mxu0 0
  %633 = vmatpush1.bf16.msra.mxu0 0
  %634 = vmatprep.subr.bf16.mxu0 0
  %635 = vmatpush1.bf16.msra.mxu0 0
  %636 = vmatprep.subr.bf16.mxu0 0
  %637 = vmatpush1.bf16.msra.mxu0 0
  %638 = vmatprep.subr.bf16.mxu0 0
  %639 = vmatpush1.bf16.msra.mxu0 0
  %640 = vmatprep.subr.bf16.mxu0 0
  %641 = vmatpush1.bf16.msra.mxu0 0
  %642 = vmatprep.subr.bf16.mxu0 0
  %643 = vmatpush1.bf16.msra.mxu0 0
  %644 = vmatprep.subr.bf16.mxu0 0
  %645 = vmatpush1.bf16.msra.mxu0 0
  %646 = vmatprep.subr.bf16.mxu0 0
  %647 = vmatpush1.bf16.msra.mxu0 0
  %648 = vmatprep.subr.bf16.mxu0 0
  %649 = vmatpush1.bf16.msra.mxu0 0
  %650 = vmatprep.mubr.bf16.mxu0 0
  %651 = vmatmul.mubr.bf16.gmra.mrb[0].mxu0 %v616
  %v652 = vpop.f32.mrb[0].mxu0
  %v653 = vadd.f32 %v601, %v652
  %v654 = vpop.f32.mrb[0].mxu0
  %v655 = vpop.f32.mrb[0].mxu0
  %v656 = vadd.f32 %v601, %v655
  %v657 = vpop.f32.mrb[0].mxu0
  %658 = vdwg.mxu0
  %v659 = vld [vmem:[%s2] sm:$0xff]
  %v660 = vld [vmem:[%s2 + $0x8] sm:$0xff]
  %662 = vset.pattern.permute.xlu0 0
  %663 = vperm.xlu0 %662, %v659
  %v664 = vpop.permute.xlu0 %663
  %667 = vset.pattern.permute.xlu0 0
  %668 = vperm.xlu0 %667, %v660
  %v669 = vpop.permute.xlu0 %668
  %v671 = vmul.f32 %v653, %v664
  %v672 = vmul.f32 %v656, %v669
  %v673 = vlaneseq
  %v674 = vshrl.u32 %v673, 7
  %v675 = vadd.s32 %v674, 8
  %vm676 = vcmp.lt.s32.totalorder %v674, 0
  %v677 = vsub.s32 0, %v674
  %v678 = vsel %vm676, %v677, %v674
  %v679 = vshrl.u32 %v678, 3
  %v680 = vand.u32 %v678, 7
  %v681 = vsub.s32 0, %v680
  %v682 = vsel %vm676, %v681, %v680
  %vm683 = vcmp.lt.s32.totalorder %v675, 0
  %v684 = vsub.s32 0, %v675
  %v685 = vsel %vm683, %v684, %v675
  %v686 = vshrl.u32 %v685, 3
  %v687 = vand.u32 %v685, 7
  %v688 = vsub.s32 0, %v687
  %v689 = vsel %vm683, %v688, %v687
  %vm690 = vcmp.ne.s32.totalorder %v682, 0
  %vm691 = vcmp.ne.s32.totalorder %v689, 0
  %vm692 = vcmp.lt.s32.totalorder %v682, 0
  %vm693 = vcmp.lt.s32.totalorder %v689, 0
  %vm694 = vmand %vm692, %vm690
  %vm695 = vmand %vm693, %vm691
  %v696 = vadd.s32 %v682, 8
  %v697 = vadd.s32 %v689, 8
  %v698 = vsel %vm694, %v696, %v682
  %v699 = vsel %vm695, %v697, %v689
  %v700 = vrot.slane %v671, 7
  %v701 = vrot.slane %v672, 7
  %vm702 = vcmp.lt.s32.totalorder %v674, 1
  %v703 = vsel %vm702, %v700, %v701
  %v704 = vsel %vm702, %v701, %v700
  %vm705 = vcmp.ge.s32.totalorder %v698, 1
  %vm706 = vcmp.ge.s32.totalorder %v699, 1
  %v707 = vsel %vm705, 1, 0
  %v708 = vsel %vm706, 1, 0
  %vm709 = vcmp.eq.s32.totalorder %v707, 1
  %vm710 = vcmp.eq.s32.totalorder %v708, 1
  %v711 = vsel %vm709, %v704, 0.0
  %v712 = vsel %vm710, %v703, 0.0
  %v713 = vrot.slane %v671, 1
  %v714 = vrot.slane %v672, 1
  %vm715 = vcmp.lt.s32.totalorder %v674, 7
  %v716 = vsel %vm715, %v713, %v714
  %v717 = vsel %vm715, %v714, %v713
  %vm718 = vcmp.lt.s32.totalorder %v698, 7
  %vm719 = vcmp.lt.s32.totalorder %v699, 7
  %v720 = vsel %vm718, 1, 0
  %v721 = vsel %vm719, 1, 0
  %vm722 = vcmp.eq.s32.totalorder %v720, 1
  %vm723 = vcmp.eq.s32.totalorder %v721, 1
  %v724 = vsel %vm722, %v716, 0.0
  %v725 = vsel %vm723, %v717, 0.0
  %728 = vrot.lane.b32.xlu0 %v671, 32
  %v729 = vpop.permute.xlu0 %728
  %730 = vrot.lane.b32.xlu0 %v672, 32
  %v731 = vpop.permute.xlu0 %730
  %736 = vrot.lane.b32.xlu0 %v724, 64
  %v737 = vpop.permute.xlu0 %736
  %738 = vrot.lane.b32.xlu0 %v725, 64
  %v739 = vpop.permute.xlu0 %738
  %v742 = vsel %vm71, %v711, %v729
  %v743 = vsel %vm71, %v712, %v731
  %vm744 = vcmask 523264
  %v745 = vsel %vm744, %v742, %v737
  %v746 = vsel %vm744, %v743, %v739
  %v747 = vpack.c.bf16 %v746, %v745
  %v748 = vld [vmem:[%s7] sm:$0xf]
  %v749 = vld [vmem:[%s7 + $0x4] sm:$0xf]
  %v750 = vld [vmem:[%s7 + $0x8] sm:$0xf]
  %v751 = vld [vmem:[%s7 + $0xc] sm:$0xf]
  %v752 = vld [vmem:[%s7 + $0x10] sm:$0xf]
  %v753 = vld [vmem:[%s7 + $0x14] sm:$0xf]
  %v754 = vld [vmem:[%s7 + $0x18] sm:$0xf]
  %v755 = vld [vmem:[%s7 + $0x1c] sm:$0xf]
  %v756 = vld [vmem:[%s7 + $0x20] sm:$0xf]
  %v757 = vld [vmem:[%s7 + $0x24] sm:$0xf]
  %v758 = vld [vmem:[%s7 + $0x28] sm:$0xf]
  %v759 = vld [vmem:[%s7 + $0x2c] sm:$0xf]
  %v760 = vld [vmem:[%s8] sm:$0x1]
  %v762 = vlaneseq
  %v763 = vshrl.u32 %v762, 7
  %v764 = vsub.s32 0, %v763
  %v765 = vrot.slane %v760, %v764
  %v779 = vunpack.c.l.b16 %v748
  %v780 = vunpack.c.l.b16 %v749
  %v781 = vunpack.c.l.b16 %v750
  %v782 = vunpack.c.l.b16 %v751
  %v783 = vunpack.c.l.b16 %v752
  %v784 = vunpack.c.l.b16 %v753
  %v785 = vunpack.c.l.b16 %v754
  %v786 = vunpack.c.l.b16 %v755
  %v787 = vunpack.c.l.b16 %v756
  %v788 = vunpack.c.l.b16 %v757
  %v789 = vunpack.c.l.b16 %v758
  %v790 = vunpack.c.l.b16 %v759
  %v791 = vpack.c.b16 %v780, %v779
  %v792 = vpack.c.b16 %v782, %v781
  %v793 = vpack.c.b16 %v784, %v783
  %v794 = vpack.c.b16 %v786, %v785
  %v795 = vpack.c.b16 %v788, %v787
  %v796 = vpack.c.b16 %v790, %v789
  %vm803 = vcmask 785408
  %v805 = vsel %vm803, %v747, 0
  %807 = vmatprep.subr.bf16.mxu0 0
  %808 = vmatpush1.bf16.msra.mxu0 %v791
  %809 = vmatprep.subr.bf16.mxu0 0
  %810 = vmatpush1.bf16.msra.mxu0 %v792
  %811 = vmatprep.subr.bf16.mxu0 0
  %812 = vmatpush1.bf16.msra.mxu0 %v793
  %813 = vmatprep.subr.bf16.mxu0 0
  %814 = vmatpush1.bf16.msra.mxu0 %v794
  %815 = vmatprep.subr.bf16.mxu0 0
  %816 = vmatpush1.bf16.msra.mxu0 %v795
  %817 = vmatprep.subr.bf16.mxu0 0
  %818 = vmatpush1.bf16.msra.mxu0 %v796
  %819 = vmatprep.subr.bf16.mxu0 0
  %820 = vmatpush1.bf16.msra.mxu0 0
  %821 = vmatprep.subr.bf16.mxu0 0
  %822 = vmatpush1.bf16.msra.mxu0 0
  %823 = vmatprep.subr.bf16.mxu0 0
  %824 = vmatpush1.bf16.msra.mxu0 0
  %825 = vmatprep.subr.bf16.mxu0 0
  %826 = vmatpush1.bf16.msra.mxu0 0
  %827 = vmatprep.subr.bf16.mxu0 0
  %828 = vmatpush1.bf16.msra.mxu0 0
  %829 = vmatprep.subr.bf16.mxu0 0
  %830 = vmatpush1.bf16.msra.mxu0 0
  %831 = vmatprep.subr.bf16.mxu0 0
  %832 = vmatpush1.bf16.msra.mxu0 0
  %833 = vmatprep.subr.bf16.mxu0 0
  %834 = vmatpush1.bf16.msra.mxu0 0
  %835 = vmatprep.subr.bf16.mxu0 0
  %836 = vmatpush1.bf16.msra.mxu0 0
  %837 = vmatprep.subr.bf16.mxu0 0
  %838 = vmatpush1.bf16.msra.mxu0 0
  %839 = vmatprep.mubr.bf16.mxu0 0
  %840 = vmatmul.mubr.bf16.gmra.mrb[0].mxu0 %v805
  %v841 = vpop.f32.mrb[0].mxu0
  %v842 = vadd.f32 %v765, %v841
  %v843 = vpop.f32.mrb[0].mxu0
  %v844 = vpop.f32.mrb[0].mxu0
  %v845 = vadd.f32 %v765, %v844
  %v846 = vpop.f32.mrb[0].mxu0
  %847 = vdwg.mxu0
  %v848 = vmax.f32 %v842, 0.0
  %v849 = vmax.f32 %v845, 0.0
  %v850 = vrot.slane %v848, 7
  %v851 = vrot.slane %v849, 7
  %v852 = vsel %vm702, %v850, %v851
  %v853 = vsel %vm702, %v851, %v850
  %v854 = vsel %vm709, %v853, 0.0
  %v855 = vsel %vm710, %v852, 0.0
  %v856 = vrot.slane %v848, 1
  %v857 = vrot.slane %v849, 1
  %v858 = vsel %vm715, %v856, %v857
  %v859 = vsel %vm715, %v857, %v856
  %v860 = vsel %vm722, %v858, 0.0
  %v861 = vsel %vm723, %v859, 0.0
  %864 = vrot.lane.b32.xlu0 %v848, 64
  %v865 = vpop.permute.xlu0 %864
  %866 = vrot.lane.b32.xlu0 %v849, 64
  %v867 = vpop.permute.xlu0 %866
  %v870 = vsel %vm744, %v854, %v865
  %v871 = vsel %vm744, %v855, %v867
  %v872 = vpack.c.bf16 %v871, %v870
  %v873 = vpack.c.bf16 %v861, %v860
  %v874 = vld [vmem:[%s9] sm:$0xf]
  %v875 = vld [vmem:[%s9 + $0x4] sm:$0xf]
  %v876 = vld [vmem:[%s9 + $0x8] sm:$0xf]
  %v877 = vld [vmem:[%s9 + $0xc] sm:$0xf]
  %v878 = vld [vmem:[%s9 + $0x10] sm:$0xf]
  %v879 = vld [vmem:[%s9 + $0x14] sm:$0xf]
  %v880 = vld [vmem:[%s9 + $0x18] sm:$0xf]
  %v881 = vld [vmem:[%s9 + $0x1c] sm:$0xf]
  %v882 = vld [vmem:[%s9 + $0x20] sm:$0xf]
  %v883 = vld [vmem:[%s9 + $0x24] sm:$0xf]
  %v884 = vld [vmem:[%s9 + $0x28] sm:$0xf]
  %v885 = vld [vmem:[%s9 + $0x2c] sm:$0xf]
  %v886 = vld [vmem:[%s9 + $0x30] sm:$0xf]
  %v887 = vld [vmem:[%s9 + $0x34] sm:$0xf]
  %v888 = vld [vmem:[%s9 + $0x38] sm:$0xf]
  %v889 = vld [vmem:[%s9 + $0x3c] sm:$0xf]
  %v890 = vld [vmem:[%s9 + $0x40] sm:$0xf]
  %v891 = vld [vmem:[%s9 + $0x44] sm:$0xf]
  %v892 = vld [vmem:[%s9 + $0x48] sm:$0xf]
  %v893 = vld [vmem:[%s9 + $0x4c] sm:$0xf]
  %v894 = vld [vmem:[%s9 + $0x50] sm:$0xf]
  %v895 = vld [vmem:[%s9 + $0x54] sm:$0xf]
  %v896 = vld [vmem:[%s9 + $0x58] sm:$0xf]
  %v897 = vld [vmem:[%s9 + $0x5c] sm:$0xf]
  %v898 = vld [vmem:[%s10] sm:$0x1]
  %v900 = vlaneseq
  %v901 = vshrl.u32 %v900, 7
  %v902 = vsub.s32 0, %v901
  %v903 = vrot.slane %v898, %v902
  %v929 = vunpack.c.l.b16 %v874
  %v930 = vunpack.c.l.b16 %v875
  %v931 = vunpack.c.l.b16 %v876
  %v932 = vunpack.c.l.b16 %v877
  %v933 = vunpack.c.l.b16 %v878
  %v934 = vunpack.c.l.b16 %v879
  %v935 = vunpack.c.l.b16 %v880
  %v936 = vunpack.c.l.b16 %v881
  %v937 = vunpack.c.l.b16 %v882
  %v938 = vunpack.c.l.b16 %v883
  %v939 = vunpack.c.l.b16 %v884
  %v940 = vunpack.c.l.b16 %v885
  %v941 = vunpack.c.l.b16 %v886
  %v942 = vunpack.c.l.b16 %v887
  %v943 = vunpack.c.l.b16 %v888
  %v944 = vunpack.c.l.b16 %v889
  %v945 = vunpack.c.l.b16 %v890
  %v946 = vunpack.c.l.b16 %v891
  %v947 = vunpack.c.l.b16 %v892
  %v948 = vunpack.c.l.b16 %v893
  %v949 = vunpack.c.l.b16 %v894
  %v950 = vunpack.c.l.b16 %v895
  %v951 = vunpack.c.l.b16 %v896
  %v952 = vunpack.c.l.b16 %v897
  %v953 = vpack.c.b16 %v930, %v929
  %v954 = vpack.c.b16 %v932, %v931
  %v955 = vpack.c.b16 %v934, %v933
  %v956 = vpack.c.b16 %v936, %v935
  %v957 = vpack.c.b16 %v938, %v937
  %v958 = vpack.c.b16 %v940, %v939
  %v959 = vpack.c.b16 %v942, %v941
  %v960 = vpack.c.b16 %v944, %v943
  %v961 = vpack.c.b16 %v946, %v945
  %v962 = vpack.c.b16 %v948, %v947
  %v963 = vpack.c.b16 %v950, %v949
  %v964 = vpack.c.b16 %v952, %v951
  %v978 = vsel %vm744, %v873, 0
  %980 = vmatprep.subr.bf16.mxu0 0
  %981 = vmatpush1.bf16.msra.mxu0 %v953
  %982 = vmatprep.subr.bf16.mxu0 0
  %983 = vmatpush1.bf16.msra.mxu0 %v954
  %984 = vmatprep.subr.bf16.mxu0 0
  %985 = vmatpush1.bf16.msra.mxu0 %v955
  %986 = vmatprep.subr.bf16.mxu0 0
  %987 = vmatpush1.bf16.msra.mxu0 %v956
  %988 = vmatprep.subr.bf16.mxu0 0
  %989 = vmatpush1.bf16.msra.mxu0 %v957
  %990 = vmatprep.subr.bf16.mxu0 0
  %991 = vmatpush1.bf16.msra.mxu0 %v958
  %992 = vmatprep.subr.bf16.mxu0 0
  %993 = vmatpush1.bf16.msra.mxu0 %v959
  %994 = vmatprep.subr.bf16.mxu0 0
  %995 = vmatpush1.bf16.msra.mxu0 %v960
  %996 = vmatprep.subr.bf16.mxu0 0
  %997 = vmatpush1.bf16.msra.mxu0 %v961
  %998 = vmatprep.subr.bf16.mxu0 0
  %999 = vmatpush1.bf16.msra.mxu0 %v962
  %1000 = vmatprep.subr.bf16.mxu0 0
  %1001 = vmatpush1.bf16.msra.mxu0 %v963
  %1002 = vmatprep.subr.bf16.mxu0 0
  %1003 = vmatpush1.bf16.msra.mxu0 %v964
  %1004 = vmatprep.subr.bf16.mxu0 0
  %1005 = vmatpush1.bf16.msra.mxu0 0
  %1006 = vmatprep.subr.bf16.mxu0 0
  %1007 = vmatpush1.bf16.msra.mxu0 0
  %1008 = vmatprep.subr.bf16.mxu0 0
  %1009 = vmatpush1.bf16.msra.mxu0 0
  %1010 = vmatprep.subr.bf16.mxu0 0
  %1011 = vmatpush1.bf16.msra.mxu0 0
  %1012 = vmatprep.mubr.bf16.mxu0 %v978
  %1013 = vmatmul.mubr.bf16.gmra.mrb[0].mxu0 %v872
  %v1014 = vpop.f32.mrb[0].mxu0
  %v1015 = vadd.f32 %v903, %v1014
  %v1016 = vpop.f32.mrb[0].mxu0
  %v1017 = vpop.f32.mrb[0].mxu0
  %v1018 = vadd.f32 %v903, %v1017
  %v1019 = vpop.f32.mrb[0].mxu0
  %1020 = vdwg.mxu0
  %v1021 = vadd.f32 %v1015, %v671
  %v1022 = vadd.f32 %v1018, %v672
  %v1023 = vsel %vm71, %v1021, 0.0
  %1024 = vadd.xlane.f32.xlu0 %v1023
  %v1025 = vpop.xlane.xlu0 %1024
  %v1026 = vsel %vm71, %v1022, 0.0
  %1027 = vadd.xlane.f32.xlu0 %v1026
  %v1028 = vpop.xlane.xlu0 %1027
  %v1029 = vrcp.pop 32.0
  %v1030 = vmul.f32 %v1025, %v1029
  %v1031 = vmul.f32 %v1028, %v1029
  %v1032 = vsub.f32 %v1021, %v1030
  %v1033 = vsub.f32 %v1022, %v1031
  %v1034 = vmul.f32 %v1032, %v1032
  %v1035 = vmul.f32 %v1033, %v1033
  %v1036 = vsel %vm71, %v1034, 0.0
  %1037 = vadd.xlane.f32.xlu0 %v1036
  %v1038 = vpop.xlane.xlu0 %1037
  %v1039 = vsel %vm71, %v1035, 0.0
  %1040 = vadd.xlane.f32.xlu0 %v1039
  %v1041 = vpop.xlane.xlu0 %1040
  %v1042 = vmul.f32 %v1038, %v1029
  %v1043 = vmul.f32 %v1041, %v1029
  %v1044 = vadd.f32 %v1042, 1e-05
  %v1045 = vadd.f32 %v1043, 1e-05
  %v1046 = vrsqrt.pop %v1044
  %v1047 = vrsqrt.pop %v1045
  %v1048 = vmul.f32 %v1032, %v1046
  %v1049 = vmul.f32 %v1033, %v1047
  %v1050 = vld [vmem:[%s11] sm:$0x1]
  %v1052 = vlaneseq
  %v1053 = vshrl.u32 %v1052, 7
  %v1054 = vsub.s32 0, %v1053
  %v1055 = vrot.slane %v1050, %v1054
  %v1057 = vmul.f32 %v1048, %v1055
  %v1058 = vmul.f32 %v1049, %v1055
  %v1059 = vld [vmem:[%s12] sm:$0x1]
  %v1061 = vlaneseq
  %v1062 = vshrl.u32 %v1061, 7
  %v1063 = vsub.s32 0, %v1062
  %v1064 = vrot.slane %v1059, %v1063
  %v1066 = vadd.f32 %v1057, %v1064
  %v1067 = vadd.f32 %v1058, %v1064
  %v1068 = vmul.f32 %v1066, %v664
  %v1069 = vmul.f32 %v1067, %v669
  %1070 = vst.msk [vmem:[%s13] sm:$0xff] %vm71, %v1068
  %1071 = vst.msk [vmem:[%s13 + $0x8] sm:$0xff] %vm71, %v1069
  // Predicated region
  $region54: #{decoder_forward.2} parent=0 // pred_check
    _
  $region55: #{decoder_forward.2} parent=0 // pred_check_branch
    %1073 = sbr.rel (0) target = $region57
  $region56: #{decoder_forward.2} parent=0 // pred_region
    _
  $region57: #{decoder_forward.2} parent=0 // pred_fallthru
    _
  // Predicated region
  $region58: #{decoder_forward.2} parent=0 // pred_check
    _
  $region59: #{decoder_forward.2} parent=0 // pred_check_branch
    %1075 = sbr.rel (0) target = $region61
  $region60: #{decoder_forward.2} parent=0 // pred_region
    _
  $region61: #{decoder_forward.2} parent=0 // pred_fallthru
    _

// kernel: decoder_forward.3
$region0: #{decoder_forward.3}
  #allocation0 [shape = 'u32[]', space=smem, size = 0x4, offset = 0x4, fixed_abs, tag = 'smem constant byte address 0x4 - core index']
  #allocation1 [shape = 'u32[144,128]{1,0:T(1,128)}', space=vmem, size = 0x12000, scoped, tag = 'internal scratch']
  %s0 = inlined_call_operand.vmem [shape: f32[16,32], index: 0, kind: input, shape index: {}]
  %s1 = inlined_call_operand.vmem [shape: f32[2,1,8], index: 1, kind: input, shape index: {}]
  %s2 = inlined_call_operand.vmem [shape: f32[16,1], index: 2, kind: input, shape index: {}]
  %s3 = inlined_call_operand.vmem [shape: bf16[32,96], index: 3, kind: input, shape index: {}]
  %s4 = inlined_call_operand.vmem [shape: f32[1,96], index: 4, kind: input, shape index: {}]
  %s5 = inlined_call_operand.vmem [shape: bf16[32,32], index: 5, kind: input, shape index: {}]
  %s6 = inlined_call_operand.vmem [shape: f32[1,32], index: 6, kind: input, shape index: {}]
  %s7 = inlined_call_operand.vmem [shape: bf16[96,64], index: 7, kind: input, shape index: {}]
  %s8 = inlined_call_operand.vmem [shape: f32[1,64], index: 8, kind: input, shape index: {}]
  %s9 = inlined_call_operand.vmem [shape: bf16[192,32], index: 9, kind: input, shape index: {}]
  %s10 = inlined_call_operand.vmem [shape: f32[1,32], index: 10, kind: input, shape index: {}]
  %s11 = inlined_call_operand.vmem [shape: f32[1,32], index: 11, kind: input, shape index: {}]
  %s12 = inlined_call_operand.vmem [shape: f32[1,32], index: 12, kind: input, shape index: {}]
  %s13 = inlined_call_operand.hbm [shape: f32[16,32], index: 13, kind: output, shape index: {}]
  %s14 = sld [smem:[#allocation0]]
  $region62: #{decoder_forward.3} parent=0
    _
  %s16 = ssub.s32 1, %s14
  %s17 = scalar_select 0, %s16, %s14
  $region1: #{decoder_forward.3} parent=0
    #allocation2 [shape = 'u8[8192]{0}', space=vmem, size = 0x2000, scoped, tag = 'output window, operand 0, single buffered']
    #allocation3 [shape = 's32[1]{0}', space=sflag, size = 0x4, scoped, tag = 'scoped memory for decoder_forward.3']
    %18 = vsyncpa [#allocation3], 0
    // Predicated region
    $region2: #{decoder_forward.3} parent=1 // pred_check
      _
    $region3: #{decoder_forward.3} parent=1 // pred_check_branch
      %20 = sbr.rel (0) target = $region5
    $region4: #{decoder_forward.3} parent=1 // pred_region
      _
    $region5: #{decoder_forward.3} parent=1 // pred_fallthru
      _
    // Predicated region
    $region6: #{decoder_forward.3} parent=1 // pred_check
      _
    $region7: #{decoder_forward.3} parent=1 // pred_check_branch
      %22 = sbr.rel (0) target = $region9
    $region8: #{decoder_forward.3} parent=1 // pred_region
      _
    $region9: #{decoder_forward.3} parent=1 // pred_fallthru
      _
    // Predicated region
    $region10: #{decoder_forward.3} parent=1 // pred_check
      _
    $region11: #{decoder_forward.3} parent=1 // pred_check_branch
      %24 = sbr.rel (0) target = $region13
    $region12: #{decoder_forward.3} parent=1 // pred_region
      _
    $region13: #{decoder_forward.3} parent=1 // pred_fallthru
      _
    // Predicated region
    $region14: #{decoder_forward.3} parent=1 // pred_check
      _
    $region15: #{decoder_forward.3} parent=1 // pred_check_branch
      %26 = sbr.rel (0) target = $region17
    $region16: #{decoder_forward.3} parent=1 // pred_region
      _
    $region17: #{decoder_forward.3} parent=1 // pred_fallthru
      _
    // Predicated region
    $region18: #{decoder_forward.3} parent=1 // pred_check
      _
    $region19: #{decoder_forward.3} parent=1 // pred_check_branch
      %28 = sbr.rel (0) target = $region21
    $region20: #{decoder_forward.3} parent=1 // pred_region
      _
    $region21: #{decoder_forward.3} parent=1 // pred_fallthru
      _
    // Predicated region
    $region22: #{decoder_forward.3} parent=1 // pred_check
      _
    $region23: #{decoder_forward.3} parent=1 // pred_check_branch
      %30 = sbr.rel (0) target = $region25
    $region24: #{decoder_forward.3} parent=1 // pred_region
      _
    $region25: #{decoder_forward.3} parent=1 // pred_fallthru
      _
    // Predicated region
    $region26: #{decoder_forward.3} parent=1 // pred_check
      _
    $region27: #{decoder_forward.3} parent=1 // pred_check_branch
      %32 = sbr.rel (0) target = $region29
    $region28: #{decoder_forward.3} parent=1 // pred_region
      _
    $region29: #{decoder_forward.3} parent=1 // pred_fallthru
      _
    // Predicated region
    $region30: #{decoder_forward.3} parent=1 // pred_check
      _
    $region31: #{decoder_forward.3} parent=1 // pred_check_branch
      %34 = sbr.rel (0) target = $region33
    $region32: #{decoder_forward.3} parent=1 // pred_region
      _
    $region33: #{decoder_forward.3} parent=1 // pred_fallthru
      _
    // Predicated region
    $region34: #{decoder_forward.3} parent=1 // pred_check
      _
    $region35: #{decoder_forward.3} parent=1 // pred_check_branch
      %36 = sbr.rel (0) target = $region37
    $region36: #{decoder_forward.3} parent=1 // pred_region
      _
    $region37: #{decoder_forward.3} parent=1 // pred_fallthru
      _
    // Predicated region
    $region38: #{decoder_forward.3} parent=1 // pred_check
      _
    $region39: #{decoder_forward.3} parent=1 // pred_check_branch
      %38 = sbr.rel (0) target = $region41
    $region40: #{decoder_forward.3} parent=1 // pred_region
      _
    $region41: #{decoder_forward.3} parent=1 // pred_fallthru
      _
    // Predicated region
    $region42: #{decoder_forward.3} parent=1 // pred_check
      _
    $region43: #{decoder_forward.3} parent=1 // pred_check_branch
      %40 = sbr.rel (0) target = $region45
    $region44: #{decoder_forward.3} parent=1 // pred_region
      _
    $region45: #{decoder_forward.3} parent=1 // pred_fallthru
      _
    // Predicated region
    $region46: #{decoder_forward.3} parent=1 // pred_check
      _
    $region47: #{decoder_forward.3} parent=1 // pred_check_branch
      %42 = sbr.rel (0) target = $region49
    $region48: #{decoder_forward.3} parent=1 // pred_region
      _
    $region49: #{decoder_forward.3} parent=1 // pred_fallthru
      _
    // Predicated region
    $region50: #{decoder_forward.3} parent=1 // pred_check
      _
    $region51: #{decoder_forward.3} parent=1 // pred_check_branch
      %44 = sbr.rel (0) target = $region53
    $region52: #{decoder_forward.3} parent=1 // pred_region
      _
    $region53: #{decoder_forward.3} parent=1 // pred_fallthru
      _
    %v46 = vld [vmem:[%s0] sm:$0xff]
    %v47 = vld [vmem:[%s0 + $0x8] sm:$0xff]
    %v48 = vpack.c.bf16 %v47, %v46
    %v49 = vld [vmem:[%s3] sm:$0xf]
    %v50 = vld [vmem:[%s3 + $0x4] sm:$0xf]
    %v51 = vld [vmem:[%s3 + $0x8] sm:$0xf]
    %v52 = vld [vmem:[%s3 + $0xc] sm:$0xf]
    %v53 = vld [vmem:[%s4] sm:$0x1]
    %v55 = vlaneseq
    %v56 = vshrl.u32 %v55, 7
    %v57 = vsub.s32 0, %v56
    %v58 = vrot.slane %v53, %v57
    %v64 = vunpack.c.l.b16 %v49
    %v65 = vunpack.c.l.b16 %v50
    %v66 = vunpack.c.l.b16 %v51
    %v67 = vunpack.c.l.b16 %v52
    %v68 = vpack.c.b16 %v65, %v64
    %v69 = vpack.c.b16 %v67, %v66
    %vm72 = vcmask 261120
    %v74 = vsel %vm72, %v48, 0
    %76 = vmatprep.subr.bf16.mxu0 0
    %77 = vmatpush1.bf16.msra.mxu0 %v68
    %78 = vmatprep.subr.bf16.mxu0 0
    %79 = vmatpush1.bf16.msra.mxu0 %v69
    %80 = vmatprep.subr.bf16.mxu0 0
    %81 = vmatpush1.bf16.msra.mxu0 0
    %82 = vmatprep.subr.bf16.mxu0 0
    %83 = vmatpush1.bf16.msra.mxu0 0
    %84 = vmatprep.subr.bf16.mxu0 0
    %85 = vmatpush1.bf16.msra.mxu0 0
    %86 = vmatprep.subr.bf16.mxu0 0
    %87 = vmatpush1.bf16.msra.mxu0 0
    %88 = vmatprep.subr.bf16.mxu0 0
    %89 = vmatpush1.bf16.msra.mxu0 0
    %90 = vmatprep.subr.bf16.mxu0 0
    %91 = vmatpush1.bf16.msra.mxu0 0
    %92 = vmatprep.subr.bf16.mxu0 0
    %93 = vmatpush1.bf16.msra.mxu0 0
    %94 = vmatprep.subr.bf16.mxu0 0
    %95 = vmatpush1.bf16.msra.mxu0 0
    %96 = vmatprep.subr.bf16.mxu0 0
    %97 = vmatpush1.bf16.msra.mxu0 0
    %98 = vmatprep.subr.bf16.mxu0 0
    %99 = vmatpush1.bf16.msra.mxu0 0
    %100 = vmatprep.subr.bf16.mxu0 0
    %101 = vmatpush1.bf16.msra.mxu0 0
    %102 = vmatprep.subr.bf16.mxu0 0
    %103 = vmatpush1.bf16.msra.mxu0 0
    %104 = vmatprep.subr.bf16.mxu0 0
    %105 = vmatpush1.bf16.msra.mxu0 0
    %106 = vmatprep.subr.bf16.mxu0 0
    %107 = vmatpush1.bf16.msra.mxu0 0
    %108 = vmatprep.mubr.bf16.mxu0 0
    %109 = vmatmul.mubr.bf16.gmra.mrb[0].mxu0 %v74
    %v110 = vpop.f32.mrb[0].mxu0
    %v111 = vadd.f32 %v58, %v110
    %v112 = vpop.f32.mrb[0].mxu0
    %v113 = vpop.f32.mrb[0].mxu0
    %v114 = vadd.f32 %v58, %v113
    %v115 = vpop.f32.mrb[0].mxu0
    %116 = vdwg.mxu0
    %v117 = vpack.c.bf16 %v114, %v111
    %v118 = vld [vmem:[%s1] sm:$0x1]
    %120 = vrot.lane.b32.xlu0 %v117, 96
    %v121 = vpop.permute.xlu0 %120
    %vm122 = vcmask 130048
    %v124 = vsel %vm122, %v117, 0
    %v127 = vsel %vm122, %v121, 0
    %129 = vmatprep.subr.bf16.mxu0 0
    %130 = vmatpush1.bf16.xpose.msra.mxu0 %v127
    %131 = vmatprep.subr.bf16.mxu0 0
    %132 = vmatpush1.bf16.xpose.msra.mxu0 0
    %133 = vmatprep.subr.bf16.mxu0 0
    %134 = vmatpush1.bf16.xpose.msra.mxu0 0
    %135 = vmatprep.subr.bf16.mxu0 0
    %136 = vmatpush1.bf16.xpose.msra.mxu0 0
    %137 = vmatprep.subr.bf16.mxu0 0
    %138 = vmatpush1.bf16.xpose.msra.mxu0 0
    %139 = vmatprep.subr.bf16.mxu0 0
    %140 = vmatpush1.bf16.xpose.msra.mxu0 0
    %141 = vmatprep.subr.bf16.mxu0 0
    %142 = vmatpush1.bf16.xpose.msra.mxu0 0
    %143 = vmatprep.subr.bf16.mxu0 0
    %144 = vmatpush1.bf16.xpose.msra.mxu0 0
    %145 = vmatprep.subr.bf16.mxu0 0
    %146 = vmatpush1.bf16.xpose.msra.mxu0 0
    %147 = vmatprep.subr.bf16.mxu0 0
    %148 = vmatpush1.bf16.xpose.msra.mxu0 0
    %149 = vmatprep.subr.bf16.mxu0 0
    %150 = vmatpush1.bf16.xpose.msra.mxu0 0
    %151 = vmatprep.subr.bf16.mxu0 0
    %152 = vmatpush1.bf16.xpose.msra.mxu0 0
    %153 = vmatprep.subr.bf16.mxu0 0
    %154 = vmatpush1.bf16.xpose.msra.mxu0 0
    %155 = vmatprep.subr.bf16.mxu0 0
    %156 = vmatpush1.bf16.xpose.msra.mxu0 0
    %157 = vmatprep.subr.bf16.mxu0 0
    %158 = vmatpush1.bf16.xpose.msra.mxu0 0
    %159 = vmatprep.subr.bf16.mxu0 0
    %160 = vmatpush1.bf16.xpose.msra.mxu0 0
    %161 = vmatprep.mubr.bf16.mxu0 0
    %162 = vmatmul.mubr.bf16.gmra.mrb[0].mxu0 %v124
    %v163 = vpop.f32.mrb[0].mxu0
    %v164 = vadd.f32 0.0, %v163
    %v165 = vpop.f32.mrb[0].mxu0
    %v166 = vpop.f32.mrb[0].mxu0
    %v167 = vpop.f32.mrb[0].mxu0
    %168 = vdwg.mxu0
    %vm169 = vcmask 64512
    %v170 = vsel %vm169, %v164, -inf
    %171 = vmax.xlane.f32.xlu0 %v170
    %v172 = vpop.xlane.xlu0 %171
    %v173 = vsub.f32 %v164, %v172
    %v174 = vmul.f32 %v173, 1.442695
    %v175 = vpow.pop %v174
    %v177 = vlaneseq
    %v178 = vshrl.u32 %v177, 7
    %v179 = vsub.s32 0, %v178
    %v180 = vrot.slane %v118, %v179
    %v182 = vmul.f32 %v175, %v180
    %v183 = vsel %vm169, %v182, 0.0
    %184 = vadd.xlane.f32.xlu0 %v183
    %v185 = vpop.xlane.xlu0 %184
    %v186 = vadd.f32 %v185, 1e-30
    %v187 = vrcp.pop %v186
    %v188 = vmul.f32 %v182, %v187
    %v189 = vpack.c.bf16 %v188, %v188
    %190 = vrot.lane.b32.xlu0 %v117, 64
    %v191 = vpop.permute.xlu0 %190
    %v193 = vsel %vm169, %v189, 0
    %vm195 = vcmask 1043456
    %v197 = vsel %vm195, %v191, 0
    %199 = vmatprep.subr.bf16.mxu0 0
    %200 = vmatpush1.bf16.msra.mxu0 %v197
    %201 = vmatprep.subr.bf16.mxu0 0
    %202 = vmatpush1.bf16.msra.mxu0 0
    %203 = vmatprep.subr.bf16.mxu0 0
    %204 = vmatpush1.bf16.msra.mxu0 0
    %205 = vmatprep.subr.bf16.mxu0 0
    %206 = vmatpush1.bf16.msra.mxu0 0
    %207 = vmatprep.subr.bf16.mxu0 0
    %208 = vmatpush1.bf16.msra.mxu0 0
    %209 = vmatprep.subr.bf16.mxu0 0
    %210 = vmatpush1.bf16.msra.mxu0 0
    %211 = vmatprep.subr.bf16.mxu0 0
    %212 = vmatpush1.bf16.msra.mxu0 0
    %213 = vmatprep.subr.bf16.mxu0 0
    %214 = vmatpush1.bf16.msra.mxu0 0
    %215 = vmatprep.subr.bf16.mxu0 0
    %216 = vmatpush1.bf16.msra.mxu0 0
    %217 = vmatprep.subr.bf16.mxu0 0
    %218 = vmatpush1.bf16.msra.mxu0 0
    %219 = vmatprep.subr.bf16.mxu0 0
    %220 = vmatpush1.bf16.msra.mxu0 0
    %221 = vmatprep.subr.bf16.mxu0 0
    %222 = vmatpush1.bf16.msra.mxu0 0
    %223 = vmatprep.subr.bf16.mxu0 0
    %224 = vmatpush1.bf16.msra.mxu0 0
    %225 = vmatprep.subr.bf16.mxu0 0
    %226 = vmatpush1.bf16.msra.mxu0 0
    %227 = vmatprep.subr.bf16.mxu0 0
    %228 = vmatpush1.bf16.msra.mxu0 0
    %229 = vmatprep.subr.bf16.mxu0 0
    %230 = vmatpush1.bf16.msra.mxu0 0
    %231 = vmatprep.mubr.bf16.mxu0 0
    %232 = vmatmul.mubr.bf16.gmra.mrb[0].mxu0 %v193
    %v233 = vpop.f32.mrb[0].mxu0
    %v234 = vadd.f32 0.0, %v233
    %v235 = vpop.f32.mrb[0].mxu0
    %v236 = vpop.f32.mrb[0].mxu0
    %v237 = vpop.f32.mrb[0].mxu0
    %238 = vdwg.mxu0
    %239 = vrot.lane.b32.xlu0 %v117, 112
    %v240 = vpop.permute.xlu0 %239
    %241 = vrot.lane.b32.xlu0 %v117, 80
    %v242 = vpop.permute.xlu0 %241
    %v244 = vsel %vm122, %v240, 0
    %v247 = vsel %vm122, %v242, 0
    %249 = vmatprep.subr.bf16.mxu0 0
    %250 = vmatpush1.bf16.xpose.msra.mxu0 %v247
    %251 = vmatprep.subr.bf16.mxu0 0
    %252 = vmatpush1.bf16.xpose.msra.mxu0 0
    %253 = vmatprep.subr.bf16.mxu0 0
    %254 = vmatpush1.bf16.xpose.msra.mxu0 0
    %255 = vmatprep.subr.bf16.mxu0 0
    %256 = vmatpush1.bf16.xpose.msra.mxu0 0
    %257 = vmatprep.subr.bf16.mxu0 0
    %258 = vmatpush1.bf16.xpose.msra.mxu0 0
    %259 = vmatprep.subr.bf16.mxu0 0
    %260 = vmatpush1.bf16.xpose.msra.mxu0 0
    %261 = vmatprep.subr.bf16.mxu0 0
    %262 = vmatpush1.bf16.xpose.msra.mxu0 0
    %263 = vmatprep.subr.bf16.mxu0 0
    %264 = vmatpush1.bf16.xpose.msra.mxu0 0
    %265 = vmatprep.subr.bf16.mxu0 0
    %266 = vmatpush1.bf16.xpose.msra.mxu0 0
    %267 = vmatprep.subr.bf16.mxu0 0
    %268 = vmatpush1.bf16.xpose.msra.mxu0 0
    %269 = vmatprep.subr.bf16.mxu0 0
    %270 = vmatpush1.bf16.xpose.msra.mxu0 0
    %271 = vmatprep.subr.bf16.mxu0 0
    %272 = vmatpush1.bf16.xpose.msra.mxu0 0
    %273 = vmatprep.subr.bf16.mxu0 0
    %274 = vmatpush1.bf16.xpose.msra.mxu0 0
    %275 = vmatprep.subr.bf16.mxu0 0
    %276 = vmatpush1.bf16.xpose.msra.mxu0 0
    %277 = vmatprep.subr.bf16.mxu0 0
    %278 = vmatpush1.bf16.xpose.msra.mxu0 0
    %279 = vmatprep.subr.bf16.mxu0 0
    %280 = vmatpush1.bf16.xpose.msra.mxu0 0
    %281 = vmatprep.mubr.bf16.mxu0 0
    %282 = vmatmul.mubr.bf16.gmra.mrb[0].mxu0 %v244
    %v283 = vpop.f32.mrb[0].mxu0
    %v284 = vadd.f32 0.0, %v283
    %v285 = vpop.f32.mrb[0].mxu0
    %v286 = vpop.f32.mrb[0].mxu0
    %v287 = vpop.f32.mrb[0].mxu0
    %288 = vdwg.mxu0
    %v289 = vsel %vm169, %v284, -inf
    %290 = vmax.xlane.f32.xlu0 %v289
    %v291 = vpop.xlane.xlu0 %290
    %v292 = vsub.f32 %v284, %v291
    %v293 = vmul.f32 %v292, 1.442695
    %v294 = vpow.pop %v293
    %v295 = vmul.f32 %v294, %v180
    %v296 = vsel %vm169, %v295, 0.0
    %297 = vadd.xlane.f32.xlu0 %v296
    %v298 = vpop.xlane.xlu0 %297
    %v299 = vadd.f32 %v298, 1e-30
    %v300 = vrcp.pop %v299
    %v301 = vmul.f32 %v295, %v300
    %v302 = vpack.c.bf16 %v301, %v301
    %303 = vrot.lane.b32.xlu0 %v117, 48
    %v304 = vpop.permute.xlu0 %303
    %v306 = vsel %vm169, %v302, 0
    %v309 = vsel %vm195, %v304, 0
    %311 = vmatprep.subr.bf16.mxu0 0
    %312 = vmatpush1.bf16.msra.mxu0 %v309
    %313 = vmatprep.subr.bf16.mxu0 0
    %314 = vmatpush1.bf16.msra.mxu0 0
    %315 = vmatprep.subr.bf16.mxu0 0
    %316 = vmatpush1.bf16.msra.mxu0 0
    %317 = vmatprep.subr.bf16.mxu0 0
    %318 = vmatpush1.bf16.msra.mxu0 0
    %319 = vmatprep.subr.bf16.mxu0 0
    %320 = vmatpush1.bf16.msra.mxu0 0
    %321 = vmatprep.subr.bf16.mxu0 0
    %322 = vmatpush1.bf16.msra.mxu0 0
    %323 = vmatprep.subr.bf16.mxu0 0
    %324 = vmatpush1.bf16.msra.mxu0 0
    %325 = vmatprep.subr.bf16.mxu0 0
    %326 = vmatpush1.bf16.msra.mxu0 0
    %327 = vmatprep.subr.bf16.mxu0 0
    %328 = vmatpush1.bf16.msra.mxu0 0
    %329 = vmatprep.subr.bf16.mxu0 0
    %330 = vmatpush1.bf16.msra.mxu0 0
    %331 = vmatprep.subr.bf16.mxu0 0
    %332 = vmatpush1.bf16.msra.mxu0 0
    %333 = vmatprep.subr.bf16.mxu0 0
    %334 = vmatpush1.bf16.msra.mxu0 0
    %335 = vmatprep.subr.bf16.mxu0 0
    %336 = vmatpush1.bf16.msra.mxu0 0
    %337 = vmatprep.subr.bf16.mxu0 0
    %338 = vmatpush1.bf16.msra.mxu0 0
    %339 = vmatprep.subr.bf16.mxu0 0
    %340 = vmatpush1.bf16.msra.mxu0 0
    %341 = vmatprep.subr.bf16.mxu0 0
    %342 = vmatpush1.bf16.msra.mxu0 0
    %343 = vmatprep.mubr.bf16.mxu0 0
    %344 = vmatmul.mubr.bf16.gmra.mrb[0].mxu0 %v306
    %v345 = vpop.f32.mrb[0].mxu0
    %v346 = vadd.f32 0.0, %v345
    %v347 = vpop.f32.mrb[0].mxu0
    %v348 = vpop.f32.mrb[0].mxu0
    %v349 = vpop.f32.mrb[0].mxu0
    %350 = vdwg.mxu0
    %352 = vrot.lane.b32.xlu0 %v346, 16
    %v353 = vpop.permute.xlu0 %352
    %v355 = vsel %vm122, %v234, %v353
    %s356 = scalar_lea.vmem %s1, 1
    %v357 = vld [vmem:[%s356] sm:$0x1]
    %v358 = vrot.slane %v117, 4
    %359 = vrot.lane.b32.xlu0 %v358, 96
    %v360 = vpop.permute.xlu0 %359
    %v362 = vsel %vm122, %v358, 0
    %v365 = vsel %vm122, %v360, 0
    %367 = vmatprep.subr.bf16.mxu0 0
    %368 = vmatpush1.bf16.xpose.msra.mxu0 %v365
    %369 = vmatprep.subr.bf16.mxu0 0
    %370 = vmatpush1.bf16.xpose.msra.mxu0 0
    %371 = vmatprep.subr.bf16.mxu0 0
    %372 = vmatpush1.bf16.xpose.msra.mxu0 0
    %373 = vmatprep.subr.bf16.mxu0 0
    %374 = vmatpush1.bf16.xpose.msra.mxu0 0
    %375 = vmatprep.subr.bf16.mxu0 0
    %376 = vmatpush1.bf16.xpose.msra.mxu0 0
    %377 = vmatprep.subr.bf16.mxu0 0
    %378 = vmatpush1.bf16.xpose.msra.mxu0 0
    %379 = vmatprep.subr.bf16.mxu0 0
    %380 = vmatpush1.bf16.xpose.msra.mxu0 0
    %381 = vmatprep.subr.bf16.mxu0 0
    %382 = vmatpush1.bf16.xpose.msra.mxu0 0
    %383 = vmatprep.subr.bf16.mxu0 0
    %384 = vmatpush1.bf16.xpose.msra.mxu0 0
    %385 = vmatprep.subr.bf16.mxu0 0
    %386 = vmatpush1.bf16.xpose.msra.mxu0 0
    %387 = vmatprep.subr.bf16.mxu0 0
    %388 = vmatpush1.bf16.xpose.msra.mxu0 0
    %389 = vmatprep.subr.bf16.mxu0 0
    %390 = vmatpush1.bf16.xpose.msra.mxu0 0
    %391 = vmatprep.subr.bf16.mxu0 0
    %392 = vmatpush1.bf16.xpose.msra.mxu0 0
    %393 = vmatprep.subr.bf16.mxu0 0
    %394 = vmatpush1.bf16.xpose.msra.mxu0 0
    %395 = vmatprep.subr.bf16.mxu0 0
    %396 = vmatpush1.bf16.xpose.msra.mxu0 0
    %397 = vmatprep.subr.bf16.mxu0 0
    %398 = vmatpush1.bf16.xpose.msra.mxu0 0
    %399 = vmatprep.mubr.bf16.mxu0 0
    %400 = vmatmul.mubr.bf16.gmra.mrb[0].mxu0 %v362
    %v401 = vpop.f32.mrb[0].mxu0
    %v402 = vadd.f32 0.0, %v401
    %v403 = vpop.f32.mrb[0].mxu0
    %v404 = vpop.f32.mrb[0].mxu0
    %v405 = vpop.f32.mrb[0].mxu0
    %406 = vdwg.mxu0
    %v407 = vsel %vm169, %v402, -inf
    %408 = vmax.xlane.f32.xlu0 %v407
    %v409 = vpop.xlane.xlu0 %408
    %v410 = vsub.f32 %v402, %v409
    %v411 = vmul.f32 %v410, 1.442695
    %v412 = vpow.pop %v411
    %v414 = vlaneseq
    %v415 = vshrl.u32 %v414, 7
    %v416 = vsub.s32 0, %v415
    %v417 = vrot.slane %v357, %v416
    %v419 = vmul.f32 %v412, %v417
    %v420 = vsel %vm169, %v419, 0.0
    %421 = vadd.xlane.f32.xlu0 %v420
    %v422 = vpop.xlane.xlu0 %421
    %v423 = vadd.f32 %v422, 1e-30
    %v424 = vrcp.pop %v423
    %v425 = vmul.f32 %v419, %v424
    %v426 = vpack.c.bf16 %v425, %v425
    %427 = vrot.lane.b32.xlu0 %v358, 64
    %v428 = vpop.permute.xlu0 %427
    %v430 = vsel %vm169, %v426, 0
    %v433 = vsel %vm195, %v428, 0
    %435 = vmatprep.subr.bf16.mxu0 0
    %436 = vmatpush1.bf16.msra.mxu0 %v433
    %437 = vmatprep.subr.bf16.mxu0 0
    %438 = vmatpush1.bf16.msra.mxu0 0
    %439 = vmatprep.subr.bf16.mxu0 0
    %440 = vmatpush1.bf16.msra.mxu0 0
    %441 = vmatprep.subr.bf16.mxu0 0
    %442 = vmatpush1.bf16.msra.mxu0 0
    %443 = vmatprep.subr.bf16.mxu0 0
    %444 = vmatpush1.bf16.msra.mxu0 0
    %445 = vmatprep.subr.bf16.mxu0 0
    %446 = vmatpush1.bf16.msra.mxu0 0
    %447 = vmatprep.subr.bf16.mxu0 0
    %448 = vmatpush1.bf16.msra.mxu0 0
    %449 = vmatprep.subr.bf16.mxu0 0
    %450 = vmatpush1.bf16.msra.mxu0 0
    %451 = vmatprep.subr.bf16.mxu0 0
    %452 = vmatpush1.bf16.msra.mxu0 0
    %453 = vmatprep.subr.bf16.mxu0 0
    %454 = vmatpush1.bf16.msra.mxu0 0
    %455 = vmatprep.subr.bf16.mxu0 0
    %456 = vmatpush1.bf16.msra.mxu0 0
    %457 = vmatprep.subr.bf16.mxu0 0
    %458 = vmatpush1.bf16.msra.mxu0 0
    %459 = vmatprep.subr.bf16.mxu0 0
    %460 = vmatpush1.bf16.msra.mxu0 0
    %461 = vmatprep.subr.bf16.mxu0 0
    %462 = vmatpush1.bf16.msra.mxu0 0
    %463 = vmatprep.subr.bf16.mxu0 0
    %464 = vmatpush1.bf16.msra.mxu0 0
    %465 = vmatprep.subr.bf16.mxu0 0
    %466 = vmatpush1.bf16.msra.mxu0 0
    %467 = vmatprep.mubr.bf16.mxu0 0
    %468 = vmatmul.mubr.bf16.gmra.mrb[0].mxu0 %v430
    %v469 = vpop.f32.mrb[0].mxu0
    %v470 = vadd.f32 0.0, %v469
    %v471 = vpop.f32.mrb[0].mxu0
    %v472 = vpop.f32.mrb[0].mxu0
    %v473 = vpop.f32.mrb[0].mxu0
    %474 = vdwg.mxu0
    %475 = vrot.lane.b32.xlu0 %v358, 112
    %v476 = vpop.permute.xlu0 %475
    %477 = vrot.lane.b32.xlu0 %v358, 80
    %v478 = vpop.permute.xlu0 %477
    %v480 = vsel %vm122, %v476, 0
    %v483 = vsel %vm122, %v478, 0
    %485 = vmatprep.subr.bf16.mxu0 0
    %486 = vmatpush1.bf16.xpose.msra.mxu0 %v483
    %487 = vmatprep.subr.bf16.mxu0 0
    %488 = vmatpush1.bf16.xpose.msra.mxu0 0
    %489 = vmatprep.subr.bf16.mxu0 0
    %490 = vmatpush1.bf16.xpose.msra.mxu0 0
    %491 = vmatprep.subr.bf16.mxu0 0
    %492 = vmatpush1.bf16.xpose.msra.mxu0 0
    %493 = vmatprep.subr.bf16.mxu0 0
    %494 = vmatpush1.bf16.xpose.msra.mxu0 0
    %495 = vmatprep.subr.bf16.mxu0 0
    %496 = vmatpush1.bf16.xpose.msra.mxu0 0
    %497 = vmatprep.subr.bf16.mxu0 0
    %498 = vmatpush1.bf16.xpose.msra.mxu0 0
    %499 = vmatprep.subr.bf16.mxu0 0
    %500 = vmatpush1.bf16.xpose.msra.mxu0 0
    %501 = vmatprep.subr.bf16.mxu0 0
    %502 = vmatpush1.bf16.xpose.msra.mxu0 0
    %503 = vmatprep.subr.bf16.mxu0 0
    %504 = vmatpush1.bf16.xpose.msra.mxu0 0
    %505 = vmatprep.subr.bf16.mxu0 0
    %506 = vmatpush1.bf16.xpose.msra.mxu0 0
    %507 = vmatprep.subr.bf16.mxu0 0
    %508 = vmatpush1.bf16.xpose.msra.mxu0 0
    %509 = vmatprep.subr.bf16.mxu0 0
    %510 = vmatpush1.bf16.xpose.msra.mxu0 0
    %511 = vmatprep.subr.bf16.mxu0 0
    %512 = vmatpush1.bf16.xpose.msra.mxu0 0
    %513 = vmatprep.subr.bf16.mxu0 0
    %514 = vmatpush1.bf16.xpose.msra.mxu0 0
    %515 = vmatprep.subr.bf16.mxu0 0
    %516 = vmatpush1.bf16.xpose.msra.mxu0 0
    %517 = vmatprep.mubr.bf16.mxu0 0
    %518 = vmatmul.mubr.bf16.gmra.mrb[0].mxu0 %v480
    %v519 = vpop.f32.mrb[0].mxu0
    %v520 = vadd.f32 0.0, %v519
    %v521 = vpop.f32.mrb[0].mxu0
    %v522 = vpop.f32.mrb[0].mxu0
    %v523 = vpop.f32.mrb[0].mxu0
    %524 = vdwg.mxu0
    %v525 = vsel %vm169, %v520, -inf
    %526 = vmax.xlane.f32.xlu0 %v525
    %v527 = vpop.xlane.xlu0 %526
    %v528 = vsub.f32 %v520, %v527
    %v529 = vmul.f32 %v528, 1.442695
    %v530 = vpow.pop %v529
    %v531 = vmul.f32 %v530, %v417
    %v532 = vsel %vm169, %v531, 0.0
    %533 = vadd.xlane.f32.xlu0 %v532
    %v534 = vpop.xlane.xlu0 %533
    %v535 = vadd.f32 %v534, 1e-30
    %v536 = vrcp.pop %v535
    %v537 = vmul.f32 %v531, %v536
    %v538 = vpack.c.bf16 %v537, %v537
    %539 = vrot.lane.b32.xlu0 %v358, 48
    %v540 = vpop.permute.xlu0 %539
    %v542 = vsel %vm169, %v538, 0
    %v545 = vsel %vm195, %v540, 0
    %547 = vmatprep.subr.bf16.mxu0 0
    %548 = vmatpush1.bf16.msra.mxu0 %v545
    %549 = vmatprep.subr.bf16.mxu0 0
    %550 = vmatpush1.bf16.msra.mxu0 0
    %551 = vmatprep.subr.bf16.mxu0 0
    %552 = vmatpush1.bf16.msra.mxu0 0
    %553 = vmatprep.subr.bf16.mxu0 0
    %554 = vmatpush1.bf16.msra.mxu0 0
    %555 = vmatprep.subr.bf16.mxu0 0
    %556 = vmatpush1.bf16.msra.mxu0 0
    %557 = vmatprep.subr.bf16.mxu0 0
    %558 = vmatpush1.bf16.msra.mxu0 0
    %559 = vmatprep.subr.bf16.mxu0 0
    %560 = vmatpush1.bf16.msra.mxu0 0
    %561 = vmatprep.subr.bf16.mxu0 0
    %562 = vmatpush1.bf16.msra.mxu0 0
    %563 = vmatprep.subr.bf16.mxu0 0
    %564 = vmatpush1.bf16.msra.mxu0 0
    %565 = vmatprep.subr.bf16.mxu0 0
    %566 = vmatpush1.bf16.msra.mxu0 0
    %567 = vmatprep.subr.bf16.mxu0 0
    %568 = vmatpush1.bf16.msra.mxu0 0
    %569 = vmatprep.subr.bf16.mxu0 0
    %570 = vmatpush1.bf16.msra.mxu0 0
    %571 = vmatprep.subr.bf16.mxu0 0
    %572 = vmatpush1.bf16.msra.mxu0 0
    %573 = vmatprep.subr.bf16.mxu0 0
    %574 = vmatpush1.bf16.msra.mxu0 0
    %575 = vmatprep.subr.bf16.mxu0 0
    %576 = vmatpush1.bf16.msra.mxu0 0
    %577 = vmatprep.subr.bf16.mxu0 0
    %578 = vmatpush1.bf16.msra.mxu0 0
    %579 = vmatprep.mubr.bf16.mxu0 0
    %580 = vmatmul.mubr.bf16.gmra.mrb[0].mxu0 %v542
    %v581 = vpop.f32.mrb[0].mxu0
    %v582 = vadd.f32 0.0, %v581
    %v583 = vpop.f32.mrb[0].mxu0
    %v584 = vpop.f32.mrb[0].mxu0
    %v585 = vpop.f32.mrb[0].mxu0
    %586 = vdwg.mxu0
    %588 = vrot.lane.b32.xlu0 %v582, 16
    %v589 = vpop.permute.xlu0 %588
    %v591 = vsel %vm122, %v470, %v589
    %v592 = vpack.c.bf16 %v591, %v355
    %v593 = vld [vmem:[%s5] sm:$0xf]
    %v594 = vld [vmem:[%s5 + $0x4] sm:$0xf]
    %v595 = vld [vmem:[%s5 + $0x8] sm:$0xf]
    %v596 = vld [vmem:[%s5 + $0xc] sm:$0xf]
    %v597 = vld [vmem:[%s6] sm:$0x1]
    %v599 = vlaneseq
    %v600 = vshrl.u32 %v599, 7
    %v601 = vsub.s32 0, %v600
    %v602 = vrot.slane %v597, %v601
    %v608 = vunpack.c.l.b16 %v593
    %v609 = vunpack.c.l.b16 %v594
    %v610 = vunpack.c.l.b16 %v595
    %v611 = vunpack.c.l.b16 %v596
    %v612 = vpack.c.b16 %v609, %v608
    %v613 = vpack.c.b16 %v611, %v610
    %v617 = vsel %vm72, %v592, 0
    %619 = vmatprep.subr.bf16.mxu0 0
    %620 = vmatpush1.bf16.msra.mxu0 %v612
    %621 = vmatprep.subr.bf16.mxu0 0
    %622 = vmatpush1.bf16.msra.mxu0 %v613
    %623 = vmatprep.subr.bf16.mxu0 0
    %624 = vmatpush1.bf16.msra.mxu0 0
    %625 = vmatprep.subr.bf16.mxu0 0
    %626 = vmatpush1.bf16.msra.mxu0 0
    %627 = vmatprep.subr.bf16.mxu0 0
    %628 = vmatpush1.bf16.msra.mxu0 0
    %629 = vmatprep.subr.bf16.mxu0 0
    %630 = vmatpush1.bf16.msra.mxu0 0
    %631 = vmatprep.subr.bf16.mxu0 0
    %632 = vmatpush1.bf16.msra.mxu0 0
    %633 = vmatprep.subr.bf16.mxu0 0
    %634 = vmatpush1.bf16.msra.mxu0 0
    %635 = vmatprep.subr.bf16.mxu0 0
    %636 = vmatpush1.bf16.msra.mxu0 0
    %637 = vmatprep.subr.bf16.mxu0 0
    %638 = vmatpush1.bf16.msra.mxu0 0
    %639 = vmatprep.subr.bf16.mxu0 0
    %640 = vmatpush1.bf16.msra.mxu0 0
    %641 = vmatprep.subr.bf16.mxu0 0
    %642 = vmatpush1.bf16.msra.mxu0 0
    %643 = vmatprep.subr.bf16.mxu0 0
    %644 = vmatpush1.bf16.msra.mxu0 0
    %645 = vmatprep.subr.bf16.mxu0 0
    %646 = vmatpush1.bf16.msra.mxu0 0
    %647 = vmatprep.subr.bf16.mxu0 0
    %648 = vmatpush1.bf16.msra.mxu0 0
    %649 = vmatprep.subr.bf16.mxu0 0
    %650 = vmatpush1.bf16.msra.mxu0 0
    %651 = vmatprep.mubr.bf16.mxu0 0
    %652 = vmatmul.mubr.bf16.gmra.mrb[0].mxu0 %v617
    %v653 = vpop.f32.mrb[0].mxu0
    %v654 = vadd.f32 %v602, %v653
    %v655 = vpop.f32.mrb[0].mxu0
    %v656 = vpop.f32.mrb[0].mxu0
    %v657 = vadd.f32 %v602, %v656
    %v658 = vpop.f32.mrb[0].mxu0
    %659 = vdwg.mxu0
    %v660 = vld [vmem:[%s2] sm:$0xff]
    %v661 = vld [vmem:[%s2 + $0x8] sm:$0xff]
    %663 = vset.pattern.permute.xlu0 0
    %664 = vperm.xlu0 %663, %v660
    %v665 = vpop.permute.xlu0 %664
    %668 = vset.pattern.permute.xlu0 0
    %669 = vperm.xlu0 %668, %v661
    %v670 = vpop.permute.xlu0 %669
    %v672 = vmul.f32 %v654, %v665
    %v673 = vmul.f32 %v657, %v670
    %v674 = vlaneseq
    %v675 = vshrl.u32 %v674, 7
    %v676 = vadd.s32 %v675, 8
    %vm677 = vcmp.lt.s32.totalorder %v675, 0
    %v678 = vsub.s32 0, %v675
    %v679 = vsel %vm677, %v678, %v675
    %v680 = vshrl.u32 %v679, 3
    %v681 = vand.u32 %v679, 7
    %v682 = vsub.s32 0, %v681
    %v683 = vsel %vm677, %v682, %v681
    %vm684 = vcmp.lt.s32.totalorder %v676, 0
    %v685 = vsub.s32 0, %v676
    %v686 = vsel %vm684, %v685, %v676
    %v687 = vshrl.u32 %v686, 3
    %v688 = vand.u32 %v686, 7
    %v689 = vsub.s32 0, %v688
    %v690 = vsel %vm684, %v689, %v688
    %vm691 = vcmp.ne.s32.totalorder %v683, 0
    %vm692 = vcmp.ne.s32.totalorder %v690, 0
    %vm693 = vcmp.lt.s32.totalorder %v683, 0
    %vm694 = vcmp.lt.s32.totalorder %v690, 0
    %vm695 = vmand %vm693, %vm691
    %vm696 = vmand %vm694, %vm692
    %v697 = vadd.s32 %v683, 8
    %v698 = vadd.s32 %v690, 8
    %v699 = vsel %vm695, %v697, %v683
    %v700 = vsel %vm696, %v698, %v690
    %v701 = vrot.slane %v672, 7
    %v702 = vrot.slane %v673, 7
    %vm703 = vcmp.lt.s32.totalorder %v675, 1
    %v704 = vsel %vm703, %v701, %v702
    %v705 = vsel %vm703, %v702, %v701
    %vm706 = vcmp.ge.s32.totalorder %v699, 1
    %vm707 = vcmp.ge.s32.totalorder %v700, 1
    %v708 = vsel %vm706, 1, 0
    %v709 = vsel %vm707, 1, 0
    %vm710 = vcmp.eq.s32.totalorder %v708, 1
    %vm711 = vcmp.eq.s32.totalorder %v709, 1
    %v712 = vsel %vm710, %v705, 0.0
    %v713 = vsel %vm711, %v704, 0.0
    %v714 = vrot.slane %v672, 1
    %v715 = vrot.slane %v673, 1
    %vm716 = vcmp.lt.s32.totalorder %v675, 7
    %v717 = vsel %vm716, %v714, %v715
    %v718 = vsel %vm716, %v715, %v714
    %vm719 = vcmp.lt.s32.totalorder %v699, 7
    %vm720 = vcmp.lt.s32.totalorder %v700, 7
    %v721 = vsel %vm719, 1, 0
    %v722 = vsel %vm720, 1, 0
    %vm723 = vcmp.eq.s32.totalorder %v721, 1
    %vm724 = vcmp.eq.s32.totalorder %v722, 1
    %v725 = vsel %vm723, %v717, 0.0
    %v726 = vsel %vm724, %v718, 0.0
    %729 = vrot.lane.b32.xlu0 %v672, 32
    %v730 = vpop.permute.xlu0 %729
    %731 = vrot.lane.b32.xlu0 %v673, 32
    %v732 = vpop.permute.xlu0 %731
    %737 = vrot.lane.b32.xlu0 %v725, 64
    %v738 = vpop.permute.xlu0 %737
    %739 = vrot.lane.b32.xlu0 %v726, 64
    %v740 = vpop.permute.xlu0 %739
    %v743 = vsel %vm72, %v712, %v730
    %v744 = vsel %vm72, %v713, %v732
    %vm745 = vcmask 523264
    %v746 = vsel %vm745, %v743, %v738
    %v747 = vsel %vm745, %v744, %v740
    %v748 = vpack.c.bf16 %v747, %v746
    %v749 = vld [vmem:[%s7] sm:$0xf]
    %v750 = vld [vmem:[%s7 + $0x4] sm:$0xf]
    %v751 = vld [vmem:[%s7 + $0x8] sm:$0xf]
    %v752 = vld [vmem:[%s7 + $0xc] sm:$0xf]
    %v753 = vld [vmem:[%s7 + $0x10] sm:$0xf]
    %v754 = vld [vmem:[%s7 + $0x14] sm:$0xf]
    %v755 = vld [vmem:[%s7 + $0x18] sm:$0xf]
    %v756 = vld [vmem:[%s7 + $0x1c] sm:$0xf]
    %v757 = vld [vmem:[%s7 + $0x20] sm:$0xf]
    %v758 = vld [vmem:[%s7 + $0x24] sm:$0xf]
    %v759 = vld [vmem:[%s7 + $0x28] sm:$0xf]
    %v760 = vld [vmem:[%s7 + $0x2c] sm:$0xf]
    %v761 = vld [vmem:[%s8] sm:$0x1]
    %v763 = vlaneseq
    %v764 = vshrl.u32 %v763, 7
    %v765 = vsub.s32 0, %v764
    %v766 = vrot.slane %v761, %v765
    %v780 = vunpack.c.l.b16 %v749
    %v781 = vunpack.c.l.b16 %v750
    %v782 = vunpack.c.l.b16 %v751
    %v783 = vunpack.c.l.b16 %v752
    %v784 = vunpack.c.l.b16 %v753
    %v785 = vunpack.c.l.b16 %v754
    %v786 = vunpack.c.l.b16 %v755
    %v787 = vunpack.c.l.b16 %v756
    %v788 = vunpack.c.l.b16 %v757
    %v789 = vunpack.c.l.b16 %v758
    %v790 = vunpack.c.l.b16 %v759
    %v791 = vunpack.c.l.b16 %v760
    %v792 = vpack.c.b16 %v781, %v780
    %v793 = vpack.c.b16 %v783, %v782
    %v794 = vpack.c.b16 %v785, %v784
    %v795 = vpack.c.b16 %v787, %v786
    %v796 = vpack.c.b16 %v789, %v788
    %v797 = vpack.c.b16 %v791, %v790
    %vm804 = vcmask 785408
    %v806 = vsel %vm804, %v748, 0
    %808 = vmatprep.subr.bf16.mxu0 0
    %809 = vmatpush1.bf16.msra.mxu0 %v792
    %810 = vmatprep.subr.bf16.mxu0 0
    %811 = vmatpush1.bf16.msra.mxu0 %v793
    %812 = vmatprep.subr.bf16.mxu0 0
    %813 = vmatpush1.bf16.msra.mxu0 %v794
    %814 = vmatprep.subr.bf16.mxu0 0
    %815 = vmatpush1.bf16.msra.mxu0 %v795
    %816 = vmatprep.subr.bf16.mxu0 0
    %817 = vmatpush1.bf16.msra.mxu0 %v796
    %818 = vmatprep.subr.bf16.mxu0 0
    %819 = vmatpush1.bf16.msra.mxu0 %v797
    %820 = vmatprep.subr.bf16.mxu0 0
    %821 = vmatpush1.bf16.msra.mxu0 0
    %822 = vmatprep.subr.bf16.mxu0 0
    %823 = vmatpush1.bf16.msra.mxu0 0
    %824 = vmatprep.subr.bf16.mxu0 0
    %825 = vmatpush1.bf16.msra.mxu0 0
    %826 = vmatprep.subr.bf16.mxu0 0
    %827 = vmatpush1.bf16.msra.mxu0 0
    %828 = vmatprep.subr.bf16.mxu0 0
    %829 = vmatpush1.bf16.msra.mxu0 0
    %830 = vmatprep.subr.bf16.mxu0 0
    %831 = vmatpush1.bf16.msra.mxu0 0
    %832 = vmatprep.subr.bf16.mxu0 0
    %833 = vmatpush1.bf16.msra.mxu0 0
    %834 = vmatprep.subr.bf16.mxu0 0
    %835 = vmatpush1.bf16.msra.mxu0 0
    %836 = vmatprep.subr.bf16.mxu0 0
    %837 = vmatpush1.bf16.msra.mxu0 0
    %838 = vmatprep.subr.bf16.mxu0 0
    %839 = vmatpush1.bf16.msra.mxu0 0
    %840 = vmatprep.mubr.bf16.mxu0 0
    %841 = vmatmul.mubr.bf16.gmra.mrb[0].mxu0 %v806
    %v842 = vpop.f32.mrb[0].mxu0
    %v843 = vadd.f32 %v766, %v842
    %v844 = vpop.f32.mrb[0].mxu0
    %v845 = vpop.f32.mrb[0].mxu0
    %v846 = vadd.f32 %v766, %v845
    %v847 = vpop.f32.mrb[0].mxu0
    %848 = vdwg.mxu0
    %v849 = vmax.f32 %v843, 0.0
    %v850 = vmax.f32 %v846, 0.0
    %v851 = vrot.slane %v849, 7
    %v852 = vrot.slane %v850, 7
    %v853 = vsel %vm703, %v851, %v852
    %v854 = vsel %vm703, %v852, %v851
    %v855 = vsel %vm710, %v854, 0.0
    %v856 = vsel %vm711, %v853, 0.0
    %v857 = vrot.slane %v849, 1
    %v858 = vrot.slane %v850, 1
    %v859 = vsel %vm716, %v857, %v858
    %v860 = vsel %vm716, %v858, %v857
    %v861 = vsel %vm723, %v859, 0.0
    %v862 = vsel %vm724, %v860, 0.0
    %865 = vrot.lane.b32.xlu0 %v849, 64
    %v866 = vpop.permute.xlu0 %865
    %867 = vrot.lane.b32.xlu0 %v850, 64
    %v868 = vpop.permute.xlu0 %867
    %v871 = vsel %vm745, %v855, %v866
    %v872 = vsel %vm745, %v856, %v868
    %v873 = vpack.c.bf16 %v872, %v871
    %v874 = vpack.c.bf16 %v862, %v861
    %v875 = vld [vmem:[%s9] sm:$0xf]
    %v876 = vld [vmem:[%s9 + $0x4] sm:$0xf]
    %v877 = vld [vmem:[%s9 + $0x8] sm:$0xf]
    %v878 = vld [vmem:[%s9 + $0xc] sm:$0xf]
    %v879 = vld [vmem:[%s9 + $0x10] sm:$0xf]
    %v880 = vld [vmem:[%s9 + $0x14] sm:$0xf]
    %v881 = vld [vmem:[%s9 + $0x18] sm:$0xf]
    %v882 = vld [vmem:[%s9 + $0x1c] sm:$0xf]
    %v883 = vld [vmem:[%s9 + $0x20] sm:$0xf]
    %v884 = vld [vmem:[%s9 + $0x24] sm:$0xf]
    %v885 = vld [vmem:[%s9 + $0x28] sm:$0xf]
    %v886 = vld [vmem:[%s9 + $0x2c] sm:$0xf]
    %v887 = vld [vmem:[%s9 + $0x30] sm:$0xf]
    %v888 = vld [vmem:[%s9 + $0x34] sm:$0xf]
    %v889 = vld [vmem:[%s9 + $0x38] sm:$0xf]
    %v890 = vld [vmem:[%s9 + $0x3c] sm:$0xf]
    %v891 = vld [vmem:[%s9 + $0x40] sm:$0xf]
    %v892 = vld [vmem:[%s9 + $0x44] sm:$0xf]
    %v893 = vld [vmem:[%s9 + $0x48] sm:$0xf]
    %v894 = vld [vmem:[%s9 + $0x4c] sm:$0xf]
    %v895 = vld [vmem:[%s9 + $0x50] sm:$0xf]
    %v896 = vld [vmem:[%s9 + $0x54] sm:$0xf]
    %v897 = vld [vmem:[%s9 + $0x58] sm:$0xf]
    %v898 = vld [vmem:[%s9 + $0x5c] sm:$0xf]
    %v899 = vld [vmem:[%s10] sm:$0x1]
    %v901 = vlaneseq
    %v902 = vshrl.u32 %v901, 7
    %v903 = vsub.s32 0, %v902
    %v904 = vrot.slane %v899, %v903
    %v930 = vunpack.c.l.b16 %v875
    %v931 = vunpack.c.l.b16 %v876
    %v932 = vunpack.c.l.b16 %v877
    %v933 = vunpack.c.l.b16 %v878
    %v934 = vunpack.c.l.b16 %v879
    %v935 = vunpack.c.l.b16 %v880
    %v936 = vunpack.c.l.b16 %v881
    %v937 = vunpack.c.l.b16 %v882
    %v938 = vunpack.c.l.b16 %v883
    %v939 = vunpack.c.l.b16 %v884
    %v940 = vunpack.c.l.b16 %v885
    %v941 = vunpack.c.l.b16 %v886
    %v942 = vunpack.c.l.b16 %v887
    %v943 = vunpack.c.l.b16 %v888
    %v944 = vunpack.c.l.b16 %v889
    %v945 = vunpack.c.l.b16 %v890
    %v946 = vunpack.c.l.b16 %v891
    %v947 = vunpack.c.l.b16 %v892
    %v948 = vunpack.c.l.b16 %v893
    %v949 = vunpack.c.l.b16 %v894
    %v950 = vunpack.c.l.b16 %v895
    %v951 = vunpack.c.l.b16 %v896
    %v952 = vunpack.c.l.b16 %v897
    %v953 = vunpack.c.l.b16 %v898
    %v954 = vpack.c.b16 %v931, %v930
    %v955 = vpack.c.b16 %v933, %v932
    %v956 = vpack.c.b16 %v935, %v934
    %v957 = vpack.c.b16 %v937, %v936
    %v958 = vpack.c.b16 %v939, %v938
    %v959 = vpack.c.b16 %v941, %v940
    %v960 = vpack.c.b16 %v943, %v942
    %v961 = vpack.c.b16 %v945, %v944
    %v962 = vpack.c.b16 %v947, %v946
    %v963 = vpack.c.b16 %v949, %v948
    %v964 = vpack.c.b16 %v951, %v950
    %v965 = vpack.c.b16 %v953, %v952
    %v979 = vsel %vm745, %v874, 0
    %981 = vmatprep.subr.bf16.mxu0 0
    %982 = vmatpush1.bf16.msra.mxu0 %v954
    %983 = vmatprep.subr.bf16.mxu0 0
    %984 = vmatpush1.bf16.msra.mxu0 %v955
    %985 = vmatprep.subr.bf16.mxu0 0
    %986 = vmatpush1.bf16.msra.mxu0 %v956
    %987 = vmatprep.subr.bf16.mxu0 0
    %988 = vmatpush1.bf16.msra.mxu0 %v957
    %989 = vmatprep.subr.bf16.mxu0 0
    %990 = vmatpush1.bf16.msra.mxu0 %v958
    %991 = vmatprep.subr.bf16.mxu0 0
    %992 = vmatpush1.bf16.msra.mxu0 %v959
    %993 = vmatprep.subr.bf16.mxu0 0
    %994 = vmatpush1.bf16.msra.mxu0 %v960
    %995 = vmatprep.subr.bf16.mxu0 0
    %996 = vmatpush1.bf16.msra.mxu0 %v961
    %997 = vmatprep.subr.bf16.mxu0 0
    %998 = vmatpush1.bf16.msra.mxu0 %v962
    %999 = vmatprep.subr.bf16.mxu0 0
    %1000 = vmatpush1.bf16.msra.mxu0 %v963
    %1001 = vmatprep.subr.bf16.mxu0 0
    %1002 = vmatpush1.bf16.msra.mxu0 %v964
    %1003 = vmatprep.subr.bf16.mxu0 0
    %1004 = vmatpush1.bf16.msra.mxu0 %v965
    %1005 = vmatprep.subr.bf16.mxu0 0
    %1006 = vmatpush1.bf16.msra.mxu0 0
    %1007 = vmatprep.subr.bf16.mxu0 0
    %1008 = vmatpush1.bf16.msra.mxu0 0
    %1009 = vmatprep.subr.bf16.mxu0 0
    %1010 = vmatpush1.bf16.msra.mxu0 0
    %1011 = vmatprep.subr.bf16.mxu0 0
    %1012 = vmatpush1.bf16.msra.mxu0 0
    %1013 = vmatprep.mubr.bf16.mxu0 %v979
    %1014 = vmatmul.mubr.bf16.gmra.mrb[0].mxu0 %v873
    %v1015 = vpop.f32.mrb[0].mxu0
    %v1016 = vadd.f32 %v904, %v1015
    %v1017 = vpop.f32.mrb[0].mxu0
    %v1018 = vpop.f32.mrb[0].mxu0
    %v1019 = vadd.f32 %v904, %v1018
    %v1020 = vpop.f32.mrb[0].mxu0
    %1021 = vdwg.mxu0
    %v1022 = vadd.f32 %v1016, %v672
    %v1023 = vadd.f32 %v1019, %v673
    %v1024 = vsel %vm72, %v1022, 0.0
    %1025 = vadd.xlane.f32.xlu0 %v1024
    %v1026 = vpop.xlane.xlu0 %1025
    %v1027 = vsel %vm72, %v1023, 0.0
    %1028 = vadd.xlane.f32.xlu0 %v1027
    %v1029 = vpop.xlane.xlu0 %1028
    %v1030 = vrcp.pop 32.0
    %v1031 = vmul.f32 %v1026, %v1030
    %v1032 = vmul.f32 %v1029, %v1030
    %v1033 = vsub.f32 %v1022, %v1031
    %v1034 = vsub.f32 %v1023, %v1032
    %v1035 = vmul.f32 %v1033, %v1033
    %v1036 = vmul.f32 %v1034, %v1034
    %v1037 = vsel %vm72, %v1035, 0.0
    %1038 = vadd.xlane.f32.xlu0 %v1037
    %v1039 = vpop.xlane.xlu0 %1038
    %v1040 = vsel %vm72, %v1036, 0.0
    %1041 = vadd.xlane.f32.xlu0 %v1040
    %v1042 = vpop.xlane.xlu0 %1041
    %v1043 = vmul.f32 %v1039, %v1030
    %v1044 = vmul.f32 %v1042, %v1030
    %v1045 = vadd.f32 %v1043, 1e-05
    %v1046 = vadd.f32 %v1044, 1e-05
    %v1047 = vrsqrt.pop %v1045
    %v1048 = vrsqrt.pop %v1046
    %v1049 = vmul.f32 %v1033, %v1047
    %v1050 = vmul.f32 %v1034, %v1048
    %v1051 = vld [vmem:[%s11] sm:$0x1]
    %v1053 = vlaneseq
    %v1054 = vshrl.u32 %v1053, 7
    %v1055 = vsub.s32 0, %v1054
    %v1056 = vrot.slane %v1051, %v1055
    %v1058 = vmul.f32 %v1049, %v1056
    %v1059 = vmul.f32 %v1050, %v1056
    %v1060 = vld [vmem:[%s12] sm:$0x1]
    %v1062 = vlaneseq
    %v1063 = vshrl.u32 %v1062, 7
    %v1064 = vsub.s32 0, %v1063
    %v1065 = vrot.slane %v1060, %v1064
    %v1067 = vadd.f32 %v1058, %v1065
    %v1068 = vadd.f32 %v1059, %v1065
    %v1069 = vmul.f32 %v1067, %v665
    %v1070 = vmul.f32 %v1068, %v670
    %1071 = vst.msk [vmem:[#allocation2] sm:$0xff] %vm72, %v1069
    %1072 = vst.msk [vmem:[#allocation2 + $0x8] sm:$0xff] %vm72, %v1070
    // Predicated region
    $region54: #{decoder_forward.3} parent=1 // pred_check
      _
    $region55: #{decoder_forward.3} parent=1 // pred_check_branch
      %1074 = sbr.rel (0) target = $region57
    $region56: #{decoder_forward.3} parent=1 // pred_region
      %s1076 = ssub.s32 256, 256
      %1077 = vsyncadd [#allocation3], %s1076
      %s1078 = sshll.u32 [#allocation2], 4
      %s1079 = int_to_ptr.vmem [resolvable:$true] %s1078
      %1084 = dma.vmem_to_hbm [thread:$0]  %s1079, 256, %s13, [#allocation3], 128, 128, 8
    $region57: #{decoder_forward.3} parent=1 // pred_fallthru
      _
    // Predicated region
    $region58: #{decoder_forward.3} parent=1 // pred_check
      _
    $region59: #{decoder_forward.3} parent=1 // pred_check_branch
      %1086 = sbr.rel (0) target = $region61
    $region60: #{decoder_forward.3} parent=1 // pred_region
      %1087 = dma.done [#allocation3], 256
    $region61: #{decoder_forward.3} parent=1 // pred_fallthru
      _
    %1088 = vsyncpa [#allocation3], 1

</llo_original>
